<compile_context>
chip_gen: v6e
topology: v6e:2x2x1
jax: 0.10.0
libtpu: 0.0.40
codegen_flags: <defaults>
</compile_context>

<pallas_src>
import functools

import jax
import jax.numpy as jnp
from jax import lax
from jax.experimental import pallas as pl
from jax.experimental.pallas import tpu as pltpu


BN_EPS = 1e-5


def _round_up(x, m):
    return ((x + m - 1) // m) * m


def _vmem_capacity_bytes():
    try:
        return int(pltpu.get_tpu_info().vmem_capacity_bytes)
    except Exception:
        return 64 * 1024 * 1024  # v7x-safe fallback


def _conv_stats_kernel(x_ref, w_ref, conv_ref, sum_ref, sq_ref, *,
                       KH, KW, OH, OW, stride, C, OC):
    """Pass 1 (one image per grid step): implicit-GEMM conv + per-image BN partial stats.

    x_ref:    [1, Hp, Wp, C]      bf16  (whole padded image, streams over the grid)
    w_ref:    [KH*KW, C, OC_pad]  bf16  (VMEM-resident: constant index_map)
    conv_ref: [1, OH*OW, OC]      bf16  (conv output for this image)
    sum_ref:  [1, 1, OC_pad]      f32   (per-image sum over rows)
    sq_ref:   [1, 1, OC_pad]      f32   (per-image sum of squares over rows)
    """
    img = x_ref[0]                                    # [Hp, Wp, C] bf16
    L = OH * OW
    oc_pad = w_ref.shape[-1]

    acc = jnp.zeros((L, oc_pad), jnp.float32)
    for ki in range(KH):
        for kj in range(KW):
            if stride == 1:
                patch = img[ki:ki + OH, kj:kj + OW, :]            # [OH, OW, C]
            else:
                patch = lax.slice(img, (ki, kj, 0),
                                  (ki + stride * (OH - 1) + 1,
                                   kj + stride * (OW - 1) + 1, C),
                                  (stride, stride, 1))
            lhs = patch.reshape(L, C)                              # bf16 [L, C]
            acc = acc + jnp.dot(lhs, w_ref[ki * KW + kj],
                                preferred_element_type=jnp.float32)

    # Conv output for this image, stored bf16 (halves the inter-pass HBM round trip).
    conv_ref[0] = acc[:, :OC].astype(conv_ref.dtype)

    # Per-image BN partial statistics from the f32 accumulator (no padded rows exist,
    # and padded OC columns are exactly zero because the weight columns are zero).
    sum_ref[0] = jnp.sum(acc, axis=0, keepdims=True)
    sq_ref[0] = jnp.sum(acc * acc, axis=0, keepdims=True)


def _bn_relu_kernel(conv_ref, scale_ref, shift_ref, out_ref):
    """Pass 2 (one image per grid step): normalize + affine + ReLU + NHWC->NCHW transpose.

    conv_ref:  [1, OH*OW, OC] bf16
    scale_ref: [1, OC]        f32
    shift_ref: [1, OC]        f32
    out_ref:   [1, OC, OH*OW] f32  (lane-dense along OH*OW; final reshape to NCHW is free)
    """
    y = conv_ref[0].astype(jnp.float32) * scale_ref[...] + shift_ref[...]
    y = jnp.maximum(y, 0.0)                           # [OH*OW, OC]
    out_ref[0] = y.T                                  # [OC, OH*OW]


def conv_block_forward(x, weight, bias, gamma, beta, *, stride):
    """x: [N, C, H, W] f32.  weight: [OC, C, KH, KW].  Returns [N, OC, OH, OW] f32."""
    del bias  # Conv bias cancels exactly under train-mode BatchNorm (mean subtraction).

    N, C, H, W = x.shape
    OC, _, KH, KW = weight.shape
    pad = KH // 2  # assumes square, odd kernel (matches PyTorch padding=kernel_size//2)
    OH = (H + 2 * pad - KH) // stride + 1
    OW = (W + 2 * pad - KW) // stride + 1
    Hp, Wp = H + 2 * pad, W + 2 * pad
    L = OH * OW
    M = N * L
    OC_pad = _round_up(OC, 128)

    # --- glue: padded NHWC activations in bf16 (1x activation traffic, no im2col) ---
    xp = jnp.pad(x.astype(jnp.bfloat16).transpose(0, 2, 3, 1),
                 ((0, 0), (pad, pad), (pad, pad), (0, 0)))          # [N, Hp, Wp, C]

    # Weights as [KH*KW, C, OC_pad] bf16 (K-order (ki, kj, c) matches the kernel loop).
    w3 = jnp.transpose(weight, (2, 3, 1, 0)).reshape(KH * KW, C, OC)
    w3 = jnp.pad(w3, ((0, 0), (0, 0), (0, OC_pad - OC))).astype(jnp.bfloat16)

    # --- generation-aware VMEM limit (64 MiB on v7x, 128 MiB on v5e/v6e) ---
    vmem_cap = _vmem_capacity_bytes()
    vmem_need = (2 * Hp * Wp * C * 2               # image block, double-buffered, bf16
                 + 2 * KH * KW * C * OC_pad * 2    # resident weights (2 bufs to be safe)
                 + 2 * L * OC * 2                  # bf16 conv block, double-buffered
                 + L * OC_pad * 4                  # f32 accumulator value
                 + 4 * L * C * 2                   # patch temporaries
                 + 16 * OC_pad * 4)
    vmem_limit = int(min(int(0.9 * vmem_cap),
                         max(2 * vmem_need, 32 * 1024 * 1024)))

    kernel1 = functools.partial(_conv_stats_kernel, KH=KH, KW=KW, OH=OH, OW=OW,
                                stride=stride, C=C, OC=OC)

    # ---- Pass 1: per-image implicit-GEMM conv (bf16 out) + per-image partial stats ----
    conv_bf16, psum, psq = pl.pallas_call(
        kernel1,
        out_shape=(
            jax.ShapeDtypeStruct((N, L, OC), jnp.bfloat16),
            jax.ShapeDtypeStruct((N, 1, OC_pad), jnp.float32),
            jax.ShapeDtypeStruct((N, 1, OC_pad), jnp.float32),
        ),
        grid=(N,),
        in_specs=[
            pl.BlockSpec((1, Hp, Wp, C), lambda i: (i, 0, 0, 0)),
            pl.BlockSpec((KH * KW, C, OC_pad), lambda i: (0, 0, 0)),   # resident weights
        ],
        out_specs=(
            pl.BlockSpec((1, L, OC), lambda i: (i, 0, 0)),
            pl.BlockSpec((1, 1, OC_pad), lambda i: (i, 0, 0)),
            pl.BlockSpec((1, 1, OC_pad), lambda i: (i, 0, 0)),
        ),
        compiler_params=pltpu.CompilerParams(
            dimension_semantics=("parallel",),      # fully independent grid steps
            vmem_limit_bytes=vmem_limit),
        cost_estimate=pl.CostEstimate(
            flops=2 * M * C * KH * KW * OC_pad,
            transcendentals=0,
            bytes_accessed=(xp.size * 2 + w3.size * 2 + M * OC * 2
                            + 2 * N * OC_pad * 4)),
    )(xp, w3)

    # ---- Tiny epilogue (plain JAX on [N, OC] partials): batch stats -> BN affine ----
    s = jnp.sum(psum[:, 0, :OC], axis=0)
    sq = jnp.sum(psq[:, 0, :OC], axis=0)
    mean = s / float(M)
    var = jnp.maximum(sq / float(M) - mean * mean, 0.0)   # biased, E[x^2] - mean^2
    inv_std = lax.rsqrt(var + BN_EPS)
    g32 = gamma.astype(jnp.float32)
    scale = (g32 * inv_std).reshape(1, OC)
    shift = (beta.astype(jnp.float32) - mean * g32 * inv_std).reshape(1, OC)

    # ---- Pass 2: normalize + ReLU + in-kernel transpose to NCHW layout ----
    out_ncl = pl.pallas_call(
        _bn_relu_kernel,
        out_shape=jax.ShapeDtypeStruct((N, OC, L), jnp.float32),
        grid=(N,),
        in_specs=[
            pl.BlockSpec((1, L, OC), lambda i: (i, 0, 0)),
            pl.BlockSpec((1, OC), lambda i: (0, 0)),
            pl.BlockSpec((1, OC), lambda i: (0, 0)),
        ],
        out_specs=pl.BlockSpec((1, OC, L), lambda i: (i, 0, 0)),
        compiler_params=pltpu.CompilerParams(
            dimension_semantics=("parallel",),
            vmem_limit_bytes=vmem_limit),
        cost_estimate=pl.CostEstimate(
            flops=3 * M * OC,
            transcendentals=0,
            bytes_accessed=M * OC * (2 + 4)),
    )(conv_bf16, scale, shift)

    return out_ncl.reshape(N, OC, OH, OW)   # contiguous reshape -> free


def _reference(x, weight, bias, gamma, beta, *, stride, conv_dtype=jnp.float32,
               use_bias=True, quantize_conv=False):
    """Pure-JAX reference mirroring the PyTorch forward (BN in training mode)."""
    pad = weight.shape[2] // 2
    y = lax.conv_general_dilated(
        x.astype(conv_dtype), weight.astype(conv_dtype),
        window_strides=(stride, stride),
        padding=[(pad, pad), (pad, pad)],
        dimension_numbers=("NCHW", "OIHW", "NCHW"),
        preferred_element_type=jnp.float32)
    if use_bias:
        y = y + bias[None, :, None, None]
    mean = jnp.mean(y, axis=(0, 2, 3), keepdims=True)
    var = jnp.mean((y - mean) ** 2, axis=(0, 2, 3), keepdims=True)  # biased var
    if quantize_conv:  # mirror the kernel's bf16-stored conv intermediate
        y = y.astype(jnp.bfloat16).astype(jnp.float32)
    y = (y - mean) * lax.rsqrt(var + BN_EPS)
    y = y * gamma[None, :, None, None] + beta[None, :, None, None]
    return jnp.maximum(y, 0.0)


if __name__ == "__main__":
    # Shapes consistent with ConvBlock(in_channels=4, out_channels=8,
    # kernel_size=3, stride=1) on an NCHW input of [2, 4, 16, 16].
    N, C, H, W = 2, 4, 16, 16
    OC, KH, KW = 8, 3, 3
    stride = 1

    key = jax.random.PRNGKey(0)
    kx, kw, kb = jax.random.split(key, 3)

    x = jax.random.normal(kx, (N, C, H, W), dtype=jnp.float32)

    fan_in = C * KH * KW
    bound = 1.0 / (fan_in ** 0.5)
    weight = jax.random.uniform(kw, (OC, C, KH, KW), jnp.float32, -bound, bound)
    bias = jax.random.uniform(kb, (OC,), jnp.float32, -bound, bound)
    gamma = jnp.ones((OC,), jnp.float32)   # BatchNorm2d weight init
    beta = jnp.zeros((OC,), jnp.float32)   # BatchNorm2d bias init

    fwd = jax.jit(functools.partial(conv_block_forward, stride=stride))
    out = jax.block_until_ready(fwd(x, weight, bias, gamma, beta))

    OH = (H + 2 * (KH // 2) - KH) // stride + 1
    OW = (W + 2 * (KW // 2) - KW) // stride + 1
    assert out.shape == (N, OC, OH, OW), out.shape

    # Tight check vs a reference mirroring the kernel numerics: bf16 MXU operands,
    # bf16-stored conv intermediate, bias dropped (it cancels under batch-mean subtraction).
    ref_mirror = _reference(x, weight, bias, gamma, beta, stride=stride,
                            conv_dtype=jnp.bfloat16, use_bias=False, quantize_conv=True)
    assert jnp.allclose(out, ref_mirror, atol=1e-2, rtol=1e-2), \
        "mismatch vs bf16-mirrored reference"

    # Loose check vs the full-f32 PyTorch-equivalent reference (bf16 rounding only).
    ref_f32 = _reference(x, weight, bias, gamma, beta, stride=stride,
                         conv_dtype=jnp.float32, use_bias=True, quantize_conv=False)
    assert jnp.allclose(out, ref_f32, atol=3e-2, rtol=3e-2), \
        "mismatch vs f32 reference"

    print("KERNEL_OK")
</pallas_src>

<mosaic_0001>
module attributes {stable_mosaic.version = 11 : i64} {
  func.func @_bn_relu_kernel(%arg0: i32, %arg1: memref<1x256x8xbf16, #tpu.memory_space<vmem>>, %arg2: memref<1x8xf32, #tpu.memory_space<vmem>>, %arg3: memref<1x8xf32, #tpu.memory_space<vmem>>, %arg4: memref<1x8x256xf32, #tpu.memory_space<vmem>>) attributes {dimension_semantics = [#tpu.dimension_semantics<parallel>], iteration_bounds = array<i64: 2>, scalar_prefetch = 0 : i64, scratch_operands = 0 : i64, tpu.core_type = #tpu.core_type<tc>, window_params = [{transform_indices = @transform_0, window_bounds = array<i64: 1, 256, 8>}, {pipeline_mode = #tpu.pipeline_mode<synchronous>, transform_indices = @transform_1, window_bounds = array<i64: 1, 8>}, {pipeline_mode = #tpu.pipeline_mode<synchronous>, transform_indices = @transform_2, window_bounds = array<i64: 1, 8>}, {transform_indices = @transform_3, window_bounds = array<i64: 1, 8, 256>}]} {
    %c0 = arith.constant 0 : index
    %c0_0 = arith.constant 0 : index
    %c0_1 = arith.constant 0 : index
    %0 = vector.load %arg1[%c0, %c0_0, %c0_1] : memref<1x256x8xbf16, #tpu.memory_space<vmem>>, vector<1x256x8xbf16>
    %1 = vector.shape_cast %0 : vector<1x256x8xbf16> to vector<256x8xbf16>
    %2 = arith.extf %1 : vector<256x8xbf16> to vector<256x8xf32>
    %c0_2 = arith.constant 0 : index
    %c0_3 = arith.constant 0 : index
    %3 = vector.load %arg2[%c0_2, %c0_3] : memref<1x8xf32, #tpu.memory_space<vmem>>, vector<1x8xf32>
    %4 = vector.broadcast %3 : vector<1x8xf32> to vector<256x8xf32>
    %5 = arith.mulf %2, %4 : vector<256x8xf32>
    %c0_4 = arith.constant 0 : index
    %c0_5 = arith.constant 0 : index
    %6 = vector.load %arg3[%c0_4, %c0_5] : memref<1x8xf32, #tpu.memory_space<vmem>>, vector<1x8xf32>
    %7 = vector.broadcast %6 : vector<1x8xf32> to vector<256x8xf32>
    %8 = arith.addf %5, %7 : vector<256x8xf32>
    %cst = arith.constant 0.000000e+00 : f32
    %9 = vector.broadcast %cst : f32 to vector<256x8xf32>
    %10 = arith.maximumf %8, %9 : vector<256x8xf32>
    %11 = tpu.transpose %10, [1, 0] : vector<256x8xf32> -> vector<8x256xf32>
    %c0_6 = arith.constant 0 : index
    %c0_7 = arith.constant 0 : index
    %c0_8 = arith.constant 0 : index
    %12 = vector.load %arg4[%c0_6, %c0_7, %c0_8] : memref<1x8x256xf32, #tpu.memory_space<vmem>>, vector<1x8x256xf32>
    %13 = vector.shape_cast %12 : vector<1x8x256xf32> to vector<8x256xf32>
    %14 = vector.shape_cast %11 : vector<8x256xf32> to vector<1x8x256xf32>
    tpu.vector_store %arg4[%c0_6, %c0_7, %c0_8], %14 {strides = array<i32>} : memref<1x8x256xf32, #tpu.memory_space<vmem>>, vector<1x8x256xf32>,
    return
  }
  func.func @transform_0(%arg0: i32) -> (i32, i32, i32) {
    %c0_i32 = arith.constant 0 : i32
    %c0_i32_0 = arith.constant 0 : i32
    %c0_i32_1 = arith.constant 0 : i32
    return %arg0, %c0_i32, %c0_i32_0 : i32, i32, i32
  }
  func.func @transform_1(%arg0: i32) -> (i32, i32) {
    %c0_i32 = arith.constant 0 : i32
    %c0_i32_0 = arith.constant 0 : i32
    %c0_i32_1 = arith.constant 0 : i32
    return %c0_i32, %c0_i32_0 : i32, i32
  }
  func.func @transform_2(%arg0: i32) -> (i32, i32) {
    %c0_i32 = arith.constant 0 : i32
    %c0_i32_0 = arith.constant 0 : i32
    %c0_i32_1 = arith.constant 0 : i32
    return %c0_i32, %c0_i32_0 : i32, i32
  }
  func.func @transform_3(%arg0: i32) -> (i32, i32, i32) {
    %c0_i32 = arith.constant 0 : i32
    %c0_i32_0 = arith.constant 0 : i32
    %c0_i32_1 = arith.constant 0 : i32
    return %arg0, %c0_i32, %c0_i32_0 : i32, i32, i32
  }
}

module attributes {stable_mosaic.version = 11 : i64} {
  func.func @_conv_stats_kernel(%arg0: i32, %arg1: memref<1x18x18x4xbf16, #tpu.memory_space<vmem>>, %arg2: memref<9x4x128xbf16, #tpu.memory_space<vmem>>, %arg3: memref<1x256x8xbf16, #tpu.memory_space<vmem>>, %arg4: memref<1x1x128xf32, #tpu.memory_space<vmem>>, %arg5: memref<1x1x128xf32, #tpu.memory_space<vmem>>) attributes {dimension_semantics = [#tpu.dimension_semantics<parallel>], iteration_bounds = array<i64: 2>, scalar_prefetch = 0 : i64, scratch_operands = 0 : i64, tpu.core_type = #tpu.core_type<tc>, window_params = [{transform_indices = @transform_0, window_bounds = array<i64: 1, 18, 18, 4>}, {pipeline_mode = #tpu.pipeline_mode<synchronous>, transform_indices = @transform_1, window_bounds = array<i64: 9, 4, 128>}, {transform_indices = @transform_2, window_bounds = array<i64: 1, 256, 8>}, {transform_indices = @transform_3, window_bounds = array<i64: 1, 1, 128>}, {transform_indices = @transform_4, window_bounds = array<i64: 1, 1, 128>}]} {
    %c0 = arith.constant 0 : index
    %c0_0 = arith.constant 0 : index
    %c0_1 = arith.constant 0 : index
    %c0_2 = arith.constant 0 : index
    %0 = vector.load %arg1[%c0, %c0_0, %c0_1, %c0_2] : memref<1x18x18x4xbf16, #tpu.memory_space<vmem>>, vector<1x18x18x4xbf16>
    %1 = vector.shape_cast %0 : vector<1x18x18x4xbf16> to vector<18x18x4xbf16>
    %cst = arith.constant 0.000000e+00 : f32
    %2 = vector.broadcast %cst : f32 to vector<256x128xf32>
    %3 = vector.extract_strided_slice %1 {offsets = [0, 0, 0], sizes = [16, 16, 4], strides = [1, 1, 1]} : vector<18x18x4xbf16> to vector<16x16x4xbf16>
    %4 = vector.shape_cast %3 : vector<16x16x4xbf16> to vector<256x4xbf16>
    %c0_3 = arith.constant 0 : index
    %c0_4 = arith.constant 0 : index
    %c0_5 = arith.constant 0 : index
    %5 = vector.load %arg2[%c0_3, %c0_4, %c0_5] : memref<9x4x128xbf16, #tpu.memory_space<vmem>>, vector<1x4x128xbf16>
    %6 = vector.shape_cast %5 : vector<1x4x128xbf16> to vector<4x128xbf16>
    %cst_6 = arith.constant dense<0.000000e+00> : vector<256x128xf32>
    %7 = tpu.matmul %4, %6, %cst_6 {dimension_numbers = #tpu.dot_dimension_numbers<[1], [0], [0], [1], [0, 0, 1, 1], [], []>} : vector<256x4xbf16>, vector<4x128xbf16>, vector<256x128xf32> -> vector<256x128xf32>
    %8 = arith.addf %2, %7 : vector<256x128xf32>
    %9 = vector.extract_strided_slice %1 {offsets = [0, 1, 0], sizes = [16, 16, 4], strides = [1, 1, 1]} : vector<18x18x4xbf16> to vector<16x16x4xbf16>
    %10 = vector.shape_cast %9 : vector<16x16x4xbf16> to vector<256x4xbf16>
    %c1 = arith.constant 1 : index
    %c0_7 = arith.constant 0 : index
    %c0_8 = arith.constant 0 : index
    %11 = vector.load %arg2[%c1, %c0_7, %c0_8] : memref<9x4x128xbf16, #tpu.memory_space<vmem>>, vector<1x4x128xbf16>
    %12 = vector.shape_cast %11 : vector<1x4x128xbf16> to vector<4x128xbf16>
    %cst_9 = arith.constant dense<0.000000e+00> : vector<256x128xf32>
    %13 = tpu.matmul %10, %12, %cst_9 {dimension_numbers = #tpu.dot_dimension_numbers<[1], [0], [0], [1], [0, 0, 1, 1], [], []>} : vector<256x4xbf16>, vector<4x128xbf16>, vector<256x128xf32> -> vector<256x128xf32>
    %14 = arith.addf %8, %13 : vector<256x128xf32>
    %15 = vector.extract_strided_slice %1 {offsets = [0, 2, 0], sizes = [16, 16, 4], strides = [1, 1, 1]} : vector<18x18x4xbf16> to vector<16x16x4xbf16>
    %16 = vector.shape_cast %15 : vector<16x16x4xbf16> to vector<256x4xbf16>
    %c2 = arith.constant 2 : index
    %c0_10 = arith.constant 0 : index
    %c0_11 = arith.constant 0 : index
    %17 = vector.load %arg2[%c2, %c0_10, %c0_11] : memref<9x4x128xbf16, #tpu.memory_space<vmem>>, vector<1x4x128xbf16>
    %18 = vector.shape_cast %17 : vector<1x4x128xbf16> to vector<4x128xbf16>
    %cst_12 = arith.constant dense<0.000000e+00> : vector<256x128xf32>
    %19 = tpu.matmul %16, %18, %cst_12 {dimension_numbers = #tpu.dot_dimension_numbers<[1], [0], [0], [1], [0, 0, 1, 1], [], []>} : vector<256x4xbf16>, vector<4x128xbf16>, vector<256x128xf32> -> vector<256x128xf32>
    %20 = arith.addf %14, %19 : vector<256x128xf32>
    %21 = vector.extract_strided_slice %1 {offsets = [1, 0, 0], sizes = [16, 16, 4], strides = [1, 1, 1]} : vector<18x18x4xbf16> to vector<16x16x4xbf16>
    %22 = vector.shape_cast %21 : vector<16x16x4xbf16> to vector<256x4xbf16>
    %c3 = arith.constant 3 : index
    %c0_13 = arith.constant 0 : index
    %c0_14 = arith.constant 0 : index
    %23 = vector.load %arg2[%c3, %c0_13, %c0_14] : memref<9x4x128xbf16, #tpu.memory_space<vmem>>, vector<1x4x128xbf16>
    %24 = vector.shape_cast %23 : vector<1x4x128xbf16> to vector<4x128xbf16>
    %cst_15 = arith.constant dense<0.000000e+00> : vector<256x128xf32>
    %25 = tpu.matmul %22, %24, %cst_15 {dimension_numbers = #tpu.dot_dimension_numbers<[1], [0], [0], [1], [0, 0, 1, 1], [], []>} : vector<256x4xbf16>, vector<4x128xbf16>, vector<256x128xf32> -> vector<256x128xf32>
    %26 = arith.addf %20, %25 : vector<256x128xf32>
    %27 = vector.extract_strided_slice %1 {offsets = [1, 1, 0], sizes = [16, 16, 4], strides = [1, 1, 1]} : vector<18x18x4xbf16> to vector<16x16x4xbf16>
    %28 = vector.shape_cast %27 : vector<16x16x4xbf16> to vector<256x4xbf16>
    %c4 = arith.constant 4 : index
    %c0_16 = arith.constant 0 : index
    %c0_17 = arith.constant 0 : index
    %29 = vector.load %arg2[%c4, %c0_16, %c0_17] : memref<9x4x128xbf16, #tpu.memory_space<vmem>>, vector<1x4x128xbf16>
    %30 = vector.shape_cast %29 : vector<1x4x128xbf16> to vector<4x128xbf16>
    %cst_18 = arith.constant dense<0.000000e+00> : vector<256x128xf32>
    %31 = tpu.matmul %28, %30, %cst_18 {dimension_numbers = #tpu.dot_dimension_numbers<[1], [0], [0], [1], [0, 0, 1, 1], [], []>} : vector<256x4xbf16>, vector<4x128xbf16>, vector<256x128xf32> -> vector<256x128xf32>
    %32 = arith.addf %26, %31 : vector<256x128xf32>
    %33 = vector.extract_strided_slice %1 {offsets = [1, 2, 0], sizes = [16, 16, 4], strides = [1, 1, 1]} : vector<18x18x4xbf16> to vector<16x16x4xbf16>
    %34 = vector.shape_cast %33 : vector<16x16x4xbf16> to vector<256x4xbf16>
    %c5 = arith.constant 5 : index
    %c0_19 = arith.constant 0 : index
    %c0_20 = arith.constant 0 : index
    %35 = vector.load %arg2[%c5, %c0_19, %c0_20] : memref<9x4x128xbf16, #tpu.memory_space<vmem>>, vector<1x4x128xbf16>
    %36 = vector.shape_cast %35 : vector<1x4x128xbf16> to vector<4x128xbf16>
    %cst_21 = arith.constant dense<0.000000e+00> : vector<256x128xf32>
    %37 = tpu.matmul %34, %36, %cst_21 {dimension_numbers = #tpu.dot_dimension_numbers<[1], [0], [0], [1], [0, 0, 1, 1], [], []>} : vector<256x4xbf16>, vector<4x128xbf16>, vector<256x128xf32> -> vector<256x128xf32>
    %38 = arith.addf %32, %37 : vector<256x128xf32>
    %39 = vector.extract_strided_slice %1 {offsets = [2, 0, 0], sizes = [16, 16, 4], strides = [1, 1, 1]} : vector<18x18x4xbf16> to vector<16x16x4xbf16>
    %40 = vector.shape_cast %39 : vector<16x16x4xbf16> to vector<256x4xbf16>
    %c6 = arith.constant 6 : index
    %c0_22 = arith.constant 0 : index
    %c0_23 = arith.constant 0 : index
    %41 = vector.load %arg2[%c6, %c0_22, %c0_23] : memref<9x4x128xbf16, #tpu.memory_space<vmem>>, vector<1x4x128xbf16>
    %42 = vector.shape_cast %41 : vector<1x4x128xbf16> to vector<4x128xbf16>
    %cst_24 = arith.constant dense<0.000000e+00> : vector<256x128xf32>
    %43 = tpu.matmul %40, %42, %cst_24 {dimension_numbers = #tpu.dot_dimension_numbers<[1], [0], [0], [1], [0, 0, 1, 1], [], []>} : vector<256x4xbf16>, vector<4x128xbf16>, vector<256x128xf32> -> vector<256x128xf32>
    %44 = arith.addf %38, %43 : vector<256x128xf32>
    %45 = vector.extract_strided_slice %1 {offsets = [2, 1, 0], sizes = [16, 16, 4], strides = [1, 1, 1]} : vector<18x18x4xbf16> to vector<16x16x4xbf16>
    %46 = vector.shape_cast %45 : vector<16x16x4xbf16> to vector<256x4xbf16>
    %c7 = arith.constant 7 : index
    %c0_25 = arith.constant 0 : index
    %c0_26 = arith.constant 0 : index
    %47 = vector.load %arg2[%c7, %c0_25, %c0_26] : memref<9x4x128xbf16, #tpu.memory_space<vmem>>, vector<1x4x128xbf16>
    %48 = vector.shape_cast %47 : vector<1x4x128xbf16> to vector<4x128xbf16>
    %cst_27 = arith.constant dense<0.000000e+00> : vector<256x128xf32>
    %49 = tpu.matmul %46, %48, %cst_27 {dimension_numbers = #tpu.dot_dimension_numbers<[1], [0], [0], [1], [0, 0, 1, 1], [], []>} : vector<256x4xbf16>, vector<4x128xbf16>, vector<256x128xf32> -> vector<256x128xf32>
    %50 = arith.addf %44, %49 : vector<256x128xf32>
    %51 = vector.extract_strided_slice %1 {offsets = [2, 2, 0], sizes = [16, 16, 4], strides = [1, 1, 1]} : vector<18x18x4xbf16> to vector<16x16x4xbf16>
    %52 = vector.shape_cast %51 : vector<16x16x4xbf16> to vector<256x4xbf16>
    %c8 = arith.constant 8 : index
    %c0_28 = arith.constant 0 : index
    %c0_29 = arith.constant 0 : index
    %53 = vector.load %arg2[%c8, %c0_28, %c0_29] : memref<9x4x128xbf16, #tpu.memory_space<vmem>>, vector<1x4x128xbf16>
    %54 = vector.shape_cast %53 : vector<1x4x128xbf16> to vector<4x128xbf16>
    %cst_30 = arith.constant dense<0.000000e+00> : vector<256x128xf32>
    %55 = tpu.matmul %52, %54, %cst_30 {dimension_numbers = #tpu.dot_dimension_numbers<[1], [0], [0], [1], [0, 0, 1, 1], [], []>} : vector<256x4xbf16>, vector<4x128xbf16>, vector<256x128xf32> -> vector<256x128xf32>
    %56 = arith.addf %50, %55 : vector<256x128xf32>
    %57 = vector.extract_strided_slice %56 {offsets = [0, 0], sizes = [256, 8], strides = [1, 1]} : vector<256x128xf32> to vector<256x8xf32>
    %58 = arith.truncf %57 : vector<256x8xf32> to vector<256x8xbf16>
    %c0_31 = arith.constant 0 : index
    %c0_32 = arith.constant 0 : index
    %c0_33 = arith.constant 0 : index
    %59 = vector.load %arg3[%c0_31, %c0_32, %c0_33] : memref<1x256x8xbf16, #tpu.memory_space<vmem>>, vector<1x256x8xbf16>
    %60 = vector.shape_cast %59 : vector<1x256x8xbf16> to vector<256x8xbf16>
    %61 = vector.shape_cast %58 : vector<256x8xbf16> to vector<1x256x8xbf16>
    tpu.vector_store %arg3[%c0_31, %c0_32, %c0_33], %61 {strides = array<i32>} : memref<1x256x8xbf16, #tpu.memory_space<vmem>>, vector<1x256x8xbf16>,
    %cst_34 = arith.constant dense<0.000000e+00> : vector<128xf32>
    %62 = vector.multi_reduction <add>, %56, %cst_34 [0] : vector<256x128xf32> to vector<128xf32>
    %63 = vector.shape_cast %62 : vector<128xf32> to vector<1x128xf32>
    %c0_35 = arith.constant 0 : index
    %c0_36 = arith.constant 0 : index
    %c0_37 = arith.constant 0 : index
    %64 = vector.load %arg4[%c0_35, %c0_36, %c0_37] : memref<1x1x128xf32, #tpu.memory_space<vmem>>, vector<1x1x128xf32>
    %65 = vector.shape_cast %64 : vector<1x1x128xf32> to vector<1x128xf32>
    %66 = vector.shape_cast %63 : vector<1x128xf32> to vector<1x1x128xf32>
    tpu.vector_store %arg4[%c0_35, %c0_36, %c0_37], %66 {strides = array<i32>} : memref<1x1x128xf32, #tpu.memory_space<vmem>>, vector<1x1x128xf32>,
    %67 = arith.mulf %56, %56 : vector<256x128xf32>
    %cst_38 = arith.constant dense<0.000000e+00> : vector<128xf32>
    %68 = vector.multi_reduction <add>, %67, %cst_38 [0] : vector<256x128xf32> to vector<128xf32>
    %69 = vector.shape_cast %68 : vector<128xf32> to vector<1x128xf32>
    %c0_39 = arith.constant 0 : index
    %c0_40 = arith.constant 0 : index
    %c0_41 = arith.constant 0 : index
    %70 = vector.load %arg5[%c0_39, %c0_40, %c0_41] : memref<1x1x128xf32, #tpu.memory_space<vmem>>, vector<1x1x128xf32>
    %71 = vector.shape_cast %70 : vector<1x1x128xf32> to vector<1x128xf32>
    %72 = vector.shape_cast %69 : vector<1x128xf32> to vector<1x1x128xf32>
    tpu.vector_store %arg5[%c0_39, %c0_40, %c0_41], %72 {strides = array<i32>} : memref<1x1x128xf32, #tpu.memory_space<vmem>>, vector<1x1x128xf32>,
    return
  }
  func.func @transform_0(%arg0: i32) -> (i32, i32, i32, i32) {
    %c0_i32 = arith.constant 0 : i32
    %c0_i32_0 = arith.constant 0 : i32
    %c0_i32_1 = arith.constant 0 : i32
    %c0_i32_2 = arith.constant 0 : i32
    return %arg0, %c0_i32, %c0_i32_0, %c0_i32_1 : i32, i32, i32, i32
  }
  func.func @transform_1(%arg0: i32) -> (i32, i32, i32) {
    %c0_i32 = arith.constant 0 : i32
    %c0_i32_0 = arith.constant 0 : i32
    %c0_i32_1 = arith.constant 0 : i32
    %c0_i32_2 = arith.constant 0 : i32
    return %c0_i32, %c0_i32_0, %c0_i32_1 : i32, i32, i32
  }
  func.func @transform_2(%arg0: i32) -> (i32, i32, i32) {
    %c0_i32 = arith.constant 0 : i32
    %c0_i32_0 = arith.constant 0 : i32
    %c0_i32_1 = arith.constant 0 : i32
    return %arg0, %c0_i32, %c0_i32_0 : i32, i32, i32
  }
  func.func @transform_3(%arg0: i32) -> (i32, i32, i32) {
    %c0_i32 = arith.constant 0 : i32
    %c0_i32_0 = arith.constant 0 : i32
    %c0_i32_1 = arith.constant 0 : i32
    return %arg0, %c0_i32, %c0_i32_0 : i32, i32, i32
  }
  func.func @transform_4(%arg0: i32) -> (i32, i32, i32) {
    %c0_i32 = arith.constant 0 : i32
    %c0_i32_0 = arith.constant 0 : i32
    %c0_i32_1 = arith.constant 0 : i32
    return %arg0, %c0_i32, %c0_i32_0 : i32, i32, i32
  }
}

</mosaic_0001>

<llo_original>
// kernel: conv_block_forward.3
$region0: #{conv_block_forward.3}
  #allocation0 [shape = 'u32[]', space=smem, size = 0x4, offset = 0x4, fixed_abs, tag = 'smem constant byte address 0x4 - core index']
  #allocation1 [shape = 'u32[144,128]{1,0:T(1,128)}', space=vmem, size = 0x12000, scoped, tag = 'internal scratch']
  %s0 = inlined_call_operand.vmem [shape: bf16[2,256,8], index: 0, kind: input, shape index: {}]
  %s1 = inlined_call_operand.vmem [shape: f32[1,8], index: 1, kind: input, shape index: {}]
  %s2 = inlined_call_operand.vmem [shape: f32[1,8], index: 2, kind: input, shape index: {}]
  %s3 = inlined_call_operand.vmem [shape: f32[2,8,256], index: 3, kind: output, shape index: {}]
  %s4 = sld [smem:[#allocation0]]
  $region45: #{conv_block_forward.3} parent=0
    _
  %s6 = ssub.s32 1, %s4
  %s7 = scalar_select 0, %s6, %s4
  loop: start=0, step=1, limit=4
  $region2: #{conv_block_forward.3} parent=0 // loop_pre_header
    _
  $region3: #{conv_block_forward.3} parent=0 // loop_header
    %s9 = sphi 0, %s13
    %p10 = scmp.ge.s32.totalorder %s9, 4
    %s19 = sphi 0, %s21
    %s22 = sphi 0, %s19
    %s23 = sphi 0, %s22
    %s39 = sphi 0, %s23
    %s43 = sphi 0, %s43
    %s45 = sphi 0, %s43
    %s46 = sphi 0, %s45
    %s60 = sphi 0, %s46
    %s64 = sphi 0, %s64
    %s66 = sphi 0, %s64
    %s67 = sphi 0, %s66
    %s81 = sphi 0, %s67
    %s87 = sphi 0, %s89
    %s90 = sphi 0, %s87
    %s91 = sphi 0, %s90
    %s107 = sphi 0, %s91
  $region4: #{conv_block_forward.3} parent=0 // loop_header_branch
    %12 = sbr.rel (%p10) target = $region8
  $region5: #{conv_block_forward.3} parent=0 // loop_body
    %s14 = ssub.s32 %s9, 1
    %s15 = ssub.s32 %s9, 2
    %s16 = sadd.s32 %s9, 1
    %s17 = ssub.s32 %s9, %s16
    %p18 = scmp.eq.s32.totalorder %s17, 0
    %s20 = sadd.s32 %s19, 1
    %s21 = scalar_select %p18, %s19, %s20
    %p24 = pneg %p18
    %p25 = scmp.eq.s32.totalorder %s9, 1
    %p26 = por %p24, %p25
    %p27 = scmp.ne.s32.totalorder %s19, %s22
    %p28 = scmp.eq.s32.totalorder %s9, 0
    %p29 = por %p27, %p28
    %p30 = scmp.ne.s32.totalorder %s19, %s22
    %p31 = scmp.eq.s32.totalorder %s14, 1
    %p32 = por %p30, %p31
    %p33 = scmp.ne.s32.totalorder %s22, %s23
    %p34 = scmp.eq.s32.totalorder %s14, 0
    %p35 = por %p33, %p34
    %p36 = scmp.ne.s32.totalorder %s22, %s23
    %p37 = scmp.eq.s32.totalorder %s15, 1
    %p38 = por %p36, %p37
    %p40 = scmp.ne.s32.totalorder %s23, %s39
    %p41 = scmp.eq.s32.totalorder %s15, 0
    %p42 = por %p40, %p41
    %s44 = sadd.s32 %s43, 1
    %p47 = scmp.eq.s32.totalorder %s9, 1
    %p48 = scmp.ne.s32.totalorder %s43, %s45
    %p49 = scmp.eq.s32.totalorder %s9, 0
    %p50 = por %p48, %p49
    %p51 = scmp.ne.s32.totalorder %s43, %s45
    %p52 = scmp.eq.s32.totalorder %s14, 1
    %p53 = por %p51, %p52
    %p54 = scmp.ne.s32.totalorder %s45, %s46
    %p55 = scmp.eq.s32.totalorder %s14, 0
    %p56 = por %p54, %p55
    %p57 = scmp.ne.s32.totalorder %s45, %s46
    %p58 = scmp.eq.s32.totalorder %s15, 1
    %p59 = por %p57, %p58
    %p61 = scmp.ne.s32.totalorder %s46, %s60
    %p62 = scmp.eq.s32.totalorder %s15, 0
    %p63 = por %p61, %p62
    %s65 = sadd.s32 %s64, 1
    %p68 = scmp.eq.s32.totalorder %s9, 1
    %p69 = scmp.ne.s32.totalorder %s64, %s66
    %p70 = scmp.eq.s32.totalorder %s9, 0
    %p71 = por %p69, %p70
    %p72 = scmp.ne.s32.totalorder %s64, %s66
    %p73 = scmp.eq.s32.totalorder %s14, 1
    %p74 = por %p72, %p73
    %p75 = scmp.ne.s32.totalorder %s66, %s67
    %p76 = scmp.eq.s32.totalorder %s14, 0
    %p77 = por %p75, %p76
    %p78 = scmp.ne.s32.totalorder %s66, %s67
    %p79 = scmp.eq.s32.totalorder %s15, 1
    %p80 = por %p78, %p79
    %p82 = scmp.ne.s32.totalorder %s67, %s81
    %p83 = scmp.eq.s32.totalorder %s15, 0
    %p84 = por %p82, %p83
    %s85 = ssub.s32 %s9, %s16
    %p86 = scmp.eq.s32.totalorder %s85, 0
    %s88 = sadd.s32 %s87, 1
    %s89 = scalar_select %p86, %s87, %s88
    %p92 = pneg %p86
    %p93 = scmp.eq.s32.totalorder %s9, 1
    %p94 = por %p92, %p93
    %p95 = scmp.ne.s32.totalorder %s87, %s90
    %p96 = scmp.eq.s32.totalorder %s9, 0
    %p97 = por %p95, %p96
    %p98 = scmp.ne.s32.totalorder %s87, %s90
    %p99 = scmp.eq.s32.totalorder %s14, 1
    %p100 = por %p98, %p99
    %p101 = scmp.ne.s32.totalorder %s90, %s91
    %p102 = scmp.eq.s32.totalorder %s14, 0
    %p103 = por %p101, %p102
    %p104 = scmp.ne.s32.totalorder %s90, %s91
    %p105 = scmp.eq.s32.totalorder %s15, 1
    %p106 = por %p104, %p105
    %p108 = scmp.ne.s32.totalorder %s91, %s107
    %p109 = scmp.eq.s32.totalorder %s15, 0
    %p110 = por %p108, %p109
    %p111 = scmp.le.s32.totalorder 1, %s9
    %p112 = scmp.lt.s32.totalorder %s9, 3
    %p113 = pnand %p111, %p112
    %p114 = pneg %p113
    // Predicated region
    $region9: #{conv_block_forward.3} parent=5 // pred_check
      _
    $region10: #{conv_block_forward.3} parent=5 // pred_check_branch
      %116 = sbr.rel (%p113) target = $region12
    $region11: #{conv_block_forward.3} parent=5 // pred_region
      %s117 = ssub.s32 %s9, 1
      // Predicated region
      $region13: #{conv_block_forward.3} parent=11 // pred_check
        %p118 = pneg %p56
      $region14: #{conv_block_forward.3} parent=11 // pred_check_branch
        %120 = sbr.rel (%p118) target = $region16
      $region15: #{conv_block_forward.3} parent=11 // pred_region
        _
      $region16: #{conv_block_forward.3} parent=11 // pred_fallthru
        _
      // Predicated region
      $region17: #{conv_block_forward.3} parent=11 // pred_check
        %p121 = pneg %p77
      $region18: #{conv_block_forward.3} parent=11 // pred_check_branch
        %123 = sbr.rel (%p121) target = $region20
      $region19: #{conv_block_forward.3} parent=11 // pred_region
        _
      $region20: #{conv_block_forward.3} parent=11 // pred_fallthru
        _
    $region12: #{conv_block_forward.3} parent=5 // pred_fallthru
      _
    %p124 = scmp.lt.s32.totalorder %s9, 2
    // Predicated region
    $region21: #{conv_block_forward.3} parent=5 // pred_check
      %p125 = pneg %p124
    $region22: #{conv_block_forward.3} parent=5 // pred_check_branch
      %127 = sbr.rel (%p125) target = $region24
    $region23: #{conv_block_forward.3} parent=5 // pred_region
      // Predicated region
      $region25: #{conv_block_forward.3} parent=23 // pred_check
        %p128 = pneg %p29
      $region26: #{conv_block_forward.3} parent=23 // pred_check_branch
        %130 = sbr.rel (%p128) target = $region28
      $region27: #{conv_block_forward.3} parent=23 // pred_region
        %p131 = scmp.lt.s32.totalorder %s9, 1
        %s132 = scalar_select %p131, %s9, 1
        %s133 = smul.addr %s132, 32
        %s134 = smul.addr %s133, 4
        %s135 = scalar_lea.vmem %s0, %s134
      $region28: #{conv_block_forward.3} parent=23 // pred_fallthru
        _
    $region24: #{conv_block_forward.3} parent=5 // pred_fallthru
      _
    %p136 = scmp.le.s32.totalorder 1, %s9
    %p137 = scmp.lt.s32.totalorder %s9, 3
    %p138 = pnand %p136, %p137
    %p139 = pneg %p138
    // Predicated region
    $region29: #{conv_block_forward.3} parent=5 // pred_check
      _
    $region30: #{conv_block_forward.3} parent=5 // pred_check_branch
      %141 = sbr.rel (%p138) target = $region32
    $region31: #{conv_block_forward.3} parent=5 // pred_region
      %s142 = ssub.s32 %s9, 1
      %p143 = scmp.lt.s32.totalorder %s14, 1
      %s144 = scalar_select %p143, %s14, 1
      %s145 = smul.addr %s144, 32
      %s146 = smul.addr %s145, 4
      %s147 = scalar_lea.vmem %s0, %s146
      %p148 = pneg %p35
      %p149 = pneg %p32
      %p150 = pneg %p56
      %p151 = pneg %p53
      %p152 = pneg %p77
      %p153 = pneg %p74
      %p154 = pneg %p103
      %p155 = pneg %p100
      %p156 = scmp.lt.s32.totalorder %s14, 1
      %s157 = scalar_select %p156, %s14, 1
      %s158 = smul.addr %s157, 2
      %s159 = smul.addr %s158, 8
      %s160 = scalar_lea.vmem %s3, %s159
      %p161 = scmp.lt.s32.totalorder %s14, 1
      %s162 = scalar_select %p161, %s14, 1
      %s163 = smul.addr %s162, 32
      %s164 = smul.addr %s163, 4
      %s165 = scalar_lea.vmem %s0, %s164
      %p166 = scmp.lt.s32.totalorder %s14, 1
      %s167 = scalar_select %p166, %s14, 1
      %s168 = smul.addr %s167, 2
      %s169 = smul.addr %s168, 8
      %s170 = scalar_lea.vmem %s3, %s169
      %v171 = vld [vmem:[%s165] sm:$0xf]
      %v172 = vld [vmem:[%s165 + $0x4] sm:$0xf]
      %v173 = vld [vmem:[%s165 + $0x8] sm:$0xf]
      %v174 = vld [vmem:[%s165 + $0xc] sm:$0xf]
      %v175 = vld [vmem:[%s165 + $0x10] sm:$0xf]
      %v176 = vld [vmem:[%s165 + $0x14] sm:$0xf]
      %v177 = vld [vmem:[%s165 + $0x18] sm:$0xf]
      %v178 = vld [vmem:[%s165 + $0x1c] sm:$0xf]
      %v179 = vld [vmem:[%s165 + $0x20] sm:$0xf]
      %v180 = vld [vmem:[%s165 + $0x24] sm:$0xf]
      %v181 = vld [vmem:[%s165 + $0x28] sm:$0xf]
      %v182 = vld [vmem:[%s165 + $0x2c] sm:$0xf]
      %v183 = vld [vmem:[%s165 + $0x30] sm:$0xf]
      %v184 = vld [vmem:[%s165 + $0x34] sm:$0xf]
      %v185 = vld [vmem:[%s165 + $0x38] sm:$0xf]
      %v186 = vld [vmem:[%s165 + $0x3c] sm:$0xf]
      %v187 = vld [vmem:[%s165 + $0x40] sm:$0xf]
      %v188 = vld [vmem:[%s165 + $0x44] sm:$0xf]
      %v189 = vld [vmem:[%s165 + $0x48] sm:$0xf]
      %v190 = vld [vmem:[%s165 + $0x4c] sm:$0xf]
      %v191 = vld [vmem:[%s165 + $0x50] sm:$0xf]
      %v192 = vld [vmem:[%s165 + $0x54] sm:$0xf]
      %v193 = vld [vmem:[%s165 + $0x58] sm:$0xf]
      %v194 = vld [vmem:[%s165 + $0x5c] sm:$0xf]
      %v195 = vld [vmem:[%s165 + $0x60] sm:$0xf]
      %v196 = vld [vmem:[%s165 + $0x64] sm:$0xf]
      %v197 = vld [vmem:[%s165 + $0x68] sm:$0xf]
      %v198 = vld [vmem:[%s165 + $0x6c] sm:$0xf]
      %v199 = vld [vmem:[%s165 + $0x70] sm:$0xf]
      %v200 = vld [vmem:[%s165 + $0x74] sm:$0xf]
      %v201 = vld [vmem:[%s165 + $0x78] sm:$0xf]
      %v202 = vld [vmem:[%s165 + $0x7c] sm:$0xf]
      %v203 = vunpack.c.l.bf16 %v171
      %v204 = vunpack.c.l.bf16 %v172
      %v205 = vunpack.c.l.bf16 %v173
      %v206 = vunpack.c.l.bf16 %v174
      %v207 = vunpack.c.l.bf16 %v175
      %v208 = vunpack.c.l.bf16 %v176
      %v209 = vunpack.c.l.bf16 %v177
      %v210 = vunpack.c.l.bf16 %v178
      %v211 = vunpack.c.l.bf16 %v179
      %v212 = vunpack.c.l.bf16 %v180
      %v213 = vunpack.c.l.bf16 %v181
      %v214 = vunpack.c.l.bf16 %v182
      %v215 = vunpack.c.l.bf16 %v183
      %v216 = vunpack.c.l.bf16 %v184
      %v217 = vunpack.c.l.bf16 %v185
      %v218 = vunpack.c.l.bf16 %v186
      %v219 = vunpack.c.l.bf16 %v187
      %v220 = vunpack.c.l.bf16 %v188
      %v221 = vunpack.c.l.bf16 %v189
      %v222 = vunpack.c.l.bf16 %v190
      %v223 = vunpack.c.l.bf16 %v191
      %v224 = vunpack.c.l.bf16 %v192
      %v225 = vunpack.c.l.bf16 %v193
      %v226 = vunpack.c.l.bf16 %v194
      %v227 = vunpack.c.l.bf16 %v195
      %v228 = vunpack.c.l.bf16 %v196
      %v229 = vunpack.c.l.bf16 %v197
      %v230 = vunpack.c.l.bf16 %v198
      %v231 = vunpack.c.l.bf16 %v199
      %v232 = vunpack.c.l.bf16 %v200
      %v233 = vunpack.c.l.bf16 %v201
      %v234 = vunpack.c.l.bf16 %v202
      %v235 = vld [vmem:[%s1] sm:$0x1]
      %v237 = vlaneseq
      %v238 = vshrl.u32 %v237, 7
      %v239 = vsub.s32 0, %v238
      %v240 = vrot.slane %v235, %v239
      %v242 = vmul.f32 %v203, %v240
      %v243 = vmul.f32 %v204, %v240
      %v244 = vmul.f32 %v205, %v240
      %v245 = vmul.f32 %v206, %v240
      %v246 = vmul.f32 %v207, %v240
      %v247 = vmul.f32 %v208, %v240
      %v248 = vmul.f32 %v209, %v240
      %v249 = vmul.f32 %v210, %v240
      %v250 = vmul.f32 %v211, %v240
      %v251 = vmul.f32 %v212, %v240
      %v252 = vmul.f32 %v213, %v240
      %v253 = vmul.f32 %v214, %v240
      %v254 = vmul.f32 %v215, %v240
      %v255 = vmul.f32 %v216, %v240
      %v256 = vmul.f32 %v217, %v240
      %v257 = vmul.f32 %v218, %v240
      %v258 = vmul.f32 %v219, %v240
      %v259 = vmul.f32 %v220, %v240
      %v260 = vmul.f32 %v221, %v240
      %v261 = vmul.f32 %v222, %v240
      %v262 = vmul.f32 %v223, %v240
      %v263 = vmul.f32 %v224, %v240
      %v264 = vmul.f32 %v225, %v240
      %v265 = vmul.f32 %v226, %v240
      %v266 = vmul.f32 %v227, %v240
      %v267 = vmul.f32 %v228, %v240
      %v268 = vmul.f32 %v229, %v240
      %v269 = vmul.f32 %v230, %v240
      %v270 = vmul.f32 %v231, %v240
      %v271 = vmul.f32 %v232, %v240
      %v272 = vmul.f32 %v233, %v240
      %v273 = vmul.f32 %v234, %v240
      %v274 = vld [vmem:[%s2] sm:$0x1]
      %v276 = vlaneseq
      %v277 = vshrl.u32 %v276, 7
      %v278 = vsub.s32 0, %v277
      %v279 = vrot.slane %v274, %v278
      %v281 = vadd.f32 %v242, %v279
      %v282 = vadd.f32 %v243, %v279
      %v283 = vadd.f32 %v244, %v279
      %v284 = vadd.f32 %v245, %v279
      %v285 = vadd.f32 %v246, %v279
      %v286 = vadd.f32 %v247, %v279
      %v287 = vadd.f32 %v248, %v279
      %v288 = vadd.f32 %v249, %v279
      %v289 = vadd.f32 %v250, %v279
      %v290 = vadd.f32 %v251, %v279
      %v291 = vadd.f32 %v252, %v279
      %v292 = vadd.f32 %v253, %v279
      %v293 = vadd.f32 %v254, %v279
      %v294 = vadd.f32 %v255, %v279
      %v295 = vadd.f32 %v256, %v279
      %v296 = vadd.f32 %v257, %v279
      %v297 = vadd.f32 %v258, %v279
      %v298 = vadd.f32 %v259, %v279
      %v299 = vadd.f32 %v260, %v279
      %v300 = vadd.f32 %v261, %v279
      %v301 = vadd.f32 %v262, %v279
      %v302 = vadd.f32 %v263, %v279
      %v303 = vadd.f32 %v264, %v279
      %v304 = vadd.f32 %v265, %v279
      %v305 = vadd.f32 %v266, %v279
      %v306 = vadd.f32 %v267, %v279
      %v307 = vadd.f32 %v268, %v279
      %v308 = vadd.f32 %v269, %v279
      %v309 = vadd.f32 %v270, %v279
      %v310 = vadd.f32 %v271, %v279
      %v311 = vadd.f32 %v272, %v279
      %v312 = vadd.f32 %v273, %v279
      %v313 = vmax.f32 %v281, 0.0
      %v314 = vmax.f32 %v282, 0.0
      %v315 = vmax.f32 %v283, 0.0
      %v316 = vmax.f32 %v284, 0.0
      %v317 = vmax.f32 %v285, 0.0
      %v318 = vmax.f32 %v286, 0.0
      %v319 = vmax.f32 %v287, 0.0
      %v320 = vmax.f32 %v288, 0.0
      %v321 = vmax.f32 %v289, 0.0
      %v322 = vmax.f32 %v290, 0.0
      %v323 = vmax.f32 %v291, 0.0
      %v324 = vmax.f32 %v292, 0.0
      %v325 = vmax.f32 %v293, 0.0
      %v326 = vmax.f32 %v294, 0.0
      %v327 = vmax.f32 %v295, 0.0
      %v328 = vmax.f32 %v296, 0.0
      %v329 = vmax.f32 %v297, 0.0
      %v330 = vmax.f32 %v298, 0.0
      %v331 = vmax.f32 %v299, 0.0
      %v332 = vmax.f32 %v300, 0.0
      %v333 = vmax.f32 %v301, 0.0
      %v334 = vmax.f32 %v302, 0.0
      %v335 = vmax.f32 %v303, 0.0
      %v336 = vmax.f32 %v304, 0.0
      %v337 = vmax.f32 %v305, 0.0
      %v338 = vmax.f32 %v306, 0.0
      %v339 = vmax.f32 %v307, 0.0
      %v340 = vmax.f32 %v308, 0.0
      %v341 = vmax.f32 %v309, 0.0
      %v342 = vmax.f32 %v310, 0.0
      %v343 = vmax.f32 %v311, 0.0
      %v344 = vmax.f32 %v312, 0.0
      %345 = vxpose.xlu0.b32.start [1/16] %v313, 128
      %346 = vxpose.xlu0.b32.cont [2/16] %v314, 128
      %347 = vxpose.xlu0.b32.cont [3/16] %v315, 128
      %348 = vxpose.xlu0.b32.cont [4/16] %v316, 128
      %349 = vxpose.xlu0.b32.cont [5/16] %v317, 128
      %350 = vxpose.xlu0.b32.cont [6/16] %v318, 128
      %351 = vxpose.xlu0.b32.cont [7/16] %v319, 128
      %352 = vxpose.xlu0.b32.cont [8/16] %v320, 128
      %353 = vxpose.xlu0.b32.cont [9/16] %v321, 128
      %354 = vxpose.xlu0.b32.cont [10/16] %v322, 128
      %355 = vxpose.xlu0.b32.cont [11/16] %v323, 128
      %356 = vxpose.xlu0.b32.cont [12/16] %v324, 128
      %357 = vxpose.xlu0.b32.cont [13/16] %v325, 128
      %358 = vxpose.xlu0.b32.cont [14/16] %v326, 128
      %359 = vxpose.xlu0.b32.cont [15/16] %v327, 128
      %360 = vxpose.xlu0.b32.end [16/16] %v328, 128
      %v361 = vpop.trf.xlu0
      %v362 = vpop.trf.xlu0
      %v363 = vpop.trf.xlu0
      %v364 = vpop.trf.xlu0
      %v365 = vpop.trf.xlu0
      %v366 = vpop.trf.xlu0
      %v367 = vpop.trf.xlu0
      %v368 = vpop.trf.xlu0
      %v369 = vpop.trf.xlu0
      %v370 = vpop.trf.xlu0
      %v371 = vpop.trf.xlu0
      %v372 = vpop.trf.xlu0
      %v373 = vpop.trf.xlu0
      %v374 = vpop.trf.xlu0
      %v375 = vpop.trf.xlu0
      %v376 = vpop.trf.xlu0
      %377 = vxpose.xlu0.b32.start [1/16] %v329, 128
      %378 = vxpose.xlu0.b32.cont [2/16] %v330, 128
      %379 = vxpose.xlu0.b32.cont [3/16] %v331, 128
      %380 = vxpose.xlu0.b32.cont [4/16] %v332, 128
      %381 = vxpose.xlu0.b32.cont [5/16] %v333, 128
      %382 = vxpose.xlu0.b32.cont [6/16] %v334, 128
      %383 = vxpose.xlu0.b32.cont [7/16] %v335, 128
      %384 = vxpose.xlu0.b32.cont [8/16] %v336, 128
      %385 = vxpose.xlu0.b32.cont [9/16] %v337, 128
      %386 = vxpose.xlu0.b32.cont [10/16] %v338, 128
      %387 = vxpose.xlu0.b32.cont [11/16] %v339, 128
      %388 = vxpose.xlu0.b32.cont [12/16] %v340, 128
      %389 = vxpose.xlu0.b32.cont [13/16] %v341, 128
      %390 = vxpose.xlu0.b32.cont [14/16] %v342, 128
      %391 = vxpose.xlu0.b32.cont [15/16] %v343, 128
      %392 = vxpose.xlu0.b32.end [16/16] %v344, 128
      %v393 = vpop.trf.xlu0
      %v394 = vpop.trf.xlu0
      %v395 = vpop.trf.xlu0
      %v396 = vpop.trf.xlu0
      %v397 = vpop.trf.xlu0
      %v398 = vpop.trf.xlu0
      %v399 = vpop.trf.xlu0
      %v400 = vpop.trf.xlu0
      %v401 = vpop.trf.xlu0
      %v402 = vpop.trf.xlu0
      %v403 = vpop.trf.xlu0
      %v404 = vpop.trf.xlu0
      %v405 = vpop.trf.xlu0
      %v406 = vpop.trf.xlu0
      %v407 = vpop.trf.xlu0
      %v408 = vpop.trf.xlu0
      %409 = vst [vmem:[%s170] sm:$0xff] %v361
      %410 = vst [vmem:[%s170 + $0x8] sm:$0xff] %v393
      %p411 = scmp.lt.s32.totalorder %s14, 1
      %s412 = scalar_select %p411, %s14, 1
      %s413 = smul.addr %s412, 2
      %s414 = smul.addr %s413, 8
      %s415 = scalar_lea.vmem %s3, %s414
      // Predicated region
      $region33: #{conv_block_forward.3} parent=31 // pred_check
        %p416 = pneg %p100
      $region34: #{conv_block_forward.3} parent=31 // pred_check_branch
        %418 = sbr.rel (%p416) target = $region36
      $region35: #{conv_block_forward.3} parent=31 // pred_region
        _
      $region36: #{conv_block_forward.3} parent=31 // pred_fallthru
        _
    $region32: #{conv_block_forward.3} parent=5 // pred_fallthru
      _
    %p419 = scmp.le.s32.totalorder 2, %s9
    // Predicated region
    $region37: #{conv_block_forward.3} parent=5 // pred_check
      %p420 = pneg %p419
    $region38: #{conv_block_forward.3} parent=5 // pred_check_branch
      %422 = sbr.rel (%p420) target = $region40
    $region39: #{conv_block_forward.3} parent=5 // pred_region
      %s423 = ssub.s32 %s9, 2
      // Predicated region
      $region41: #{conv_block_forward.3} parent=39 // pred_check
        %p424 = pneg %p106
      $region42: #{conv_block_forward.3} parent=39 // pred_check_branch
        %426 = sbr.rel (%p424) target = $region44
      $region43: #{conv_block_forward.3} parent=39 // pred_region
        %p427 = scmp.lt.s32.totalorder %s15, 1
        %s428 = scalar_select %p427, %s15, 1
        %s429 = smul.addr %s428, 2
        %s430 = smul.addr %s429, 8
        %s431 = scalar_lea.vmem %s3, %s430
      $region44: #{conv_block_forward.3} parent=39 // pred_fallthru
        _
    $region40: #{conv_block_forward.3} parent=5 // pred_fallthru
      _
  $region6: #{conv_block_forward.3} parent=0 // loop_footer
    %s13 = sadd.s32 1, %s9
  $region7: #{conv_block_forward.3} parent=0 // loop_footer_branch
    %8 = sbr.rel target = $region3
  $region8: #{conv_block_forward.3} parent=0 // loop_exit
    _

// kernel: conv_block_forward.2
$region0: #{conv_block_forward.2}
  #allocation0 [shape = 'u32[]', space=smem, size = 0x4, offset = 0x4, fixed_abs, tag = 'smem constant byte address 0x4 - core index']
  #allocation1 [shape = 'u32[144,128]{1,0:T(1,128)}', space=vmem, size = 0x12000, scoped, tag = 'internal scratch']
  %s0 = inlined_call_operand.vmem [shape: bf16[2,18,18,4], index: 0, kind: input, shape index: {}]
  %s1 = inlined_call_operand.vmem [shape: bf16[9,4,128], index: 1, kind: input, shape index: {}]
  %s2 = inlined_call_operand.vmem [shape: bf16[2,256,8], index: 2, kind: output, shape index: {0}]
  %s3 = inlined_call_operand.vmem [shape: f32[2,1,128], index: 3, kind: output, shape index: {1}]
  %s4 = inlined_call_operand.vmem [shape: f32[2,1,128], index: 4, kind: output, shape index: {2}]
  %5 = xla_tuple %s2, %s3, %s4
  %s6 = sld [smem:[#allocation0]]
  $region57: #{conv_block_forward.2} parent=0
    _
  %s8 = ssub.s32 1, %s6
  %s9 = scalar_select 0, %s8, %s6
  loop: start=0, step=1, limit=4
  $region2: #{conv_block_forward.2} parent=0 // loop_pre_header
    _
  $region3: #{conv_block_forward.2} parent=0 // loop_header
    %s11 = sphi 0, %s15
    %p12 = scmp.ge.s32.totalorder %s11, 4
    %s21 = sphi 0, %s23
    %s24 = sphi 0, %s21
    %s25 = sphi 0, %s24
    %s41 = sphi 0, %s25
    %s45 = sphi 0, %s45
    %s47 = sphi 0, %s45
    %s48 = sphi 0, %s47
    %s62 = sphi 0, %s48
    %s68 = sphi 0, %s70
    %s71 = sphi 0, %s68
    %s72 = sphi 0, %s71
    %s88 = sphi 0, %s72
    %s94 = sphi 0, %s96
    %s97 = sphi 0, %s94
    %s98 = sphi 0, %s97
    %s114 = sphi 0, %s98
    %s120 = sphi 0, %s122
    %s123 = sphi 0, %s120
    %s124 = sphi 0, %s123
    %s140 = sphi 0, %s124
  $region4: #{conv_block_forward.2} parent=0 // loop_header_branch
    %14 = sbr.rel (%p12) target = $region8
  $region5: #{conv_block_forward.2} parent=0 // loop_body
    %s16 = ssub.s32 %s11, 1
    %s17 = ssub.s32 %s11, 2
    %s18 = sadd.s32 %s11, 1
    %s19 = ssub.s32 %s11, %s18
    %p20 = scmp.eq.s32.totalorder %s19, 0
    %s22 = sadd.s32 %s21, 1
    %s23 = scalar_select %p20, %s21, %s22
    %p26 = pneg %p20
    %p27 = scmp.eq.s32.totalorder %s11, 1
    %p28 = por %p26, %p27
    %p29 = scmp.ne.s32.totalorder %s21, %s24
    %p30 = scmp.eq.s32.totalorder %s11, 0
    %p31 = por %p29, %p30
    %p32 = scmp.ne.s32.totalorder %s21, %s24
    %p33 = scmp.eq.s32.totalorder %s16, 1
    %p34 = por %p32, %p33
    %p35 = scmp.ne.s32.totalorder %s24, %s25
    %p36 = scmp.eq.s32.totalorder %s16, 0
    %p37 = por %p35, %p36
    %p38 = scmp.ne.s32.totalorder %s24, %s25
    %p39 = scmp.eq.s32.totalorder %s17, 1
    %p40 = por %p38, %p39
    %p42 = scmp.ne.s32.totalorder %s25, %s41
    %p43 = scmp.eq.s32.totalorder %s17, 0
    %p44 = por %p42, %p43
    %s46 = sadd.s32 %s45, 1
    %p49 = scmp.eq.s32.totalorder %s11, 1
    %p50 = scmp.ne.s32.totalorder %s45, %s47
    %p51 = scmp.eq.s32.totalorder %s11, 0
    %p52 = por %p50, %p51
    %p53 = scmp.ne.s32.totalorder %s45, %s47
    %p54 = scmp.eq.s32.totalorder %s16, 1
    %p55 = por %p53, %p54
    %p56 = scmp.ne.s32.totalorder %s47, %s48
    %p57 = scmp.eq.s32.totalorder %s16, 0
    %p58 = por %p56, %p57
    %p59 = scmp.ne.s32.totalorder %s47, %s48
    %p60 = scmp.eq.s32.totalorder %s17, 1
    %p61 = por %p59, %p60
    %p63 = scmp.ne.s32.totalorder %s48, %s62
    %p64 = scmp.eq.s32.totalorder %s17, 0
    %p65 = por %p63, %p64
    %s66 = ssub.s32 %s11, %s18
    %p67 = scmp.eq.s32.totalorder %s66, 0
    %s69 = sadd.s32 %s68, 1
    %s70 = scalar_select %p67, %s68, %s69
    %p73 = pneg %p67
    %p74 = scmp.eq.s32.totalorder %s11, 1
    %p75 = por %p73, %p74
    %p76 = scmp.ne.s32.totalorder %s68, %s71
    %p77 = scmp.eq.s32.totalorder %s11, 0
    %p78 = por %p76, %p77
    %p79 = scmp.ne.s32.totalorder %s68, %s71
    %p80 = scmp.eq.s32.totalorder %s16, 1
    %p81 = por %p79, %p80
    %p82 = scmp.ne.s32.totalorder %s71, %s72
    %p83 = scmp.eq.s32.totalorder %s16, 0
    %p84 = por %p82, %p83
    %p85 = scmp.ne.s32.totalorder %s71, %s72
    %p86 = scmp.eq.s32.totalorder %s17, 1
    %p87 = por %p85, %p86
    %p89 = scmp.ne.s32.totalorder %s72, %s88
    %p90 = scmp.eq.s32.totalorder %s17, 0
    %p91 = por %p89, %p90
    %s92 = ssub.s32 %s11, %s18
    %p93 = scmp.eq.s32.totalorder %s92, 0
    %s95 = sadd.s32 %s94, 1
    %s96 = scalar_select %p93, %s94, %s95
    %p99 = pneg %p93
    %p100 = scmp.eq.s32.totalorder %s11, 1
    %p101 = por %p99, %p100
    %p102 = scmp.ne.s32.totalorder %s94, %s97
    %p103 = scmp.eq.s32.totalorder %s11, 0
    %p104 = por %p102, %p103
    %p105 = scmp.ne.s32.totalorder %s94, %s97
    %p106 = scmp.eq.s32.totalorder %s16, 1
    %p107 = por %p105, %p106
    %p108 = scmp.ne.s32.totalorder %s97, %s98
    %p109 = scmp.eq.s32.totalorder %s16, 0
    %p110 = por %p108, %p109
    %p111 = scmp.ne.s32.totalorder %s97, %s98
    %p112 = scmp.eq.s32.totalorder %s17, 1
    %p113 = por %p111, %p112
    %p115 = scmp.ne.s32.totalorder %s98, %s114
    %p116 = scmp.eq.s32.totalorder %s17, 0
    %p117 = por %p115, %p116
    %s118 = ssub.s32 %s11, %s18
    %p119 = scmp.eq.s32.totalorder %s118, 0
    %s121 = sadd.s32 %s120, 1
    %s122 = scalar_select %p119, %s120, %s121
    %p125 = pneg %p119
    %p126 = scmp.eq.s32.totalorder %s11, 1
    %p127 = por %p125, %p126
    %p128 = scmp.ne.s32.totalorder %s120, %s123
    %p129 = scmp.eq.s32.totalorder %s11, 0
    %p130 = por %p128, %p129
    %p131 = scmp.ne.s32.totalorder %s120, %s123
    %p132 = scmp.eq.s32.totalorder %s16, 1
    %p133 = por %p131, %p132
    %p134 = scmp.ne.s32.totalorder %s123, %s124
    %p135 = scmp.eq.s32.totalorder %s16, 0
    %p136 = por %p134, %p135
    %p137 = scmp.ne.s32.totalorder %s123, %s124
    %p138 = scmp.eq.s32.totalorder %s17, 1
    %p139 = por %p137, %p138
    %p141 = scmp.ne.s32.totalorder %s124, %s140
    %p142 = scmp.eq.s32.totalorder %s17, 0
    %p143 = por %p141, %p142
    %p144 = scmp.le.s32.totalorder 1, %s11
    %p145 = scmp.lt.s32.totalorder %s11, 3
    %p146 = pnand %p144, %p145
    %p147 = pneg %p146
    // Predicated region
    $region9: #{conv_block_forward.2} parent=5 // pred_check
      _
    $region10: #{conv_block_forward.2} parent=5 // pred_check_branch
      %149 = sbr.rel (%p146) target = $region12
    $region11: #{conv_block_forward.2} parent=5 // pred_region
      %s150 = ssub.s32 %s11, 1
      // Predicated region
      $region13: #{conv_block_forward.2} parent=11 // pred_check
        %p151 = pneg %p58
      $region14: #{conv_block_forward.2} parent=11 // pred_check_branch
        %153 = sbr.rel (%p151) target = $region16
      $region15: #{conv_block_forward.2} parent=11 // pred_region
        _
      $region16: #{conv_block_forward.2} parent=11 // pred_fallthru
        _
    $region12: #{conv_block_forward.2} parent=5 // pred_fallthru
      _
    %p154 = scmp.lt.s32.totalorder %s11, 2
    // Predicated region
    $region17: #{conv_block_forward.2} parent=5 // pred_check
      %p155 = pneg %p154
    $region18: #{conv_block_forward.2} parent=5 // pred_check_branch
      %157 = sbr.rel (%p155) target = $region20
    $region19: #{conv_block_forward.2} parent=5 // pred_region
      // Predicated region
      $region21: #{conv_block_forward.2} parent=19 // pred_check
        %p158 = pneg %p31
      $region22: #{conv_block_forward.2} parent=19 // pred_check_branch
        %160 = sbr.rel (%p158) target = $region24
      $region23: #{conv_block_forward.2} parent=19 // pred_region
        %p161 = scmp.lt.s32.totalorder %s11, 1
        %s162 = scalar_select %p161, %s11, 1
        %s163 = smul.addr %s162, 54
        %s164 = smul.addr %s163, 4
        %s165 = scalar_lea.vmem %s0, %s164
      $region24: #{conv_block_forward.2} parent=19 // pred_fallthru
        _
    $region20: #{conv_block_forward.2} parent=5 // pred_fallthru
      _
    %p166 = scmp.le.s32.totalorder 1, %s11
    %p167 = scmp.lt.s32.totalorder %s11, 3
    %p168 = pnand %p166, %p167
    %p169 = pneg %p168
    // Predicated region
    $region25: #{conv_block_forward.2} parent=5 // pred_check
      _
    $region26: #{conv_block_forward.2} parent=5 // pred_check_branch
      %171 = sbr.rel (%p168) target = $region28
    $region27: #{conv_block_forward.2} parent=5 // pred_region
      %s172 = ssub.s32 %s11, 1
      %p173 = scmp.lt.s32.totalorder %s16, 1
      %s174 = scalar_select %p173, %s16, 1
      %s175 = smul.addr %s174, 54
      %s176 = smul.addr %s175, 4
      %s177 = scalar_lea.vmem %s0, %s176
      %p178 = pneg %p37
      %p179 = pneg %p34
      %p180 = pneg %p58
      %p181 = pneg %p55
      %p182 = pneg %p84
      %p183 = pneg %p81
      %p184 = scmp.lt.s32.totalorder %s16, 1
      %s185 = scalar_select %p184, %s16, 1
      %s186 = smul.addr %s185, 32
      %s187 = smul.addr %s186, 4
      %s188 = scalar_lea.vmem %s2, %s187
      %p189 = pneg %p110
      %p190 = pneg %p107
      %p191 = scmp.lt.s32.totalorder %s16, 1
      %s192 = scalar_select %p191, %s16, 1
      %s193 = scalar_lea.vmem %s3, %s192
      %p194 = pneg %p136
      %p195 = pneg %p133
      %p196 = scmp.lt.s32.totalorder %s16, 1
      %s197 = scalar_select %p196, %s16, 1
      %s198 = scalar_lea.vmem %s4, %s197
      %p199 = scmp.lt.s32.totalorder %s16, 1
      %s200 = scalar_select %p199, %s16, 1
      %s201 = smul.addr %s200, 54
      %s202 = smul.addr %s201, 4
      %s203 = scalar_lea.vmem %s0, %s202
      %p204 = scmp.lt.s32.totalorder %s16, 1
      %s205 = scalar_select %p204, %s16, 1
      %s206 = smul.addr %s205, 32
      %s207 = smul.addr %s206, 4
      %s208 = scalar_lea.vmem %s2, %s207
      %p209 = scmp.lt.s32.totalorder %s16, 1
      %s210 = scalar_select %p209, %s16, 1
      %s211 = scalar_lea.vmem %s3, %s210
      %p212 = scmp.lt.s32.totalorder %s16, 1
      %s213 = scalar_select %p212, %s16, 1
      %s214 = scalar_lea.vmem %s4, %s213
      %v216 = vld [vmem:[%s203] sm:$0xf]
      %v217 = vld [vmem:[%s203 + $0x4] sm:$0xf]
      %v218 = vld [vmem:[%s203 + $0x8] sm:$0x1]
      %v219 = vld [vmem:[%s203 + $0xc] sm:$0xf]
      %v220 = vld [vmem:[%s203 + $0x10] sm:$0xf]
      %v221 = vld [vmem:[%s203 + $0x14] sm:$0x1]
      %v222 = vld [vmem:[%s203 + $0x18] sm:$0xf]
      %v223 = vld [vmem:[%s203 + $0x1c] sm:$0xf]
      %v224 = vld [vmem:[%s203 + $0x20] sm:$0x1]
      %v225 = vld [vmem:[%s203 + $0x24] sm:$0xf]
      %v226 = vld [vmem:[%s203 + $0x28] sm:$0xf]
      %v227 = vld [vmem:[%s203 + $0x2c] sm:$0x1]
      %v228 = vld [vmem:[%s203 + $0x30] sm:$0xf]
      %v229 = vld [vmem:[%s203 + $0x34] sm:$0xf]
      %v230 = vld [vmem:[%s203 + $0x38] sm:$0x1]
      %v231 = vld [vmem:[%s203 + $0x3c] sm:$0xf]
      %v232 = vld [vmem:[%s203 + $0x40] sm:$0xf]
      %v233 = vld [vmem:[%s203 + $0x44] sm:$0x1]
      %v234 = vld [vmem:[%s203 + $0x48] sm:$0xf]
      %v235 = vld [vmem:[%s203 + $0x4c] sm:$0xf]
      %v236 = vld [vmem:[%s203 + $0x50] sm:$0x1]
      %v237 = vld [vmem:[%s203 + $0x54] sm:$0xf]
      %v238 = vld [vmem:[%s203 + $0x58] sm:$0xf]
      %v239 = vld [vmem:[%s203 + $0x5c] sm:$0x1]
      %v240 = vld [vmem:[%s203 + $0x60] sm:$0xf]
      %v241 = vld [vmem:[%s203 + $0x64] sm:$0xf]
      %v242 = vld [vmem:[%s203 + $0x68] sm:$0x1]
      %v243 = vld [vmem:[%s203 + $0x6c] sm:$0xf]
      %v244 = vld [vmem:[%s203 + $0x70] sm:$0xf]
      %v245 = vld [vmem:[%s203 + $0x74] sm:$0x1]
      %v246 = vld [vmem:[%s203 + $0x78] sm:$0xf]
      %v247 = vld [vmem:[%s203 + $0x7c] sm:$0xf]
      %v248 = vld [vmem:[%s203 + $0x80] sm:$0x1]
      %v249 = vld [vmem:[%s203 + $0x84] sm:$0xf]
      %v250 = vld [vmem:[%s203 + $0x88] sm:$0xf]
      %v251 = vld [vmem:[%s203 + $0x8c] sm:$0x1]
      %v252 = vld [vmem:[%s203 + $0x90] sm:$0xf]
      %v253 = vld [vmem:[%s203 + $0x94] sm:$0xf]
      %v254 = vld [vmem:[%s203 + $0x98] sm:$0x1]
      %v255 = vld [vmem:[%s203 + $0x9c] sm:$0xf]
      %v256 = vld [vmem:[%s203 + $0xa0] sm:$0xf]
      %v257 = vld [vmem:[%s203 + $0xa4] sm:$0x1]
      %v258 = vld [vmem:[%s203 + $0xa8] sm:$0xf]
      %v259 = vld [vmem:[%s203 + $0xac] sm:$0xf]
      %v260 = vld [vmem:[%s203 + $0xb0] sm:$0x1]
      %v261 = vld [vmem:[%s203 + $0xb4] sm:$0xf]
      %v262 = vld [vmem:[%s203 + $0xb8] sm:$0xf]
      %v263 = vld [vmem:[%s203 + $0xbc] sm:$0x1]
      %v264 = vld [vmem:[%s203 + $0xc0] sm:$0xf]
      %v265 = vld [vmem:[%s203 + $0xc4] sm:$0xf]
      %v266 = vld [vmem:[%s203 + $0xc8] sm:$0x1]
      %v267 = vld [vmem:[%s203 + $0xcc] sm:$0xf]
      %v268 = vld [vmem:[%s203 + $0xd0] sm:$0xf]
      %v269 = vld [vmem:[%s203 + $0xd4] sm:$0x1]
      %v270 = vld [vmem:[%s1] sm:$0x3]
      %vm271 = vsmask.f32 3328
      %vm272 = vsmask.f32 7440
      %vm273 = vmor %vm271, %vm272
      %v275 = vshrl.u32 %v216, 16
      %v277 = vrot.slane %v275, 4
      %v278 = vshll.u32 %v216, 16
      %v280 = vrot.slane %v278, 5
      %v281 = vor.u32 %v277, %v280
      %v282 = vrot.slane %v281, 4
      %v284 = vshll.u32 %v217, 16
      %v286 = vrot.slane %v284, 5
      %v287 = vsel %vm273, %v282, %v286
      %v288 = vshrl.u32 %v217, 16
      %v290 = vrot.slane %v288, 4
      %v291 = vor.u32 %v290, %v286
      %v292 = vrot.slane %v291, 4
      %v294 = vshll.u32 %v218, 16
      %v296 = vrot.slane %v294, 5
      %v297 = vsel %vm273, %v292, %v296
      %v299 = vshrl.u32 %v219, 16
      %v301 = vrot.slane %v299, 4
      %v302 = vshll.u32 %v219, 16
      %v304 = vrot.slane %v302, 5
      %v305 = vor.u32 %v301, %v304
      %v306 = vrot.slane %v305, 4
      %v308 = vshll.u32 %v220, 16
      %v310 = vrot.slane %v308, 5
      %v311 = vsel %vm273, %v306, %v310
      %v312 = vshrl.u32 %v220, 16
      %v314 = vrot.slane %v312, 4
      %v315 = vor.u32 %v314, %v310
      %v316 = vrot.slane %v315, 4
      %v318 = vshll.u32 %v221, 16
      %v320 = vrot.slane %v318, 5
      %v321 = vsel %vm273, %v316, %v320
      %v323 = vshrl.u32 %v222, 16
      %v325 = vrot.slane %v323, 4
      %v326 = vshll.u32 %v222, 16
      %v328 = vrot.slane %v326, 5
      %v329 = vor.u32 %v325, %v328
      %v330 = vrot.slane %v329, 4
      %v332 = vshll.u32 %v223, 16
      %v334 = vrot.slane %v332, 5
      %v335 = vsel %vm273, %v330, %v334
      %v336 = vshrl.u32 %v223, 16
      %v338 = vrot.slane %v336, 4
      %v339 = vor.u32 %v338, %v334
      %v340 = vrot.slane %v339, 4
      %v342 = vshll.u32 %v224, 16
      %v344 = vrot.slane %v342, 5
      %v345 = vsel %vm273, %v340, %v344
      %v347 = vshrl.u32 %v225, 16
      %v349 = vrot.slane %v347, 4
      %v350 = vshll.u32 %v225, 16
      %v352 = vrot.slane %v350, 5
      %v353 = vor.u32 %v349, %v352
      %v354 = vrot.slane %v353, 4
      %v356 = vshll.u32 %v226, 16
      %v358 = vrot.slane %v356, 5
      %v359 = vsel %vm273, %v354, %v358
      %v360 = vshrl.u32 %v226, 16
      %v362 = vrot.slane %v360, 4
      %v363 = vor.u32 %v362, %v358
      %v364 = vrot.slane %v363, 4
      %v366 = vshll.u32 %v227, 16
      %v368 = vrot.slane %v366, 5
      %v369 = vsel %vm273, %v364, %v368
      %v371 = vshrl.u32 %v228, 16
      %v373 = vrot.slane %v371, 4
      %v374 = vshll.u32 %v228, 16
      %v376 = vrot.slane %v374, 5
      %v377 = vor.u32 %v373, %v376
      %v378 = vrot.slane %v377, 4
      %v380 = vshll.u32 %v229, 16
      %v382 = vrot.slane %v380, 5
      %v383 = vsel %vm273, %v378, %v382
      %v384 = vshrl.u32 %v229, 16
      %v386 = vrot.slane %v384, 4
      %v387 = vor.u32 %v386, %v382
      %v388 = vrot.slane %v387, 4
      %v390 = vshll.u32 %v230, 16
      %v392 = vrot.slane %v390, 5
      %v393 = vsel %vm273, %v388, %v392
      %v395 = vshrl.u32 %v231, 16
      %v397 = vrot.slane %v395, 4
      %v398 = vshll.u32 %v231, 16
      %v400 = vrot.slane %v398, 5
      %v401 = vor.u32 %v397, %v400
      %v402 = vrot.slane %v401, 4
      %v404 = vshll.u32 %v232, 16
      %v406 = vrot.slane %v404, 5
      %v407 = vsel %vm273, %v402, %v406
      %v408 = vshrl.u32 %v232, 16
      %v410 = vrot.slane %v408, 4
      %v411 = vor.u32 %v410, %v406
      %v412 = vrot.slane %v411, 4
      %v414 = vshll.u32 %v233, 16
      %v416 = vrot.slane %v414, 5
      %v417 = vsel %vm273, %v412, %v416
      %v419 = vshrl.u32 %v234, 16
      %v421 = vrot.slane %v419, 4
      %v422 = vshll.u32 %v234, 16
      %v424 = vrot.slane %v422, 5
      %v425 = vor.u32 %v421, %v424
      %v426 = vrot.slane %v425, 4
      %v428 = vshll.u32 %v235, 16
      %v430 = vrot.slane %v428, 5
      %v431 = vsel %vm273, %v426, %v430
      %v432 = vshrl.u32 %v235, 16
      %v434 = vrot.slane %v432, 4
      %v435 = vor.u32 %v434, %v430
      %v436 = vrot.slane %v435, 4
      %v438 = vshll.u32 %v236, 16
      %v440 = vrot.slane %v438, 5
      %v441 = vsel %vm273, %v436, %v440
      %v443 = vshrl.u32 %v237, 16
      %v445 = vrot.slane %v443, 4
      %v446 = vshll.u32 %v237, 16
      %v448 = vrot.slane %v446, 5
      %v449 = vor.u32 %v445, %v448
      %v450 = vrot.slane %v449, 4
      %v452 = vshll.u32 %v238, 16
      %v454 = vrot.slane %v452, 5
      %v455 = vsel %vm273, %v450, %v454
      %v456 = vshrl.u32 %v238, 16
      %v458 = vrot.slane %v456, 4
      %v459 = vor.u32 %v458, %v454
      %v460 = vrot.slane %v459, 4
      %v462 = vshll.u32 %v239, 16
      %v464 = vrot.slane %v462, 5
      %v465 = vsel %vm273, %v460, %v464
      %v467 = vshrl.u32 %v240, 16
      %v469 = vrot.slane %v467, 4
      %v470 = vshll.u32 %v240, 16
      %v472 = vrot.slane %v470, 5
      %v473 = vor.u32 %v469, %v472
      %v474 = vrot.slane %v473, 4
      %v476 = vshll.u32 %v241, 16
      %v478 = vrot.slane %v476, 5
      %v479 = vsel %vm273, %v474, %v478
      %v480 = vshrl.u32 %v241, 16
      %v482 = vrot.slane %v480, 4
      %v483 = vor.u32 %v482, %v478
      %v484 = vrot.slane %v483, 4
      %v486 = vshll.u32 %v242, 16
      %v488 = vrot.slane %v486, 5
      %v489 = vsel %vm273, %v484, %v488
      %v491 = vshrl.u32 %v243, 16
      %v493 = vrot.slane %v491, 4
      %v494 = vshll.u32 %v243, 16
      %v496 = vrot.slane %v494, 5
      %v497 = vor.u32 %v493, %v496
      %v498 = vrot.slane %v497, 4
      %v500 = vshll.u32 %v244, 16
      %v502 = vrot.slane %v500, 5
      %v503 = vsel %vm273, %v498, %v502
      %v504 = vshrl.u32 %v244, 16
      %v506 = vrot.slane %v504, 4
      %v507 = vor.u32 %v506, %v502
      %v508 = vrot.slane %v507, 4
      %v510 = vshll.u32 %v245, 16
      %v512 = vrot.slane %v510, 5
      %v513 = vsel %vm273, %v508, %v512
      %v515 = vshrl.u32 %v246, 16
      %v517 = vrot.slane %v515, 4
      %v518 = vshll.u32 %v246, 16
      %v520 = vrot.slane %v518, 5
      %v521 = vor.u32 %v517, %v520
      %v522 = vrot.slane %v521, 4
      %v524 = vshll.u32 %v247, 16
      %v526 = vrot.slane %v524, 5
      %v527 = vsel %vm273, %v522, %v526
      %v528 = vshrl.u32 %v247, 16
      %v530 = vrot.slane %v528, 4
      %v531 = vor.u32 %v530, %v526
      %v532 = vrot.slane %v531, 4
      %v534 = vshll.u32 %v248, 16
      %v536 = vrot.slane %v534, 5
      %v537 = vsel %vm273, %v532, %v536
      %v539 = vshrl.u32 %v249, 16
      %v541 = vrot.slane %v539, 4
      %v542 = vshll.u32 %v249, 16
      %v544 = vrot.slane %v542, 5
      %v545 = vor.u32 %v541, %v544
      %v546 = vrot.slane %v545, 4
      %v548 = vshll.u32 %v250, 16
      %v550 = vrot.slane %v548, 5
      %v551 = vsel %vm273, %v546, %v550
      %v552 = vshrl.u32 %v250, 16
      %v554 = vrot.slane %v552, 4
      %v555 = vor.u32 %v554, %v550
      %v556 = vrot.slane %v555, 4
      %v558 = vshll.u32 %v251, 16
      %v560 = vrot.slane %v558, 5
      %v561 = vsel %vm273, %v556, %v560
      %v563 = vshrl.u32 %v252, 16
      %v565 = vrot.slane %v563, 4
      %v566 = vshll.u32 %v252, 16
      %v568 = vrot.slane %v566, 5
      %v569 = vor.u32 %v565, %v568
      %v570 = vrot.slane %v569, 4
      %v572 = vshll.u32 %v253, 16
      %v574 = vrot.slane %v572, 5
      %v575 = vsel %vm273, %v570, %v574
      %v576 = vshrl.u32 %v253, 16
      %v578 = vrot.slane %v576, 4
      %v579 = vor.u32 %v578, %v574
      %v580 = vrot.slane %v579, 4
      %v582 = vshll.u32 %v254, 16
      %v584 = vrot.slane %v582, 5
      %v585 = vsel %vm273, %v580, %v584
      %v587 = vshrl.u32 %v255, 16
      %v589 = vrot.slane %v587, 4
      %v590 = vshll.u32 %v255, 16
      %v592 = vrot.slane %v590, 5
      %v593 = vor.u32 %v589, %v592
      %v594 = vrot.slane %v593, 4
      %v596 = vshll.u32 %v256, 16
      %v598 = vrot.slane %v596, 5
      %v599 = vsel %vm273, %v594, %v598
      %v600 = vshrl.u32 %v256, 16
      %v602 = vrot.slane %v600, 4
      %v603 = vor.u32 %v602, %v598
      %v604 = vrot.slane %v603, 4
      %v606 = vshll.u32 %v257, 16
      %v608 = vrot.slane %v606, 5
      %v609 = vsel %vm273, %v604, %v608
      %v611 = vshrl.u32 %v258, 16
      %v613 = vrot.slane %v611, 4
      %v614 = vshll.u32 %v258, 16
      %v616 = vrot.slane %v614, 5
      %v617 = vor.u32 %v613, %v616
      %v618 = vrot.slane %v617, 4
      %v620 = vshll.u32 %v259, 16
      %v622 = vrot.slane %v620, 5
      %v623 = vsel %vm273, %v618, %v622
      %v624 = vshrl.u32 %v259, 16
      %v626 = vrot.slane %v624, 4
      %v627 = vor.u32 %v626, %v622
      %v628 = vrot.slane %v627, 4
      %v630 = vshll.u32 %v260, 16
      %v632 = vrot.slane %v630, 5
      %v633 = vsel %vm273, %v628, %v632
      %v635 = vshrl.u32 %v261, 16
      %v637 = vrot.slane %v635, 4
      %v638 = vshll.u32 %v261, 16
      %v640 = vrot.slane %v638, 5
      %v641 = vor.u32 %v637, %v640
      %v642 = vrot.slane %v641, 4
      %v644 = vshll.u32 %v262, 16
      %v646 = vrot.slane %v644, 5
      %v647 = vsel %vm273, %v642, %v646
      %v648 = vshrl.u32 %v262, 16
      %v650 = vrot.slane %v648, 4
      %v651 = vor.u32 %v650, %v646
      %v652 = vrot.slane %v651, 4
      %v654 = vshll.u32 %v263, 16
      %v656 = vrot.slane %v654, 5
      %v657 = vsel %vm273, %v652, %v656
      %s658 = scalar_lea.vmem %s1, 2
      %v659 = vld [vmem:[%s658] sm:$0x3]
      %v660 = vunpack.c.l.b16 %v287
      %v661 = vunpack.c.l.b16 %v297
      %v662 = vunpack.c.l.b16 %v311
      %v663 = vunpack.c.l.b16 %v321
      %v664 = vunpack.c.l.b16 %v335
      %v665 = vunpack.c.l.b16 %v345
      %v666 = vunpack.c.l.b16 %v359
      %v667 = vunpack.c.l.b16 %v369
      %v668 = vunpack.c.l.b16 %v383
      %v669 = vunpack.c.l.b16 %v393
      %v670 = vunpack.c.l.b16 %v407
      %v671 = vunpack.c.l.b16 %v417
      %v672 = vunpack.c.l.b16 %v431
      %v673 = vunpack.c.l.b16 %v441
      %v674 = vunpack.c.l.b16 %v455
      %v675 = vunpack.c.l.b16 %v465
      %v676 = vunpack.c.l.b16 %v479
      %v677 = vunpack.c.l.b16 %v489
      %v678 = vunpack.c.l.b16 %v503
      %v679 = vunpack.c.l.b16 %v513
      %v680 = vunpack.c.l.b16 %v527
      %v681 = vunpack.c.l.b16 %v537
      %v682 = vunpack.c.l.b16 %v551
      %v683 = vunpack.c.l.b16 %v561
      %v684 = vunpack.c.l.b16 %v575
      %v685 = vunpack.c.l.b16 %v585
      %v686 = vunpack.c.l.b16 %v599
      %v687 = vunpack.c.l.b16 %v609
      %v688 = vunpack.c.l.b16 %v623
      %v689 = vunpack.c.l.b16 %v633
      %v690 = vunpack.c.l.b16 %v647
      %v691 = vunpack.c.l.b16 %v657
      %v692 = vpack.c.b16 %v661, %v660
      %v693 = vpack.c.b16 %v663, %v662
      %v694 = vpack.c.b16 %v665, %v664
      %v695 = vpack.c.b16 %v667, %v666
      %v696 = vpack.c.b16 %v669, %v668
      %v697 = vpack.c.b16 %v671, %v670
      %v698 = vpack.c.b16 %v673, %v672
      %v699 = vpack.c.b16 %v675, %v674
      %v700 = vpack.c.b16 %v677, %v676
      %v701 = vpack.c.b16 %v679, %v678
      %v702 = vpack.c.b16 %v681, %v680
      %v703 = vpack.c.b16 %v683, %v682
      %v704 = vpack.c.b16 %v685, %v684
      %v705 = vpack.c.b16 %v687, %v686
      %v706 = vpack.c.b16 %v689, %v688
      %v707 = vpack.c.b16 %v691, %v690
      %vm708 = vcmask 31744
      %v710 = vsel %vm708, %v692, 0
      %v713 = vsel %vm708, %v693, 0
      %v716 = vsel %vm708, %v694, 0
      %v719 = vsel %vm708, %v695, 0
      %v722 = vsel %vm708, %v696, 0
      %v725 = vsel %vm708, %v697, 0
      %v728 = vsel %vm708, %v698, 0
      %v731 = vsel %vm708, %v699, 0
      %v734 = vsel %vm708, %v700, 0
      %v737 = vsel %vm708, %v701, 0
      %v740 = vsel %vm708, %v702, 0
      %v743 = vsel %vm708, %v703, 0
      %v746 = vsel %vm708, %v704, 0
      %v749 = vsel %vm708, %v705, 0
      %v752 = vsel %vm708, %v706, 0
      %v755 = vsel %vm708, %v707, 0
      %vm757 = vcmask 1041408
      %v759 = vsel %vm757, %v659, 0
      %761 = vmatprep.subr.bf16.mxu0 0
      %762 = vmatpush1.bf16.msra.mxu0 0
      %763 = vmatprep.subr.bf16.mxu0 0
      %764 = vmatpush1.bf16.msra.mxu0 0
      %765 = vmatprep.subr.bf16.mxu0 0
      %766 = vmatpush1.bf16.msra.mxu0 0
      %767 = vmatprep.subr.bf16.mxu0 0
      %768 = vmatpush1.bf16.msra.mxu0 0
      %769 = vmatprep.subr.bf16.mxu0 0
      %770 = vmatpush1.bf16.msra.mxu0 0
      %771 = vmatprep.subr.bf16.mxu0 0
      %772 = vmatpush1.bf16.msra.mxu0 0
      %773 = vmatprep.subr.bf16.mxu0 0
      %774 = vmatpush1.bf16.msra.mxu0 0
      %775 = vmatprep.subr.bf16.mxu0 0
      %776 = vmatpush1.bf16.msra.mxu0 %v759
      %777 = vmatprep.subr.bf16.mxu0 0
      %778 = vmatpush2.bf16.msra.mxu0 0
      %779 = vmatprep.subr.bf16.mxu0 0
      %780 = vmatpush2.bf16.msra.mxu0 0
      %781 = vmatprep.subr.bf16.mxu0 0
      %782 = vmatpush2.bf16.msra.mxu0 0
      %783 = vmatprep.subr.bf16.mxu0 0
      %784 = vmatpush2.bf16.msra.mxu0 0
      %785 = vmatprep.subr.bf16.mxu0 0
      %786 = vmatpush2.bf16.msra.mxu0 0
      %787 = vmatprep.subr.bf16.mxu0 0
      %788 = vmatpush2.bf16.msra.mxu0 0
      %789 = vmatprep.subr.bf16.mxu0 0
      %790 = vmatpush2.bf16.msra.mxu0 0
      %791 = vmatprep.subr.bf16.mxu0 0
      %792 = vmatpush2.bf16.msra.mxu0 0
      %793 = vmatprep.mubr.bf16.mxu0 0
      %794 = vmatmul.mubr.bf16.gmra.mxu0 %v710
      %v795 = vpop.f32.mrf.mxu0
      %v796 = vadd.f32 0.0, %v795
      %v797 = vpop.f32.mrf.mxu0
      %v798 = vpop.f32.mrf.mxu0
      %v799 = vadd.f32 0.0, %v798
      %v800 = vpop.f32.mrf.mxu0
      %801 = vmatprep.mubr.bf16.mxu0 0
      %802 = vmatmul.mubr.bf16.gmra.mxu0 %v713
      %v803 = vpop.f32.mrf.mxu0
      %v804 = vadd.f32 0.0, %v803
      %v805 = vpop.f32.mrf.mxu0
      %v806 = vpop.f32.mrf.mxu0
      %v807 = vadd.f32 0.0, %v806
      %v808 = vpop.f32.mrf.mxu0
      %809 = vmatprep.mubr.bf16.mxu0 0
      %810 = vmatmul.mubr.bf16.gmra.mxu0 %v716
      %v811 = vpop.f32.mrf.mxu0
      %v812 = vadd.f32 0.0, %v811
      %v813 = vpop.f32.mrf.mxu0
      %v814 = vpop.f32.mrf.mxu0
      %v815 = vadd.f32 0.0, %v814
      %v816 = vpop.f32.mrf.mxu0
      %817 = vmatprep.mubr.bf16.mxu0 0
      %818 = vmatmul.mubr.bf16.gmra.mxu0 %v719
      %v819 = vpop.f32.mrf.mxu0
      %v820 = vadd.f32 0.0, %v819
      %v821 = vpop.f32.mrf.mxu0
      %v822 = vpop.f32.mrf.mxu0
      %v823 = vadd.f32 0.0, %v822
      %v824 = vpop.f32.mrf.mxu0
      %825 = vmatprep.mubr.bf16.mxu0 0
      %826 = vmatmul.mubr.bf16.gmra.mxu0 %v722
      %v827 = vpop.f32.mrf.mxu0
      %v828 = vadd.f32 0.0, %v827
      %v829 = vpop.f32.mrf.mxu0
      %v830 = vpop.f32.mrf.mxu0
      %v831 = vadd.f32 0.0, %v830
      %v832 = vpop.f32.mrf.mxu0
      %833 = vmatprep.mubr.bf16.mxu0 0
      %834 = vmatmul.mubr.bf16.gmra.mxu0 %v725
      %v835 = vpop.f32.mrf.mxu0
      %v836 = vadd.f32 0.0, %v835
      %v837 = vpop.f32.mrf.mxu0
      %v838 = vpop.f32.mrf.mxu0
      %v839 = vadd.f32 0.0, %v838
      %v840 = vpop.f32.mrf.mxu0
      %841 = vmatprep.mubr.bf16.mxu0 0
      %842 = vmatmul.mubr.bf16.gmra.mxu0 %v728
      %v843 = vpop.f32.mrf.mxu0
      %v844 = vadd.f32 0.0, %v843
      %v845 = vpop.f32.mrf.mxu0
      %v846 = vpop.f32.mrf.mxu0
      %v847 = vadd.f32 0.0, %v846
      %v848 = vpop.f32.mrf.mxu0
      %849 = vmatprep.mubr.bf16.mxu0 0
      %850 = vmatmul.mubr.bf16.gmra.mxu0 %v731
      %v851 = vpop.f32.mrf.mxu0
      %v852 = vadd.f32 0.0, %v851
      %v853 = vpop.f32.mrf.mxu0
      %v854 = vpop.f32.mrf.mxu0
      %v855 = vadd.f32 0.0, %v854
      %v856 = vpop.f32.mrf.mxu0
      %857 = vmatprep.mubr.bf16.mxu0 0
      %858 = vmatmul.mubr.bf16.gmra.mxu0 %v734
      %v859 = vpop.f32.mrf.mxu0
      %v860 = vadd.f32 0.0, %v859
      %v861 = vpop.f32.mrf.mxu0
      %v862 = vpop.f32.mrf.mxu0
      %v863 = vadd.f32 0.0, %v862
      %v864 = vpop.f32.mrf.mxu0
      %865 = vmatprep.mubr.bf16.mxu0 0
      %866 = vmatmul.mubr.bf16.gmra.mxu0 %v737
      %v867 = vpop.f32.mrf.mxu0
      %v868 = vadd.f32 0.0, %v867
      %v869 = vpop.f32.mrf.mxu0
      %v870 = vpop.f32.mrf.mxu0
      %v871 = vadd.f32 0.0, %v870
      %v872 = vpop.f32.mrf.mxu0
      %873 = vmatprep.mubr.bf16.mxu0 0
      %874 = vmatmul.mubr.bf16.gmra.mxu0 %v740
      %v875 = vpop.f32.mrf.mxu0
      %v876 = vadd.f32 0.0, %v875
      %v877 = vpop.f32.mrf.mxu0
      %v878 = vpop.f32.mrf.mxu0
      %v879 = vadd.f32 0.0, %v878
      %v880 = vpop.f32.mrf.mxu0
      %881 = vmatprep.mubr.bf16.mxu0 0
      %882 = vmatmul.mubr.bf16.gmra.mxu0 %v743
      %v883 = vpop.f32.mrf.mxu0
      %v884 = vadd.f32 0.0, %v883
      %v885 = vpop.f32.mrf.mxu0
      %v886 = vpop.f32.mrf.mxu0
      %v887 = vadd.f32 0.0, %v886
      %v888 = vpop.f32.mrf.mxu0
      %889 = vmatprep.mubr.bf16.mxu0 0
      %890 = vmatmul.mubr.bf16.gmra.mxu0 %v746
      %v891 = vpop.f32.mrf.mxu0
      %v892 = vadd.f32 0.0, %v891
      %v893 = vpop.f32.mrf.mxu0
      %v894 = vpop.f32.mrf.mxu0
      %v895 = vadd.f32 0.0, %v894
      %v896 = vpop.f32.mrf.mxu0
      %897 = vmatprep.mubr.bf16.mxu0 0
      %898 = vmatmul.mubr.bf16.gmra.mxu0 %v749
      %v899 = vpop.f32.mrf.mxu0
      %v900 = vadd.f32 0.0, %v899
      %v901 = vpop.f32.mrf.mxu0
      %v902 = vpop.f32.mrf.mxu0
      %v903 = vadd.f32 0.0, %v902
      %v904 = vpop.f32.mrf.mxu0
      %905 = vmatprep.mubr.bf16.mxu0 0
      %906 = vmatmul.mubr.bf16.gmra.mxu0 %v752
      %v907 = vpop.f32.mrf.mxu0
      %v908 = vadd.f32 0.0, %v907
      %v909 = vpop.f32.mrf.mxu0
      %v910 = vpop.f32.mrf.mxu0
      %v911 = vadd.f32 0.0, %v910
      %v912 = vpop.f32.mrf.mxu0
      %913 = vmatprep.mubr.bf16.mxu0 0
      %914 = vmatmul.mubr.bf16.gmra.mxu0 %v755
      %v915 = vpop.f32.mrf.mxu0
      %v916 = vadd.f32 0.0, %v915
      %v917 = vpop.f32.mrf.mxu0
      %v918 = vpop.f32.mrf.mxu0
      %v919 = vadd.f32 0.0, %v918
      %v920 = vpop.f32.mrf.mxu0
      %921 = vdwg.mxu0
      %v954 = vunpack.c.l.b16 %v216
      %v955 = vunpack.c.l.b16 %v217
      %v956 = vunpack.c.l.b16 %v219
      %v957 = vunpack.c.l.b16 %v220
      %v958 = vunpack.c.l.b16 %v222
      %v959 = vunpack.c.l.b16 %v223
      %v960 = vunpack.c.l.b16 %v225
      %v961 = vunpack.c.l.b16 %v226
      %v962 = vunpack.c.l.b16 %v228
      %v963 = vunpack.c.l.b16 %v229
      %v964 = vunpack.c.l.b16 %v231
      %v965 = vunpack.c.l.b16 %v232
      %v966 = vunpack.c.l.b16 %v234
      %v967 = vunpack.c.l.b16 %v235
      %v968 = vunpack.c.l.b16 %v237
      %v969 = vunpack.c.l.b16 %v238
      %v970 = vunpack.c.l.b16 %v240
      %v971 = vunpack.c.l.b16 %v241
      %v972 = vunpack.c.l.b16 %v243
      %v973 = vunpack.c.l.b16 %v244
      %v974 = vunpack.c.l.b16 %v246
      %v975 = vunpack.c.l.b16 %v247
      %v976 = vunpack.c.l.b16 %v249
      %v977 = vunpack.c.l.b16 %v250
      %v978 = vunpack.c.l.b16 %v252
      %v979 = vunpack.c.l.b16 %v253
      %v980 = vunpack.c.l.b16 %v255
      %v981 = vunpack.c.l.b16 %v256
      %v982 = vunpack.c.l.b16 %v258
      %v983 = vunpack.c.l.b16 %v259
      %v984 = vunpack.c.l.b16 %v261
      %v985 = vunpack.c.l.b16 %v262
      %v986 = vpack.c.b16 %v955, %v954
      %v987 = vpack.c.b16 %v957, %v956
      %v988 = vpack.c.b16 %v959, %v958
      %v989 = vpack.c.b16 %v961, %v960
      %v990 = vpack.c.b16 %v963, %v962
      %v991 = vpack.c.b16 %v965, %v964
      %v992 = vpack.c.b16 %v967, %v966
      %v993 = vpack.c.b16 %v969, %v968
      %v994 = vpack.c.b16 %v971, %v970
      %v995 = vpack.c.b16 %v973, %v972
      %v996 = vpack.c.b16 %v975, %v974
      %v997 = vpack.c.b16 %v977, %v976
      %v998 = vpack.c.b16 %v979, %v978
      %v999 = vpack.c.b16 %v981, %v980
      %v1000 = vpack.c.b16 %v983, %v982
      %v1001 = vpack.c.b16 %v985, %v984
      %v1003 = vsel %vm708, %v986, 0
      %v1006 = vsel %vm708, %v987, 0
      %v1009 = vsel %vm708, %v988, 0
      %v1012 = vsel %vm708, %v989, 0
      %v1015 = vsel %vm708, %v990, 0
      %v1018 = vsel %vm708, %v991, 0
      %v1021 = vsel %vm708, %v992, 0
      %v1024 = vsel %vm708, %v993, 0
      %v1027 = vsel %vm708, %v994, 0
      %v1030 = vsel %vm708, %v995, 0
      %v1033 = vsel %vm708, %v996, 0
      %v1036 = vsel %vm708, %v997, 0
      %v1039 = vsel %vm708, %v998, 0
      %v1042 = vsel %vm708, %v999, 0
      %v1045 = vsel %vm708, %v1000, 0
      %v1048 = vsel %vm708, %v1001, 0
      %v1051 = vsel %vm757, %v270, 0
      %1053 = vmatprep.subr.bf16.mxu0 0
      %1054 = vmatpush1.bf16.msra.mxu0 0
      %1055 = vmatprep.subr.bf16.mxu0 0
      %1056 = vmatpush1.bf16.msra.mxu0 0
      %1057 = vmatprep.subr.bf16.mxu0 0
      %1058 = vmatpush1.bf16.msra.mxu0 0
      %1059 = vmatprep.subr.bf16.mxu0 0
      %1060 = vmatpush1.bf16.msra.mxu0 0
      %1061 = vmatprep.subr.bf16.mxu0 0
      %1062 = vmatpush1.bf16.msra.mxu0 0
      %1063 = vmatprep.subr.bf16.mxu0 0
      %1064 = vmatpush1.bf16.msra.mxu0 0
      %1065 = vmatprep.subr.bf16.mxu0 0
      %1066 = vmatpush1.bf16.msra.mxu0 0
      %1067 = vmatprep.subr.bf16.mxu0 0
      %1068 = vmatpush1.bf16.msra.mxu0 %v1051
      %1069 = vmatprep.subr.bf16.mxu0 0
      %1070 = vmatpush2.bf16.msra.mxu0 0
      %1071 = vmatprep.subr.bf16.mxu0 0
      %1072 = vmatpush2.bf16.msra.mxu0 0
      %1073 = vmatprep.subr.bf16.mxu0 0
      %1074 = vmatpush2.bf16.msra.mxu0 0
      %1075 = vmatprep.subr.bf16.mxu0 0
      %1076 = vmatpush2.bf16.msra.mxu0 0
      %1077 = vmatprep.subr.bf16.mxu0 0
      %1078 = vmatpush2.bf16.msra.mxu0 0
      %1079 = vmatprep.subr.bf16.mxu0 0
      %1080 = vmatpush2.bf16.msra.mxu0 0
      %1081 = vmatprep.subr.bf16.mxu0 0
      %1082 = vmatpush2.bf16.msra.mxu0 0
      %1083 = vmatprep.subr.bf16.mxu0 0
      %1084 = vmatpush2.bf16.msra.mxu0 0
      %1085 = vmatprep.mubr.bf16.mxu0 0
      %1086 = vmatmul.mubr.bf16.gmra.mxu0 %v1003
      %v1087 = vpop.f32.mrf.mxu0
      %v1088 = vadd.f32 %v796, %v1087
      %v1089 = vpop.f32.mrf.mxu0
      %v1090 = vpop.f32.mrf.mxu0
      %v1091 = vadd.f32 %v799, %v1090
      %v1092 = vpop.f32.mrf.mxu0
      %1093 = vmatprep.mubr.bf16.mxu0 0
      %1094 = vmatmul.mubr.bf16.gmra.mxu0 %v1006
      %v1095 = vpop.f32.mrf.mxu0
      %v1096 = vadd.f32 %v804, %v1095
      %v1097 = vpop.f32.mrf.mxu0
      %v1098 = vpop.f32.mrf.mxu0
      %v1099 = vadd.f32 %v807, %v1098
      %v1100 = vpop.f32.mrf.mxu0
      %1101 = vmatprep.mubr.bf16.mxu0 0
      %1102 = vmatmul.mubr.bf16.gmra.mxu0 %v1009
      %v1103 = vpop.f32.mrf.mxu0
      %v1104 = vadd.f32 %v812, %v1103
      %v1105 = vpop.f32.mrf.mxu0
      %v1106 = vpop.f32.mrf.mxu0
      %v1107 = vadd.f32 %v815, %v1106
      %v1108 = vpop.f32.mrf.mxu0
      %1109 = vmatprep.mubr.bf16.mxu0 0
      %1110 = vmatmul.mubr.bf16.gmra.mxu0 %v1012
      %v1111 = vpop.f32.mrf.mxu0
      %v1112 = vadd.f32 %v820, %v1111
      %v1113 = vpop.f32.mrf.mxu0
      %v1114 = vpop.f32.mrf.mxu0
      %v1115 = vadd.f32 %v823, %v1114
      %v1116 = vpop.f32.mrf.mxu0
      %1117 = vmatprep.mubr.bf16.mxu0 0
      %1118 = vmatmul.mubr.bf16.gmra.mxu0 %v1015
      %v1119 = vpop.f32.mrf.mxu0
      %v1120 = vadd.f32 %v828, %v1119
      %v1121 = vpop.f32.mrf.mxu0
      %v1122 = vpop.f32.mrf.mxu0
      %v1123 = vadd.f32 %v831, %v1122
      %v1124 = vpop.f32.mrf.mxu0
      %1125 = vmatprep.mubr.bf16.mxu0 0
      %1126 = vmatmul.mubr.bf16.gmra.mxu0 %v1018
      %v1127 = vpop.f32.mrf.mxu0
      %v1128 = vadd.f32 %v836, %v1127
      %v1129 = vpop.f32.mrf.mxu0
      %v1130 = vpop.f32.mrf.mxu0
      %v1131 = vadd.f32 %v839, %v1130
      %v1132 = vpop.f32.mrf.mxu0
      %1133 = vmatprep.mubr.bf16.mxu0 0
      %1134 = vmatmul.mubr.bf16.gmra.mxu0 %v1021
      %v1135 = vpop.f32.mrf.mxu0
      %v1136 = vadd.f32 %v844, %v1135
      %v1137 = vpop.f32.mrf.mxu0
      %v1138 = vpop.f32.mrf.mxu0
      %v1139 = vadd.f32 %v847, %v1138
      %v1140 = vpop.f32.mrf.mxu0
      %1141 = vmatprep.mubr.bf16.mxu0 0
      %1142 = vmatmul.mubr.bf16.gmra.mxu0 %v1024
      %v1143 = vpop.f32.mrf.mxu0
      %v1144 = vadd.f32 %v852, %v1143
      %v1145 = vpop.f32.mrf.mxu0
      %v1146 = vpop.f32.mrf.mxu0
      %v1147 = vadd.f32 %v855, %v1146
      %v1148 = vpop.f32.mrf.mxu0
      %1149 = vmatprep.mubr.bf16.mxu0 0
      %1150 = vmatmul.mubr.bf16.gmra.mxu0 %v1027
      %v1151 = vpop.f32.mrf.mxu0
      %v1152 = vadd.f32 %v860, %v1151
      %v1153 = vpop.f32.mrf.mxu0
      %v1154 = vpop.f32.mrf.mxu0
      %v1155 = vadd.f32 %v863, %v1154
      %v1156 = vpop.f32.mrf.mxu0
      %1157 = vmatprep.mubr.bf16.mxu0 0
      %1158 = vmatmul.mubr.bf16.gmra.mxu0 %v1030
      %v1159 = vpop.f32.mrf.mxu0
      %v1160 = vadd.f32 %v868, %v1159
      %v1161 = vpop.f32.mrf.mxu0
      %v1162 = vpop.f32.mrf.mxu0
      %v1163 = vadd.f32 %v871, %v1162
      %v1164 = vpop.f32.mrf.mxu0
      %1165 = vmatprep.mubr.bf16.mxu0 0
      %1166 = vmatmul.mubr.bf16.gmra.mxu0 %v1033
      %v1167 = vpop.f32.mrf.mxu0
      %v1168 = vadd.f32 %v876, %v1167
      %v1169 = vpop.f32.mrf.mxu0
      %v1170 = vpop.f32.mrf.mxu0
      %v1171 = vadd.f32 %v879, %v1170
      %v1172 = vpop.f32.mrf.mxu0
      %1173 = vmatprep.mubr.bf16.mxu0 0
      %1174 = vmatmul.mubr.bf16.gmra.mxu0 %v1036
      %v1175 = vpop.f32.mrf.mxu0
      %v1176 = vadd.f32 %v884, %v1175
      %v1177 = vpop.f32.mrf.mxu0
      %v1178 = vpop.f32.mrf.mxu0
      %v1179 = vadd.f32 %v887, %v1178
      %v1180 = vpop.f32.mrf.mxu0
      %1181 = vmatprep.mubr.bf16.mxu0 0
      %1182 = vmatmul.mubr.bf16.gmra.mxu0 %v1039
      %v1183 = vpop.f32.mrf.mxu0
      %v1184 = vadd.f32 %v892, %v1183
      %v1185 = vpop.f32.mrf.mxu0
      %v1186 = vpop.f32.mrf.mxu0
      %v1187 = vadd.f32 %v895, %v1186
      %v1188 = vpop.f32.mrf.mxu0
      %1189 = vmatprep.mubr.bf16.mxu0 0
      %1190 = vmatmul.mubr.bf16.gmra.mxu0 %v1042
      %v1191 = vpop.f32.mrf.mxu0
      %v1192 = vadd.f32 %v900, %v1191
      %v1193 = vpop.f32.mrf.mxu0
      %v1194 = vpop.f32.mrf.mxu0
      %v1195 = vadd.f32 %v903, %v1194
      %v1196 = vpop.f32.mrf.mxu0
      %1197 = vmatprep.mubr.bf16.mxu0 0
      %1198 = vmatmul.mubr.bf16.gmra.mxu0 %v1045
      %v1199 = vpop.f32.mrf.mxu0
      %v1200 = vadd.f32 %v908, %v1199
      %v1201 = vpop.f32.mrf.mxu0
      %v1202 = vpop.f32.mrf.mxu0
      %v1203 = vadd.f32 %v911, %v1202
      %v1204 = vpop.f32.mrf.mxu0
      %1205 = vmatprep.mubr.bf16.mxu0 0
      %1206 = vmatmul.mubr.bf16.gmra.mxu0 %v1048
      %v1207 = vpop.f32.mrf.mxu0
      %v1208 = vadd.f32 %v916, %v1207
      %v1209 = vpop.f32.mrf.mxu0
      %v1210 = vpop.f32.mrf.mxu0
      %v1211 = vadd.f32 %v919, %v1210
      %v1212 = vpop.f32.mrf.mxu0
      %1213 = vdwg.mxu0
      %vm1230 = vcmask 1042432
      %vm1231 = vcmask 1046532
      %vm1232 = vmor %vm1230, %vm1231
      %v1233 = vrot.slane %v216, 5
      %v1234 = vrot.slane %v1233, 4
      %v1235 = vrot.slane %v217, 5
      %v1236 = vsel %vm1232, %v1234, %v1235
      %v1237 = vrot.slane %v1235, 4
      %v1238 = vrot.slane %v218, 5
      %v1239 = vsel %vm1232, %v1237, %v1238
      %v1240 = vrot.slane %v219, 5
      %v1241 = vrot.slane %v1240, 4
      %v1242 = vrot.slane %v220, 5
      %v1243 = vsel %vm1232, %v1241, %v1242
      %v1244 = vrot.slane %v1242, 4
      %v1245 = vrot.slane %v221, 5
      %v1246 = vsel %vm1232, %v1244, %v1245
      %v1247 = vrot.slane %v222, 5
      %v1248 = vrot.slane %v1247, 4
      %v1249 = vrot.slane %v223, 5
      %v1250 = vsel %vm1232, %v1248, %v1249
      %v1251 = vrot.slane %v1249, 4
      %v1252 = vrot.slane %v224, 5
      %v1253 = vsel %vm1232, %v1251, %v1252
      %v1254 = vrot.slane %v225, 5
      %v1255 = vrot.slane %v1254, 4
      %v1256 = vrot.slane %v226, 5
      %v1257 = vsel %vm1232, %v1255, %v1256
      %v1258 = vrot.slane %v1256, 4
      %v1259 = vrot.slane %v227, 5
      %v1260 = vsel %vm1232, %v1258, %v1259
      %v1261 = vrot.slane %v228, 5
      %v1262 = vrot.slane %v1261, 4
      %v1263 = vrot.slane %v229, 5
      %v1264 = vsel %vm1232, %v1262, %v1263
      %v1265 = vrot.slane %v1263, 4
      %v1266 = vrot.slane %v230, 5
      %v1267 = vsel %vm1232, %v1265, %v1266
      %v1268 = vrot.slane %v231, 5
      %v1269 = vrot.slane %v1268, 4
      %v1270 = vrot.slane %v232, 5
      %v1271 = vsel %vm1232, %v1269, %v1270
      %v1272 = vrot.slane %v1270, 4
      %v1273 = vrot.slane %v233, 5
      %v1274 = vsel %vm1232, %v1272, %v1273
      %v1275 = vrot.slane %v234, 5
      %v1276 = vrot.slane %v1275, 4
      %v1277 = vrot.slane %v235, 5
      %v1278 = vsel %vm1232, %v1276, %v1277
      %v1279 = vrot.slane %v1277, 4
      %v1280 = vrot.slane %v236, 5
      %v1281 = vsel %vm1232, %v1279, %v1280
      %v1282 = vrot.slane %v237, 5
      %v1283 = vrot.slane %v1282, 4
      %v1284 = vrot.slane %v238, 5
      %v1285 = vsel %vm1232, %v1283, %v1284
      %v1286 = vrot.slane %v1284, 4
      %v1287 = vrot.slane %v239, 5
      %v1288 = vsel %vm1232, %v1286, %v1287
      %v1289 = vrot.slane %v240, 5
      %v1290 = vrot.slane %v1289, 4
      %v1291 = vrot.slane %v241, 5
      %v1292 = vsel %vm1232, %v1290, %v1291
      %v1293 = vrot.slane %v1291, 4
      %v1294 = vrot.slane %v242, 5
      %v1295 = vsel %vm1232, %v1293, %v1294
      %v1296 = vrot.slane %v243, 5
      %v1297 = vrot.slane %v1296, 4
      %v1298 = vrot.slane %v244, 5
      %v1299 = vsel %vm1232, %v1297, %v1298
      %v1300 = vrot.slane %v1298, 4
      %v1301 = vrot.slane %v245, 5
      %v1302 = vsel %vm1232, %v1300, %v1301
      %v1303 = vrot.slane %v246, 5
      %v1304 = vrot.slane %v1303, 4
      %v1305 = vrot.slane %v247, 5
      %v1306 = vsel %vm1232, %v1304, %v1305
      %v1307 = vrot.slane %v1305, 4
      %v1308 = vrot.slane %v248, 5
      %v1309 = vsel %vm1232, %v1307, %v1308
      %v1310 = vrot.slane %v249, 5
      %v1311 = vrot.slane %v1310, 4
      %v1312 = vrot.slane %v250, 5
      %v1313 = vsel %vm1232, %v1311, %v1312
      %v1314 = vrot.slane %v1312, 4
      %v1315 = vrot.slane %v251, 5
      %v1316 = vsel %vm1232, %v1314, %v1315
      %v1317 = vrot.slane %v252, 5
      %v1318 = vrot.slane %v1317, 4
      %v1319 = vrot.slane %v253, 5
      %v1320 = vsel %vm1232, %v1318, %v1319
      %v1321 = vrot.slane %v1319, 4
      %v1322 = vrot.slane %v254, 5
      %v1323 = vsel %vm1232, %v1321, %v1322
      %v1324 = vrot.slane %v255, 5
      %v1325 = vrot.slane %v1324, 4
      %v1326 = vrot.slane %v256, 5
      %v1327 = vsel %vm1232, %v1325, %v1326
      %v1328 = vrot.slane %v1326, 4
      %v1329 = vrot.slane %v257, 5
      %v1330 = vsel %vm1232, %v1328, %v1329
      %v1331 = vrot.slane %v258, 5
      %v1332 = vrot.slane %v1331, 4
      %v1333 = vrot.slane %v259, 5
      %v1334 = vsel %vm1232, %v1332, %v1333
      %v1335 = vrot.slane %v1333, 4
      %v1336 = vrot.slane %v260, 5
      %v1337 = vsel %vm1232, %v1335, %v1336
      %v1338 = vrot.slane %v261, 5
      %v1339 = vrot.slane %v1338, 4
      %v1340 = vrot.slane %v262, 5
      %v1341 = vsel %vm1232, %v1339, %v1340
      %v1342 = vrot.slane %v1340, 4
      %v1343 = vrot.slane %v263, 5
      %v1344 = vsel %vm1232, %v1342, %v1343
      %s1345 = scalar_lea.vmem %s1, 4
      %v1346 = vld [vmem:[%s1345] sm:$0x3]
      %v1347 = vunpack.c.l.b16 %v1236
      %v1348 = vunpack.c.l.b16 %v1239
      %v1349 = vunpack.c.l.b16 %v1243
      %v1350 = vunpack.c.l.b16 %v1246
      %v1351 = vunpack.c.l.b16 %v1250
      %v1352 = vunpack.c.l.b16 %v1253
      %v1353 = vunpack.c.l.b16 %v1257
      %v1354 = vunpack.c.l.b16 %v1260
      %v1355 = vunpack.c.l.b16 %v1264
      %v1356 = vunpack.c.l.b16 %v1267
      %v1357 = vunpack.c.l.b16 %v1271
      %v1358 = vunpack.c.l.b16 %v1274
      %v1359 = vunpack.c.l.b16 %v1278
      %v1360 = vunpack.c.l.b16 %v1281
      %v1361 = vunpack.c.l.b16 %v1285
      %v1362 = vunpack.c.l.b16 %v1288
      %v1363 = vunpack.c.l.b16 %v1292
      %v1364 = vunpack.c.l.b16 %v1295
      %v1365 = vunpack.c.l.b16 %v1299
      %v1366 = vunpack.c.l.b16 %v1302
      %v1367 = vunpack.c.l.b16 %v1306
      %v1368 = vunpack.c.l.b16 %v1309
      %v1369 = vunpack.c.l.b16 %v1313
      %v1370 = vunpack.c.l.b16 %v1316
      %v1371 = vunpack.c.l.b16 %v1320
      %v1372 = vunpack.c.l.b16 %v1323
      %v1373 = vunpack.c.l.b16 %v1327
      %v1374 = vunpack.c.l.b16 %v1330
      %v1375 = vunpack.c.l.b16 %v1334
      %v1376 = vunpack.c.l.b16 %v1337
      %v1377 = vunpack.c.l.b16 %v1341
      %v1378 = vunpack.c.l.b16 %v1344
      %v1379 = vpack.c.b16 %v1348, %v1347
      %v1380 = vpack.c.b16 %v1350, %v1349
      %v1381 = vpack.c.b16 %v1352, %v1351
      %v1382 = vpack.c.b16 %v1354, %v1353
      %v1383 = vpack.c.b16 %v1356, %v1355
      %v1384 = vpack.c.b16 %v1358, %v1357
      %v1385 = vpack.c.b16 %v1360, %v1359
      %v1386 = vpack.c.b16 %v1362, %v1361
      %v1387 = vpack.c.b16 %v1364, %v1363
      %v1388 = vpack.c.b16 %v1366, %v1365
      %v1389 = vpack.c.b16 %v1368, %v1367
      %v1390 = vpack.c.b16 %v1370, %v1369
      %v1391 = vpack.c.b16 %v1372, %v1371
      %v1392 = vpack.c.b16 %v1374, %v1373
      %v1393 = vpack.c.b16 %v1376, %v1375
      %v1394 = vpack.c.b16 %v1378, %v1377
      %v1396 = vsel %vm708, %v1379, 0
      %v1399 = vsel %vm708, %v1380, 0
      %v1402 = vsel %vm708, %v1381, 0
      %v1405 = vsel %vm708, %v1382, 0
      %v1408 = vsel %vm708, %v1383, 0
      %v1411 = vsel %vm708, %v1384, 0
      %v1414 = vsel %vm708, %v1385, 0
      %v1417 = vsel %vm708, %v1386, 0
      %v1420 = vsel %vm708, %v1387, 0
      %v1423 = vsel %vm708, %v1388, 0
      %v1426 = vsel %vm708, %v1389, 0
      %v1429 = vsel %vm708, %v1390, 0
      %v1432 = vsel %vm708, %v1391, 0
      %v1435 = vsel %vm708, %v1392, 0
      %v1438 = vsel %vm708, %v1393, 0
      %v1441 = vsel %vm708, %v1394, 0
      %v1444 = vsel %vm757, %v1346, 0
      %1446 = vmatprep.subr.bf16.mxu0 0
      %1447 = vmatpush1.bf16.msra.mxu0 0
      %1448 = vmatprep.subr.bf16.mxu0 0
      %1449 = vmatpush1.bf16.msra.mxu0 0
      %1450 = vmatprep.subr.bf16.mxu0 0
      %1451 = vmatpush1.bf16.msra.mxu0 0
      %1452 = vmatprep.subr.bf16.mxu0 0
      %1453 = vmatpush1.bf16.msra.mxu0 0
      %1454 = vmatprep.subr.bf16.mxu0 0
      %1455 = vmatpush1.bf16.msra.mxu0 0
      %1456 = vmatprep.subr.bf16.mxu0 0
      %1457 = vmatpush1.bf16.msra.mxu0 0
      %1458 = vmatprep.subr.bf16.mxu0 0
      %1459 = vmatpush1.bf16.msra.mxu0 0
      %1460 = vmatprep.subr.bf16.mxu0 0
      %1461 = vmatpush1.bf16.msra.mxu0 %v1444
      %1462 = vmatprep.subr.bf16.mxu0 0
      %1463 = vmatpush2.bf16.msra.mxu0 0
      %1464 = vmatprep.subr.bf16.mxu0 0
      %1465 = vmatpush2.bf16.msra.mxu0 0
      %1466 = vmatprep.subr.bf16.mxu0 0
      %1467 = vmatpush2.bf16.msra.mxu0 0
      %1468 = vmatprep.subr.bf16.mxu0 0
      %1469 = vmatpush2.bf16.msra.mxu0 0
      %1470 = vmatprep.subr.bf16.mxu0 0
      %1471 = vmatpush2.bf16.msra.mxu0 0
      %1472 = vmatprep.subr.bf16.mxu0 0
      %1473 = vmatpush2.bf16.msra.mxu0 0
      %1474 = vmatprep.subr.bf16.mxu0 0
      %1475 = vmatpush2.bf16.msra.mxu0 0
      %1476 = vmatprep.subr.bf16.mxu0 0
      %1477 = vmatpush2.bf16.msra.mxu0 0
      %1478 = vmatprep.mubr.bf16.mxu0 0
      %1479 = vmatmul.mubr.bf16.gmra.mxu0 %v1396
      %v1480 = vpop.f32.mrf.mxu0
      %v1481 = vadd.f32 0.0, %v1480
      %v1482 = vpop.f32.mrf.mxu0
      %v1483 = vpop.f32.mrf.mxu0
      %v1484 = vadd.f32 0.0, %v1483
      %v1485 = vpop.f32.mrf.mxu0
      %1486 = vmatprep.mubr.bf16.mxu0 0
      %1487 = vmatmul.mubr.bf16.gmra.mxu0 %v1399
      %v1488 = vpop.f32.mrf.mxu0
      %v1489 = vadd.f32 0.0, %v1488
      %v1490 = vpop.f32.mrf.mxu0
      %v1491 = vpop.f32.mrf.mxu0
      %v1492 = vadd.f32 0.0, %v1491
      %v1493 = vpop.f32.mrf.mxu0
      %1494 = vmatprep.mubr.bf16.mxu0 0
      %1495 = vmatmul.mubr.bf16.gmra.mxu0 %v1402
      %v1496 = vpop.f32.mrf.mxu0
      %v1497 = vadd.f32 0.0, %v1496
      %v1498 = vpop.f32.mrf.mxu0
      %v1499 = vpop.f32.mrf.mxu0
      %v1500 = vadd.f32 0.0, %v1499
      %v1501 = vpop.f32.mrf.mxu0
      %1502 = vmatprep.mubr.bf16.mxu0 0
      %1503 = vmatmul.mubr.bf16.gmra.mxu0 %v1405
      %v1504 = vpop.f32.mrf.mxu0
      %v1505 = vadd.f32 0.0, %v1504
      %v1506 = vpop.f32.mrf.mxu0
      %v1507 = vpop.f32.mrf.mxu0
      %v1508 = vadd.f32 0.0, %v1507
      %v1509 = vpop.f32.mrf.mxu0
      %1510 = vmatprep.mubr.bf16.mxu0 0
      %1511 = vmatmul.mubr.bf16.gmra.mxu0 %v1408
      %v1512 = vpop.f32.mrf.mxu0
      %v1513 = vadd.f32 0.0, %v1512
      %v1514 = vpop.f32.mrf.mxu0
      %v1515 = vpop.f32.mrf.mxu0
      %v1516 = vadd.f32 0.0, %v1515
      %v1517 = vpop.f32.mrf.mxu0
      %1518 = vmatprep.mubr.bf16.mxu0 0
      %1519 = vmatmul.mubr.bf16.gmra.mxu0 %v1411
      %v1520 = vpop.f32.mrf.mxu0
      %v1521 = vadd.f32 0.0, %v1520
      %v1522 = vpop.f32.mrf.mxu0
      %v1523 = vpop.f32.mrf.mxu0
      %v1524 = vadd.f32 0.0, %v1523
      %v1525 = vpop.f32.mrf.mxu0
      %1526 = vmatprep.mubr.bf16.mxu0 0
      %1527 = vmatmul.mubr.bf16.gmra.mxu0 %v1414
      %v1528 = vpop.f32.mrf.mxu0
      %v1529 = vadd.f32 0.0, %v1528
      %v1530 = vpop.f32.mrf.mxu0
      %v1531 = vpop.f32.mrf.mxu0
      %v1532 = vadd.f32 0.0, %v1531
      %v1533 = vpop.f32.mrf.mxu0
      %1534 = vmatprep.mubr.bf16.mxu0 0
      %1535 = vmatmul.mubr.bf16.gmra.mxu0 %v1417
      %v1536 = vpop.f32.mrf.mxu0
      %v1537 = vadd.f32 0.0, %v1536
      %v1538 = vpop.f32.mrf.mxu0
      %v1539 = vpop.f32.mrf.mxu0
      %v1540 = vadd.f32 0.0, %v1539
      %v1541 = vpop.f32.mrf.mxu0
      %1542 = vmatprep.mubr.bf16.mxu0 0
      %1543 = vmatmul.mubr.bf16.gmra.mxu0 %v1420
      %v1544 = vpop.f32.mrf.mxu0
      %v1545 = vadd.f32 0.0, %v1544
      %v1546 = vpop.f32.mrf.mxu0
      %v1547 = vpop.f32.mrf.mxu0
      %v1548 = vadd.f32 0.0, %v1547
      %v1549 = vpop.f32.mrf.mxu0
      %1550 = vmatprep.mubr.bf16.mxu0 0
      %1551 = vmatmul.mubr.bf16.gmra.mxu0 %v1423
      %v1552 = vpop.f32.mrf.mxu0
      %v1553 = vadd.f32 0.0, %v1552
      %v1554 = vpop.f32.mrf.mxu0
      %v1555 = vpop.f32.mrf.mxu0
      %v1556 = vadd.f32 0.0, %v1555
      %v1557 = vpop.f32.mrf.mxu0
      %1558 = vmatprep.mubr.bf16.mxu0 0
      %1559 = vmatmul.mubr.bf16.gmra.mxu0 %v1426
      %v1560 = vpop.f32.mrf.mxu0
      %v1561 = vadd.f32 0.0, %v1560
      %v1562 = vpop.f32.mrf.mxu0
      %v1563 = vpop.f32.mrf.mxu0
      %v1564 = vadd.f32 0.0, %v1563
      %v1565 = vpop.f32.mrf.mxu0
      %1566 = vmatprep.mubr.bf16.mxu0 0
      %1567 = vmatmul.mubr.bf16.gmra.mxu0 %v1429
      %v1568 = vpop.f32.mrf.mxu0
      %v1569 = vadd.f32 0.0, %v1568
      %v1570 = vpop.f32.mrf.mxu0
      %v1571 = vpop.f32.mrf.mxu0
      %v1572 = vadd.f32 0.0, %v1571
      %v1573 = vpop.f32.mrf.mxu0
      %1574 = vmatprep.mubr.bf16.mxu0 0
      %1575 = vmatmul.mubr.bf16.gmra.mxu0 %v1432
      %v1576 = vpop.f32.mrf.mxu0
      %v1577 = vadd.f32 0.0, %v1576
      %v1578 = vpop.f32.mrf.mxu0
      %v1579 = vpop.f32.mrf.mxu0
      %v1580 = vadd.f32 0.0, %v1579
      %v1581 = vpop.f32.mrf.mxu0
      %1582 = vmatprep.mubr.bf16.mxu0 0
      %1583 = vmatmul.mubr.bf16.gmra.mxu0 %v1435
      %v1584 = vpop.f32.mrf.mxu0
      %v1585 = vadd.f32 0.0, %v1584
      %v1586 = vpop.f32.mrf.mxu0
      %v1587 = vpop.f32.mrf.mxu0
      %v1588 = vadd.f32 0.0, %v1587
      %v1589 = vpop.f32.mrf.mxu0
      %1590 = vmatprep.mubr.bf16.mxu0 0
      %1591 = vmatmul.mubr.bf16.gmra.mxu0 %v1438
      %v1592 = vpop.f32.mrf.mxu0
      %v1593 = vadd.f32 0.0, %v1592
      %v1594 = vpop.f32.mrf.mxu0
      %v1595 = vpop.f32.mrf.mxu0
      %v1596 = vadd.f32 0.0, %v1595
      %v1597 = vpop.f32.mrf.mxu0
      %1598 = vmatprep.mubr.bf16.mxu0 0
      %1599 = vmatmul.mubr.bf16.gmra.mxu0 %v1441
      %v1600 = vpop.f32.mrf.mxu0
      %v1601 = vadd.f32 0.0, %v1600
      %v1602 = vpop.f32.mrf.mxu0
      %v1603 = vpop.f32.mrf.mxu0
      %v1604 = vadd.f32 0.0, %v1603
      %v1605 = vpop.f32.mrf.mxu0
      %1606 = vdwg.mxu0
      %v1607 = vadd.f32 %v1088, %v1481
      %v1608 = vadd.f32 %v1091, %v1484
      %v1609 = vadd.f32 %v1096, %v1489
      %v1610 = vadd.f32 %v1099, %v1492
      %v1611 = vadd.f32 %v1104, %v1497
      %v1612 = vadd.f32 %v1107, %v1500
      %v1613 = vadd.f32 %v1112, %v1505
      %v1614 = vadd.f32 %v1115, %v1508
      %v1615 = vadd.f32 %v1120, %v1513
      %v1616 = vadd.f32 %v1123, %v1516
      %v1617 = vadd.f32 %v1128, %v1521
      %v1618 = vadd.f32 %v1131, %v1524
      %v1619 = vadd.f32 %v1136, %v1529
      %v1620 = vadd.f32 %v1139, %v1532
      %v1621 = vadd.f32 %v1144, %v1537
      %v1622 = vadd.f32 %v1147, %v1540
      %v1623 = vadd.f32 %v1152, %v1545
      %v1624 = vadd.f32 %v1155, %v1548
      %v1625 = vadd.f32 %v1160, %v1553
      %v1626 = vadd.f32 %v1163, %v1556
      %v1627 = vadd.f32 %v1168, %v1561
      %v1628 = vadd.f32 %v1171, %v1564
      %v1629 = vadd.f32 %v1176, %v1569
      %v1630 = vadd.f32 %v1179, %v1572
      %v1631 = vadd.f32 %v1184, %v1577
      %v1632 = vadd.f32 %v1187, %v1580
      %v1633 = vadd.f32 %v1192, %v1585
      %v1634 = vadd.f32 %v1195, %v1588
      %v1635 = vadd.f32 %v1200, %v1593
      %v1636 = vadd.f32 %v1203, %v1596
      %v1637 = vadd.f32 %v1208, %v1601
      %v1638 = vadd.f32 %v1211, %v1604
      %s1639 = scalar_lea.vmem %s1, 6
      %v1640 = vld [vmem:[%s1639] sm:$0x3]
      %v1643 = vunpack.c.l.b16 %v264
      %v1644 = vunpack.c.l.b16 %v265
      %v1645 = vpack.c.b16 %v1644, %v1643
      %v1647 = vsel %vm708, %v1645, 0
      %v1650 = vsel %vm757, %v1640, 0
      %1652 = vmatprep.subr.bf16.mxu0 0
      %1653 = vmatpush1.bf16.msra.mxu0 0
      %1654 = vmatprep.subr.bf16.mxu0 0
      %1655 = vmatpush1.bf16.msra.mxu0 0
      %1656 = vmatprep.subr.bf16.mxu0 0
      %1657 = vmatpush1.bf16.msra.mxu0 0
      %1658 = vmatprep.subr.bf16.mxu0 0
      %1659 = vmatpush1.bf16.msra.mxu0 0
      %1660 = vmatprep.subr.bf16.mxu0 0
      %1661 = vmatpush1.bf16.msra.mxu0 0
      %1662 = vmatprep.subr.bf16.mxu0 0
      %1663 = vmatpush1.bf16.msra.mxu0 0
      %1664 = vmatprep.subr.bf16.mxu0 0
      %1665 = vmatpush1.bf16.msra.mxu0 0
      %1666 = vmatprep.subr.bf16.mxu0 0
      %1667 = vmatpush1.bf16.msra.mxu0 %v1650
      %1668 = vmatprep.subr.bf16.mxu0 0
      %1669 = vmatpush2.bf16.msra.mxu0 0
      %1670 = vmatprep.subr.bf16.mxu0 0
      %1671 = vmatpush2.bf16.msra.mxu0 0
      %1672 = vmatprep.subr.bf16.mxu0 0
      %1673 = vmatpush2.bf16.msra.mxu0 0
      %1674 = vmatprep.subr.bf16.mxu0 0
      %1675 = vmatpush2.bf16.msra.mxu0 0
      %1676 = vmatprep.subr.bf16.mxu0 0
      %1677 = vmatpush2.bf16.msra.mxu0 0
      %1678 = vmatprep.subr.bf16.mxu0 0
      %1679 = vmatpush2.bf16.msra.mxu0 0
      %1680 = vmatprep.subr.bf16.mxu0 0
      %1681 = vmatpush2.bf16.msra.mxu0 0
      %1682 = vmatprep.subr.bf16.mxu0 0
      %1683 = vmatpush2.bf16.msra.mxu0 0
      %1684 = vmatprep.mubr.bf16.mxu0 0
      %1685 = vmatmul.mubr.bf16.gmra.mxu0 %v1006
      %v1686 = vpop.f32.mrf.mxu0
      %v1687 = vadd.f32 0.0, %v1686
      %v1688 = vpop.f32.mrf.mxu0
      %v1689 = vpop.f32.mrf.mxu0
      %v1690 = vadd.f32 0.0, %v1689
      %v1691 = vpop.f32.mrf.mxu0
      %1692 = vmatprep.mubr.bf16.mxu0 0
      %1693 = vmatmul.mubr.bf16.gmra.mxu0 %v1009
      %v1694 = vpop.f32.mrf.mxu0
      %v1695 = vadd.f32 0.0, %v1694
      %v1696 = vpop.f32.mrf.mxu0
      %v1697 = vpop.f32.mrf.mxu0
      %v1698 = vadd.f32 0.0, %v1697
      %v1699 = vpop.f32.mrf.mxu0
      %1700 = vmatprep.mubr.bf16.mxu0 0
      %1701 = vmatmul.mubr.bf16.gmra.mxu0 %v1012
      %v1702 = vpop.f32.mrf.mxu0
      %v1703 = vadd.f32 0.0, %v1702
      %v1704 = vpop.f32.mrf.mxu0
      %v1705 = vpop.f32.mrf.mxu0
      %v1706 = vadd.f32 0.0, %v1705
      %v1707 = vpop.f32.mrf.mxu0
      %1708 = vmatprep.mubr.bf16.mxu0 0
      %1709 = vmatmul.mubr.bf16.gmra.mxu0 %v1015
      %v1710 = vpop.f32.mrf.mxu0
      %v1711 = vadd.f32 0.0, %v1710
      %v1712 = vpop.f32.mrf.mxu0
      %v1713 = vpop.f32.mrf.mxu0
      %v1714 = vadd.f32 0.0, %v1713
      %v1715 = vpop.f32.mrf.mxu0
      %1716 = vmatprep.mubr.bf16.mxu0 0
      %1717 = vmatmul.mubr.bf16.gmra.mxu0 %v1018
      %v1718 = vpop.f32.mrf.mxu0
      %v1719 = vadd.f32 0.0, %v1718
      %v1720 = vpop.f32.mrf.mxu0
      %v1721 = vpop.f32.mrf.mxu0
      %v1722 = vadd.f32 0.0, %v1721
      %v1723 = vpop.f32.mrf.mxu0
      %1724 = vmatprep.mubr.bf16.mxu0 0
      %1725 = vmatmul.mubr.bf16.gmra.mxu0 %v1021
      %v1726 = vpop.f32.mrf.mxu0
      %v1727 = vadd.f32 0.0, %v1726
      %v1728 = vpop.f32.mrf.mxu0
      %v1729 = vpop.f32.mrf.mxu0
      %v1730 = vadd.f32 0.0, %v1729
      %v1731 = vpop.f32.mrf.mxu0
      %1732 = vmatprep.mubr.bf16.mxu0 0
      %1733 = vmatmul.mubr.bf16.gmra.mxu0 %v1024
      %v1734 = vpop.f32.mrf.mxu0
      %v1735 = vadd.f32 0.0, %v1734
      %v1736 = vpop.f32.mrf.mxu0
      %v1737 = vpop.f32.mrf.mxu0
      %v1738 = vadd.f32 0.0, %v1737
      %v1739 = vpop.f32.mrf.mxu0
      %1740 = vmatprep.mubr.bf16.mxu0 0
      %1741 = vmatmul.mubr.bf16.gmra.mxu0 %v1027
      %v1742 = vpop.f32.mrf.mxu0
      %v1743 = vadd.f32 0.0, %v1742
      %v1744 = vpop.f32.mrf.mxu0
      %v1745 = vpop.f32.mrf.mxu0
      %v1746 = vadd.f32 0.0, %v1745
      %v1747 = vpop.f32.mrf.mxu0
      %1748 = vmatprep.mubr.bf16.mxu0 0
      %1749 = vmatmul.mubr.bf16.gmra.mxu0 %v1030
      %v1750 = vpop.f32.mrf.mxu0
      %v1751 = vadd.f32 0.0, %v1750
      %v1752 = vpop.f32.mrf.mxu0
      %v1753 = vpop.f32.mrf.mxu0
      %v1754 = vadd.f32 0.0, %v1753
      %v1755 = vpop.f32.mrf.mxu0
      %1756 = vmatprep.mubr.bf16.mxu0 0
      %1757 = vmatmul.mubr.bf16.gmra.mxu0 %v1033
      %v1758 = vpop.f32.mrf.mxu0
      %v1759 = vadd.f32 0.0, %v1758
      %v1760 = vpop.f32.mrf.mxu0
      %v1761 = vpop.f32.mrf.mxu0
      %v1762 = vadd.f32 0.0, %v1761
      %v1763 = vpop.f32.mrf.mxu0
      %1764 = vmatprep.mubr.bf16.mxu0 0
      %1765 = vmatmul.mubr.bf16.gmra.mxu0 %v1036
      %v1766 = vpop.f32.mrf.mxu0
      %v1767 = vadd.f32 0.0, %v1766
      %v1768 = vpop.f32.mrf.mxu0
      %v1769 = vpop.f32.mrf.mxu0
      %v1770 = vadd.f32 0.0, %v1769
      %v1771 = vpop.f32.mrf.mxu0
      %1772 = vmatprep.mubr.bf16.mxu0 0
      %1773 = vmatmul.mubr.bf16.gmra.mxu0 %v1039
      %v1774 = vpop.f32.mrf.mxu0
      %v1775 = vadd.f32 0.0, %v1774
      %v1776 = vpop.f32.mrf.mxu0
      %v1777 = vpop.f32.mrf.mxu0
      %v1778 = vadd.f32 0.0, %v1777
      %v1779 = vpop.f32.mrf.mxu0
      %1780 = vmatprep.mubr.bf16.mxu0 0
      %1781 = vmatmul.mubr.bf16.gmra.mxu0 %v1042
      %v1782 = vpop.f32.mrf.mxu0
      %v1783 = vadd.f32 0.0, %v1782
      %v1784 = vpop.f32.mrf.mxu0
      %v1785 = vpop.f32.mrf.mxu0
      %v1786 = vadd.f32 0.0, %v1785
      %v1787 = vpop.f32.mrf.mxu0
      %1788 = vmatprep.mubr.bf16.mxu0 0
      %1789 = vmatmul.mubr.bf16.gmra.mxu0 %v1045
      %v1790 = vpop.f32.mrf.mxu0
      %v1791 = vadd.f32 0.0, %v1790
      %v1792 = vpop.f32.mrf.mxu0
      %v1793 = vpop.f32.mrf.mxu0
      %v1794 = vadd.f32 0.0, %v1793
      %v1795 = vpop.f32.mrf.mxu0
      %1796 = vmatprep.mubr.bf16.mxu0 0
      %1797 = vmatmul.mubr.bf16.gmra.mxu0 %v1048
      %v1798 = vpop.f32.mrf.mxu0
      %v1799 = vadd.f32 0.0, %v1798
      %v1800 = vpop.f32.mrf.mxu0
      %v1801 = vpop.f32.mrf.mxu0
      %v1802 = vadd.f32 0.0, %v1801
      %v1803 = vpop.f32.mrf.mxu0
      %1804 = vmatprep.mubr.bf16.mxu0 0
      %1805 = vmatmul.mubr.bf16.gmra.mxu0 %v1647
      %v1806 = vpop.f32.mrf.mxu0
      %v1807 = vadd.f32 0.0, %v1806
      %v1808 = vpop.f32.mrf.mxu0
      %v1809 = vpop.f32.mrf.mxu0
      %v1810 = vadd.f32 0.0, %v1809
      %v1811 = vpop.f32.mrf.mxu0
      %1812 = vdwg.mxu0
      %v1813 = vadd.f32 %v1607, %v1687
      %v1814 = vadd.f32 %v1608, %v1690
      %v1815 = vadd.f32 %v1609, %v1695
      %v1816 = vadd.f32 %v1610, %v1698
      %v1817 = vadd.f32 %v1611, %v1703
      %v1818 = vadd.f32 %v1612, %v1706
      %v1819 = vadd.f32 %v1613, %v1711
      %v1820 = vadd.f32 %v1614, %v1714
      %v1821 = vadd.f32 %v1615, %v1719
      %v1822 = vadd.f32 %v1616, %v1722
      %v1823 = vadd.f32 %v1617, %v1727
      %v1824 = vadd.f32 %v1618, %v1730
      %v1825 = vadd.f32 %v1619, %v1735
      %v1826 = vadd.f32 %v1620, %v1738
      %v1827 = vadd.f32 %v1621, %v1743
      %v1828 = vadd.f32 %v1622, %v1746
      %v1829 = vadd.f32 %v1623, %v1751
      %v1830 = vadd.f32 %v1624, %v1754
      %v1831 = vadd.f32 %v1625, %v1759
      %v1832 = vadd.f32 %v1626, %v1762
      %v1833 = vadd.f32 %v1627, %v1767
      %v1834 = vadd.f32 %v1628, %v1770
      %v1835 = vadd.f32 %v1629, %v1775
      %v1836 = vadd.f32 %v1630, %v1778
      %v1837 = vadd.f32 %v1631, %v1783
      %v1838 = vadd.f32 %v1632, %v1786
      %v1839 = vadd.f32 %v1633, %v1791
      %v1840 = vadd.f32 %v1634, %v1794
      %v1841 = vadd.f32 %v1635, %v1799
      %v1842 = vadd.f32 %v1636, %v1802
      %v1843 = vadd.f32 %v1637, %v1807
      %v1844 = vadd.f32 %v1638, %v1810
      %v1846 = vshrl.u32 %v264, 16
      %v1848 = vrot.slane %v1846, 4
      %v1849 = vshll.u32 %v264, 16
      %v1851 = vrot.slane %v1849, 5
      %v1852 = vor.u32 %v1848, %v1851
      %v1853 = vrot.slane %v1852, 4
      %v1855 = vshll.u32 %v265, 16
      %v1857 = vrot.slane %v1855, 5
      %v1858 = vsel %vm273, %v1853, %v1857
      %v1859 = vshrl.u32 %v265, 16
      %v1861 = vrot.slane %v1859, 4
      %v1862 = vor.u32 %v1861, %v1857
      %v1863 = vrot.slane %v1862, 4
      %v1865 = vshll.u32 %v266, 16
      %v1867 = vrot.slane %v1865, 5
      %v1868 = vsel %vm273, %v1863, %v1867
      %s1869 = scalar_lea.vmem %s1, 8
      %v1870 = vld [vmem:[%s1869] sm:$0x3]
      %v1871 = vunpack.c.l.b16 %v1858
      %v1872 = vunpack.c.l.b16 %v1868
      %v1873 = vpack.c.b16 %v1872, %v1871
      %v1875 = vsel %vm708, %v1873, 0
      %v1878 = vsel %vm757, %v1870, 0
      %1880 = vmatprep.subr.bf16.mxu0 0
      %1881 = vmatpush1.bf16.msra.mxu0 0
      %1882 = vmatprep.subr.bf16.mxu0 0
      %1883 = vmatpush1.bf16.msra.mxu0 0
      %1884 = vmatprep.subr.bf16.mxu0 0
      %1885 = vmatpush1.bf16.msra.mxu0 0
      %1886 = vmatprep.subr.bf16.mxu0 0
      %1887 = vmatpush1.bf16.msra.mxu0 0
      %1888 = vmatprep.subr.bf16.mxu0 0
      %1889 = vmatpush1.bf16.msra.mxu0 0
      %1890 = vmatprep.subr.bf16.mxu0 0
      %1891 = vmatpush1.bf16.msra.mxu0 0
      %1892 = vmatprep.subr.bf16.mxu0 0
      %1893 = vmatpush1.bf16.msra.mxu0 0
      %1894 = vmatprep.subr.bf16.mxu0 0
      %1895 = vmatpush1.bf16.msra.mxu0 %v1878
      %1896 = vmatprep.subr.bf16.mxu0 0
      %1897 = vmatpush2.bf16.msra.mxu0 0
      %1898 = vmatprep.subr.bf16.mxu0 0
      %1899 = vmatpush2.bf16.msra.mxu0 0
      %1900 = vmatprep.subr.bf16.mxu0 0
      %1901 = vmatpush2.bf16.msra.mxu0 0
      %1902 = vmatprep.subr.bf16.mxu0 0
      %1903 = vmatpush2.bf16.msra.mxu0 0
      %1904 = vmatprep.subr.bf16.mxu0 0
      %1905 = vmatpush2.bf16.msra.mxu0 0
      %1906 = vmatprep.subr.bf16.mxu0 0
      %1907 = vmatpush2.bf16.msra.mxu0 0
      %1908 = vmatprep.subr.bf16.mxu0 0
      %1909 = vmatpush2.bf16.msra.mxu0 0
      %1910 = vmatprep.subr.bf16.mxu0 0
      %1911 = vmatpush2.bf16.msra.mxu0 0
      %1912 = vmatprep.mubr.bf16.mxu0 0
      %1913 = vmatmul.mubr.bf16.gmra.mxu0 %v713
      %v1914 = vpop.f32.mrf.mxu0
      %v1915 = vadd.f32 0.0, %v1914
      %v1916 = vpop.f32.mrf.mxu0
      %v1917 = vpop.f32.mrf.mxu0
      %v1918 = vadd.f32 0.0, %v1917
      %v1919 = vpop.f32.mrf.mxu0
      %1920 = vmatprep.mubr.bf16.mxu0 0
      %1921 = vmatmul.mubr.bf16.gmra.mxu0 %v716
      %v1922 = vpop.f32.mrf.mxu0
      %v1923 = vadd.f32 0.0, %v1922
      %v1924 = vpop.f32.mrf.mxu0
      %v1925 = vpop.f32.mrf.mxu0
      %v1926 = vadd.f32 0.0, %v1925
      %v1927 = vpop.f32.mrf.mxu0
      %1928 = vmatprep.mubr.bf16.mxu0 0
      %1929 = vmatmul.mubr.bf16.gmra.mxu0 %v719
      %v1930 = vpop.f32.mrf.mxu0
      %v1931 = vadd.f32 0.0, %v1930
      %v1932 = vpop.f32.mrf.mxu0
      %v1933 = vpop.f32.mrf.mxu0
      %v1934 = vadd.f32 0.0, %v1933
      %v1935 = vpop.f32.mrf.mxu0
      %1936 = vmatprep.mubr.bf16.mxu0 0
      %1937 = vmatmul.mubr.bf16.gmra.mxu0 %v722
      %v1938 = vpop.f32.mrf.mxu0
      %v1939 = vadd.f32 0.0, %v1938
      %v1940 = vpop.f32.mrf.mxu0
      %v1941 = vpop.f32.mrf.mxu0
      %v1942 = vadd.f32 0.0, %v1941
      %v1943 = vpop.f32.mrf.mxu0
      %1944 = vmatprep.mubr.bf16.mxu0 0
      %1945 = vmatmul.mubr.bf16.gmra.mxu0 %v725
      %v1946 = vpop.f32.mrf.mxu0
      %v1947 = vadd.f32 0.0, %v1946
      %v1948 = vpop.f32.mrf.mxu0
      %v1949 = vpop.f32.mrf.mxu0
      %v1950 = vadd.f32 0.0, %v1949
      %v1951 = vpop.f32.mrf.mxu0
      %1952 = vmatprep.mubr.bf16.mxu0 0
      %1953 = vmatmul.mubr.bf16.gmra.mxu0 %v728
      %v1954 = vpop.f32.mrf.mxu0
      %v1955 = vadd.f32 0.0, %v1954
      %v1956 = vpop.f32.mrf.mxu0
      %v1957 = vpop.f32.mrf.mxu0
      %v1958 = vadd.f32 0.0, %v1957
      %v1959 = vpop.f32.mrf.mxu0
      %1960 = vmatprep.mubr.bf16.mxu0 0
      %1961 = vmatmul.mubr.bf16.gmra.mxu0 %v731
      %v1962 = vpop.f32.mrf.mxu0
      %v1963 = vadd.f32 0.0, %v1962
      %v1964 = vpop.f32.mrf.mxu0
      %v1965 = vpop.f32.mrf.mxu0
      %v1966 = vadd.f32 0.0, %v1965
      %v1967 = vpop.f32.mrf.mxu0
      %1968 = vmatprep.mubr.bf16.mxu0 0
      %1969 = vmatmul.mubr.bf16.gmra.mxu0 %v734
      %v1970 = vpop.f32.mrf.mxu0
      %v1971 = vadd.f32 0.0, %v1970
      %v1972 = vpop.f32.mrf.mxu0
      %v1973 = vpop.f32.mrf.mxu0
      %v1974 = vadd.f32 0.0, %v1973
      %v1975 = vpop.f32.mrf.mxu0
      %1976 = vmatprep.mubr.bf16.mxu0 0
      %1977 = vmatmul.mubr.bf16.gmra.mxu0 %v737
      %v1978 = vpop.f32.mrf.mxu0
      %v1979 = vadd.f32 0.0, %v1978
      %v1980 = vpop.f32.mrf.mxu0
      %v1981 = vpop.f32.mrf.mxu0
      %v1982 = vadd.f32 0.0, %v1981
      %v1983 = vpop.f32.mrf.mxu0
      %1984 = vmatprep.mubr.bf16.mxu0 0
      %1985 = vmatmul.mubr.bf16.gmra.mxu0 %v740
      %v1986 = vpop.f32.mrf.mxu0
      %v1987 = vadd.f32 0.0, %v1986
      %v1988 = vpop.f32.mrf.mxu0
      %v1989 = vpop.f32.mrf.mxu0
      %v1990 = vadd.f32 0.0, %v1989
      %v1991 = vpop.f32.mrf.mxu0
      %1992 = vmatprep.mubr.bf16.mxu0 0
      %1993 = vmatmul.mubr.bf16.gmra.mxu0 %v743
      %v1994 = vpop.f32.mrf.mxu0
      %v1995 = vadd.f32 0.0, %v1994
      %v1996 = vpop.f32.mrf.mxu0
      %v1997 = vpop.f32.mrf.mxu0
      %v1998 = vadd.f32 0.0, %v1997
      %v1999 = vpop.f32.mrf.mxu0
      %2000 = vmatprep.mubr.bf16.mxu0 0
      %2001 = vmatmul.mubr.bf16.gmra.mxu0 %v746
      %v2002 = vpop.f32.mrf.mxu0
      %v2003 = vadd.f32 0.0, %v2002
      %v2004 = vpop.f32.mrf.mxu0
      %v2005 = vpop.f32.mrf.mxu0
      %v2006 = vadd.f32 0.0, %v2005
      %v2007 = vpop.f32.mrf.mxu0
      %2008 = vmatprep.mubr.bf16.mxu0 0
      %2009 = vmatmul.mubr.bf16.gmra.mxu0 %v749
      %v2010 = vpop.f32.mrf.mxu0
      %v2011 = vadd.f32 0.0, %v2010
      %v2012 = vpop.f32.mrf.mxu0
      %v2013 = vpop.f32.mrf.mxu0
      %v2014 = vadd.f32 0.0, %v2013
      %v2015 = vpop.f32.mrf.mxu0
      %2016 = vmatprep.mubr.bf16.mxu0 0
      %2017 = vmatmul.mubr.bf16.gmra.mxu0 %v752
      %v2018 = vpop.f32.mrf.mxu0
      %v2019 = vadd.f32 0.0, %v2018
      %v2020 = vpop.f32.mrf.mxu0
      %v2021 = vpop.f32.mrf.mxu0
      %v2022 = vadd.f32 0.0, %v2021
      %v2023 = vpop.f32.mrf.mxu0
      %2024 = vmatprep.mubr.bf16.mxu0 0
      %2025 = vmatmul.mubr.bf16.gmra.mxu0 %v755
      %v2026 = vpop.f32.mrf.mxu0
      %v2027 = vadd.f32 0.0, %v2026
      %v2028 = vpop.f32.mrf.mxu0
      %v2029 = vpop.f32.mrf.mxu0
      %v2030 = vadd.f32 0.0, %v2029
      %v2031 = vpop.f32.mrf.mxu0
      %2032 = vmatprep.mubr.bf16.mxu0 0
      %2033 = vmatmul.mubr.bf16.gmra.mxu0 %v1875
      %v2034 = vpop.f32.mrf.mxu0
      %v2035 = vadd.f32 0.0, %v2034
      %v2036 = vpop.f32.mrf.mxu0
      %v2037 = vpop.f32.mrf.mxu0
      %v2038 = vadd.f32 0.0, %v2037
      %v2039 = vpop.f32.mrf.mxu0
      %2040 = vdwg.mxu0
      %v2041 = vadd.f32 %v1813, %v1915
      %v2042 = vadd.f32 %v1814, %v1918
      %v2043 = vadd.f32 %v1815, %v1923
      %v2044 = vadd.f32 %v1816, %v1926
      %v2045 = vadd.f32 %v1817, %v1931
      %v2046 = vadd.f32 %v1818, %v1934
      %v2047 = vadd.f32 %v1819, %v1939
      %v2048 = vadd.f32 %v1820, %v1942
      %v2049 = vadd.f32 %v1821, %v1947
      %v2050 = vadd.f32 %v1822, %v1950
      %v2051 = vadd.f32 %v1823, %v1955
      %v2052 = vadd.f32 %v1824, %v1958
      %v2053 = vadd.f32 %v1825, %v1963
      %v2054 = vadd.f32 %v1826, %v1966
      %v2055 = vadd.f32 %v1827, %v1971
      %v2056 = vadd.f32 %v1828, %v1974
      %v2057 = vadd.f32 %v1829, %v1979
      %v2058 = vadd.f32 %v1830, %v1982
      %v2059 = vadd.f32 %v1831, %v1987
      %v2060 = vadd.f32 %v1832, %v1990
      %v2061 = vadd.f32 %v1833, %v1995
      %v2062 = vadd.f32 %v1834, %v1998
      %v2063 = vadd.f32 %v1835, %v2003
      %v2064 = vadd.f32 %v1836, %v2006
      %v2065 = vadd.f32 %v1837, %v2011
      %v2066 = vadd.f32 %v1838, %v2014
      %v2067 = vadd.f32 %v1839, %v2019
      %v2068 = vadd.f32 %v1840, %v2022
      %v2069 = vadd.f32 %v1841, %v2027
      %v2070 = vadd.f32 %v1842, %v2030
      %v2071 = vadd.f32 %v1843, %v2035
      %v2072 = vadd.f32 %v1844, %v2038
      %v2074 = vrot.slane %v264, 5
      %v2075 = vrot.slane %v2074, 4
      %v2076 = vrot.slane %v265, 5
      %v2077 = vsel %vm1232, %v2075, %v2076
      %v2078 = vrot.slane %v2076, 4
      %v2079 = vrot.slane %v266, 5
      %v2080 = vsel %vm1232, %v2078, %v2079
      %s2081 = scalar_lea.vmem %s1, 10
      %v2082 = vld [vmem:[%s2081] sm:$0x3]
      %v2083 = vunpack.c.l.b16 %v2077
      %v2084 = vunpack.c.l.b16 %v2080
      %v2085 = vpack.c.b16 %v2084, %v2083
      %v2087 = vsel %vm708, %v2085, 0
      %v2090 = vsel %vm757, %v2082, 0
      %2092 = vmatprep.subr.bf16.mxu0 0
      %2093 = vmatpush1.bf16.msra.mxu0 0
      %2094 = vmatprep.subr.bf16.mxu0 0
      %2095 = vmatpush1.bf16.msra.mxu0 0
      %2096 = vmatprep.subr.bf16.mxu0 0
      %2097 = vmatpush1.bf16.msra.mxu0 0
      %2098 = vmatprep.subr.bf16.mxu0 0
      %2099 = vmatpush1.bf16.msra.mxu0 0
      %2100 = vmatprep.subr.bf16.mxu0 0
      %2101 = vmatpush1.bf16.msra.mxu0 0
      %2102 = vmatprep.subr.bf16.mxu0 0
      %2103 = vmatpush1.bf16.msra.mxu0 0
      %2104 = vmatprep.subr.bf16.mxu0 0
      %2105 = vmatpush1.bf16.msra.mxu0 0
      %2106 = vmatprep.subr.bf16.mxu0 0
      %2107 = vmatpush1.bf16.msra.mxu0 %v2090
      %2108 = vmatprep.subr.bf16.mxu0 0
      %2109 = vmatpush2.bf16.msra.mxu0 0
      %2110 = vmatprep.subr.bf16.mxu0 0
      %2111 = vmatpush2.bf16.msra.mxu0 0
      %2112 = vmatprep.subr.bf16.mxu0 0
      %2113 = vmatpush2.bf16.msra.mxu0 0
      %2114 = vmatprep.subr.bf16.mxu0 0
      %2115 = vmatpush2.bf16.msra.mxu0 0
      %2116 = vmatprep.subr.bf16.mxu0 0
      %2117 = vmatpush2.bf16.msra.mxu0 0
      %2118 = vmatprep.subr.bf16.mxu0 0
      %2119 = vmatpush2.bf16.msra.mxu0 0
      %2120 = vmatprep.subr.bf16.mxu0 0
      %2121 = vmatpush2.bf16.msra.mxu0 0
      %2122 = vmatprep.subr.bf16.mxu0 0
      %2123 = vmatpush2.bf16.msra.mxu0 0
      %2124 = vmatprep.mubr.bf16.mxu0 0
      %2125 = vmatmul.mubr.bf16.gmra.mxu0 %v1399
      %v2126 = vpop.f32.mrf.mxu0
      %v2127 = vadd.f32 0.0, %v2126
      %v2128 = vpop.f32.mrf.mxu0
      %v2129 = vpop.f32.mrf.mxu0
      %v2130 = vadd.f32 0.0, %v2129
      %v2131 = vpop.f32.mrf.mxu0
      %2132 = vmatprep.mubr.bf16.mxu0 0
      %2133 = vmatmul.mubr.bf16.gmra.mxu0 %v1402
      %v2134 = vpop.f32.mrf.mxu0
      %v2135 = vadd.f32 0.0, %v2134
      %v2136 = vpop.f32.mrf.mxu0
      %v2137 = vpop.f32.mrf.mxu0
      %v2138 = vadd.f32 0.0, %v2137
      %v2139 = vpop.f32.mrf.mxu0
      %2140 = vmatprep.mubr.bf16.mxu0 0
      %2141 = vmatmul.mubr.bf16.gmra.mxu0 %v1405
      %v2142 = vpop.f32.mrf.mxu0
      %v2143 = vadd.f32 0.0, %v2142
      %v2144 = vpop.f32.mrf.mxu0
      %v2145 = vpop.f32.mrf.mxu0
      %v2146 = vadd.f32 0.0, %v2145
      %v2147 = vpop.f32.mrf.mxu0
      %2148 = vmatprep.mubr.bf16.mxu0 0
      %2149 = vmatmul.mubr.bf16.gmra.mxu0 %v1408
      %v2150 = vpop.f32.mrf.mxu0
      %v2151 = vadd.f32 0.0, %v2150
      %v2152 = vpop.f32.mrf.mxu0
      %v2153 = vpop.f32.mrf.mxu0
      %v2154 = vadd.f32 0.0, %v2153
      %v2155 = vpop.f32.mrf.mxu0
      %2156 = vmatprep.mubr.bf16.mxu0 0
      %2157 = vmatmul.mubr.bf16.gmra.mxu0 %v1411
      %v2158 = vpop.f32.mrf.mxu0
      %v2159 = vadd.f32 0.0, %v2158
      %v2160 = vpop.f32.mrf.mxu0
      %v2161 = vpop.f32.mrf.mxu0
      %v2162 = vadd.f32 0.0, %v2161
      %v2163 = vpop.f32.mrf.mxu0
      %2164 = vmatprep.mubr.bf16.mxu0 0
      %2165 = vmatmul.mubr.bf16.gmra.mxu0 %v1414
      %v2166 = vpop.f32.mrf.mxu0
      %v2167 = vadd.f32 0.0, %v2166
      %v2168 = vpop.f32.mrf.mxu0
      %v2169 = vpop.f32.mrf.mxu0
      %v2170 = vadd.f32 0.0, %v2169
      %v2171 = vpop.f32.mrf.mxu0
      %2172 = vmatprep.mubr.bf16.mxu0 0
      %2173 = vmatmul.mubr.bf16.gmra.mxu0 %v1417
      %v2174 = vpop.f32.mrf.mxu0
      %v2175 = vadd.f32 0.0, %v2174
      %v2176 = vpop.f32.mrf.mxu0
      %v2177 = vpop.f32.mrf.mxu0
      %v2178 = vadd.f32 0.0, %v2177
      %v2179 = vpop.f32.mrf.mxu0
      %2180 = vmatprep.mubr.bf16.mxu0 0
      %2181 = vmatmul.mubr.bf16.gmra.mxu0 %v1420
      %v2182 = vpop.f32.mrf.mxu0
      %v2183 = vadd.f32 0.0, %v2182
      %v2184 = vpop.f32.mrf.mxu0
      %v2185 = vpop.f32.mrf.mxu0
      %v2186 = vadd.f32 0.0, %v2185
      %v2187 = vpop.f32.mrf.mxu0
      %2188 = vmatprep.mubr.bf16.mxu0 0
      %2189 = vmatmul.mubr.bf16.gmra.mxu0 %v1423
      %v2190 = vpop.f32.mrf.mxu0
      %v2191 = vadd.f32 0.0, %v2190
      %v2192 = vpop.f32.mrf.mxu0
      %v2193 = vpop.f32.mrf.mxu0
      %v2194 = vadd.f32 0.0, %v2193
      %v2195 = vpop.f32.mrf.mxu0
      %2196 = vmatprep.mubr.bf16.mxu0 0
      %2197 = vmatmul.mubr.bf16.gmra.mxu0 %v1426
      %v2198 = vpop.f32.mrf.mxu0
      %v2199 = vadd.f32 0.0, %v2198
      %v2200 = vpop.f32.mrf.mxu0
      %v2201 = vpop.f32.mrf.mxu0
      %v2202 = vadd.f32 0.0, %v2201
      %v2203 = vpop.f32.mrf.mxu0
      %2204 = vmatprep.mubr.bf16.mxu0 0
      %2205 = vmatmul.mubr.bf16.gmra.mxu0 %v1429
      %v2206 = vpop.f32.mrf.mxu0
      %v2207 = vadd.f32 0.0, %v2206
      %v2208 = vpop.f32.mrf.mxu0
      %v2209 = vpop.f32.mrf.mxu0
      %v2210 = vadd.f32 0.0, %v2209
      %v2211 = vpop.f32.mrf.mxu0
      %2212 = vmatprep.mubr.bf16.mxu0 0
      %2213 = vmatmul.mubr.bf16.gmra.mxu0 %v1432
      %v2214 = vpop.f32.mrf.mxu0
      %v2215 = vadd.f32 0.0, %v2214
      %v2216 = vpop.f32.mrf.mxu0
      %v2217 = vpop.f32.mrf.mxu0
      %v2218 = vadd.f32 0.0, %v2217
      %v2219 = vpop.f32.mrf.mxu0
      %2220 = vmatprep.mubr.bf16.mxu0 0
      %2221 = vmatmul.mubr.bf16.gmra.mxu0 %v1435
      %v2222 = vpop.f32.mrf.mxu0
      %v2223 = vadd.f32 0.0, %v2222
      %v2224 = vpop.f32.mrf.mxu0
      %v2225 = vpop.f32.mrf.mxu0
      %v2226 = vadd.f32 0.0, %v2225
      %v2227 = vpop.f32.mrf.mxu0
      %2228 = vmatprep.mubr.bf16.mxu0 0
      %2229 = vmatmul.mubr.bf16.gmra.mxu0 %v1438
      %v2230 = vpop.f32.mrf.mxu0
      %v2231 = vadd.f32 0.0, %v2230
      %v2232 = vpop.f32.mrf.mxu0
      %v2233 = vpop.f32.mrf.mxu0
      %v2234 = vadd.f32 0.0, %v2233
      %v2235 = vpop.f32.mrf.mxu0
      %2236 = vmatprep.mubr.bf16.mxu0 0
      %2237 = vmatmul.mubr.bf16.gmra.mxu0 %v1441
      %v2238 = vpop.f32.mrf.mxu0
      %v2239 = vadd.f32 0.0, %v2238
      %v2240 = vpop.f32.mrf.mxu0
      %v2241 = vpop.f32.mrf.mxu0
      %v2242 = vadd.f32 0.0, %v2241
      %v2243 = vpop.f32.mrf.mxu0
      %2244 = vmatprep.mubr.bf16.mxu0 0
      %2245 = vmatmul.mubr.bf16.gmra.mxu0 %v2087
      %v2246 = vpop.f32.mrf.mxu0
      %v2247 = vadd.f32 0.0, %v2246
      %v2248 = vpop.f32.mrf.mxu0
      %v2249 = vpop.f32.mrf.mxu0
      %v2250 = vadd.f32 0.0, %v2249
      %v2251 = vpop.f32.mrf.mxu0
      %2252 = vdwg.mxu0
      %v2253 = vadd.f32 %v2041, %v2127
      %v2254 = vadd.f32 %v2042, %v2130
      %v2255 = vadd.f32 %v2043, %v2135
      %v2256 = vadd.f32 %v2044, %v2138
      %v2257 = vadd.f32 %v2045, %v2143
      %v2258 = vadd.f32 %v2046, %v2146
      %v2259 = vadd.f32 %v2047, %v2151
      %v2260 = vadd.f32 %v2048, %v2154
      %v2261 = vadd.f32 %v2049, %v2159
      %v2262 = vadd.f32 %v2050, %v2162
      %v2263 = vadd.f32 %v2051, %v2167
      %v2264 = vadd.f32 %v2052, %v2170
      %v2265 = vadd.f32 %v2053, %v2175
      %v2266 = vadd.f32 %v2054, %v2178
      %v2267 = vadd.f32 %v2055, %v2183
      %v2268 = vadd.f32 %v2056, %v2186
      %v2269 = vadd.f32 %v2057, %v2191
      %v2270 = vadd.f32 %v2058, %v2194
      %v2271 = vadd.f32 %v2059, %v2199
      %v2272 = vadd.f32 %v2060, %v2202
      %v2273 = vadd.f32 %v2061, %v2207
      %v2274 = vadd.f32 %v2062, %v2210
      %v2275 = vadd.f32 %v2063, %v2215
      %v2276 = vadd.f32 %v2064, %v2218
      %v2277 = vadd.f32 %v2065, %v2223
      %v2278 = vadd.f32 %v2066, %v2226
      %v2279 = vadd.f32 %v2067, %v2231
      %v2280 = vadd.f32 %v2068, %v2234
      %v2281 = vadd.f32 %v2069, %v2239
      %v2282 = vadd.f32 %v2070, %v2242
      %v2283 = vadd.f32 %v2071, %v2247
      %v2284 = vadd.f32 %v2072, %v2250
      %s2285 = scalar_lea.vmem %s1, 12
      %v2286 = vld [vmem:[%s2285] sm:$0x3]
      %v2289 = vunpack.c.l.b16 %v267
      %v2290 = vunpack.c.l.b16 %v268
      %v2291 = vpack.c.b16 %v2290, %v2289
      %v2293 = vsel %vm708, %v2291, 0
      %v2296 = vsel %vm757, %v2286, 0
      %2298 = vmatprep.subr.bf16.mxu0 0
      %2299 = vmatpush1.bf16.msra.mxu0 0
      %2300 = vmatprep.subr.bf16.mxu0 0
      %2301 = vmatpush1.bf16.msra.mxu0 0
      %2302 = vmatprep.subr.bf16.mxu0 0
      %2303 = vmatpush1.bf16.msra.mxu0 0
      %2304 = vmatprep.subr.bf16.mxu0 0
      %2305 = vmatpush1.bf16.msra.mxu0 0
      %2306 = vmatprep.subr.bf16.mxu0 0
      %2307 = vmatpush1.bf16.msra.mxu0 0
      %2308 = vmatprep.subr.bf16.mxu0 0
      %2309 = vmatpush1.bf16.msra.mxu0 0
      %2310 = vmatprep.subr.bf16.mxu0 0
      %2311 = vmatpush1.bf16.msra.mxu0 0
      %2312 = vmatprep.subr.bf16.mxu0 0
      %2313 = vmatpush1.bf16.msra.mxu0 %v2296
      %2314 = vmatprep.subr.bf16.mxu0 0
      %2315 = vmatpush2.bf16.msra.mxu0 0
      %2316 = vmatprep.subr.bf16.mxu0 0
      %2317 = vmatpush2.bf16.msra.mxu0 0
      %2318 = vmatprep.subr.bf16.mxu0 0
      %2319 = vmatpush2.bf16.msra.mxu0 0
      %2320 = vmatprep.subr.bf16.mxu0 0
      %2321 = vmatpush2.bf16.msra.mxu0 0
      %2322 = vmatprep.subr.bf16.mxu0 0
      %2323 = vmatpush2.bf16.msra.mxu0 0
      %2324 = vmatprep.subr.bf16.mxu0 0
      %2325 = vmatpush2.bf16.msra.mxu0 0
      %2326 = vmatprep.subr.bf16.mxu0 0
      %2327 = vmatpush2.bf16.msra.mxu0 0
      %2328 = vmatprep.subr.bf16.mxu0 0
      %2329 = vmatpush2.bf16.msra.mxu0 0
      %2330 = vmatprep.mubr.bf16.mxu0 0
      %2331 = vmatmul.mubr.bf16.gmra.mxu0 %v1009
      %v2332 = vpop.f32.mrf.mxu0
      %v2333 = vadd.f32 0.0, %v2332
      %v2334 = vpop.f32.mrf.mxu0
      %v2335 = vpop.f32.mrf.mxu0
      %v2336 = vadd.f32 0.0, %v2335
      %v2337 = vpop.f32.mrf.mxu0
      %2338 = vmatprep.mubr.bf16.mxu0 0
      %2339 = vmatmul.mubr.bf16.gmra.mxu0 %v1012
      %v2340 = vpop.f32.mrf.mxu0
      %v2341 = vadd.f32 0.0, %v2340
      %v2342 = vpop.f32.mrf.mxu0
      %v2343 = vpop.f32.mrf.mxu0
      %v2344 = vadd.f32 0.0, %v2343
      %v2345 = vpop.f32.mrf.mxu0
      %2346 = vmatprep.mubr.bf16.mxu0 0
      %2347 = vmatmul.mubr.bf16.gmra.mxu0 %v1015
      %v2348 = vpop.f32.mrf.mxu0
      %v2349 = vadd.f32 0.0, %v2348
      %v2350 = vpop.f32.mrf.mxu0
      %v2351 = vpop.f32.mrf.mxu0
      %v2352 = vadd.f32 0.0, %v2351
      %v2353 = vpop.f32.mrf.mxu0
      %2354 = vmatprep.mubr.bf16.mxu0 0
      %2355 = vmatmul.mubr.bf16.gmra.mxu0 %v1018
      %v2356 = vpop.f32.mrf.mxu0
      %v2357 = vadd.f32 0.0, %v2356
      %v2358 = vpop.f32.mrf.mxu0
      %v2359 = vpop.f32.mrf.mxu0
      %v2360 = vadd.f32 0.0, %v2359
      %v2361 = vpop.f32.mrf.mxu0
      %2362 = vmatprep.mubr.bf16.mxu0 0
      %2363 = vmatmul.mubr.bf16.gmra.mxu0 %v1021
      %v2364 = vpop.f32.mrf.mxu0
      %v2365 = vadd.f32 0.0, %v2364
      %v2366 = vpop.f32.mrf.mxu0
      %v2367 = vpop.f32.mrf.mxu0
      %v2368 = vadd.f32 0.0, %v2367
      %v2369 = vpop.f32.mrf.mxu0
      %2370 = vmatprep.mubr.bf16.mxu0 0
      %2371 = vmatmul.mubr.bf16.gmra.mxu0 %v1024
      %v2372 = vpop.f32.mrf.mxu0
      %v2373 = vadd.f32 0.0, %v2372
      %v2374 = vpop.f32.mrf.mxu0
      %v2375 = vpop.f32.mrf.mxu0
      %v2376 = vadd.f32 0.0, %v2375
      %v2377 = vpop.f32.mrf.mxu0
      %2378 = vmatprep.mubr.bf16.mxu0 0
      %2379 = vmatmul.mubr.bf16.gmra.mxu0 %v1027
      %v2380 = vpop.f32.mrf.mxu0
      %v2381 = vadd.f32 0.0, %v2380
      %v2382 = vpop.f32.mrf.mxu0
      %v2383 = vpop.f32.mrf.mxu0
      %v2384 = vadd.f32 0.0, %v2383
      %v2385 = vpop.f32.mrf.mxu0
      %2386 = vmatprep.mubr.bf16.mxu0 0
      %2387 = vmatmul.mubr.bf16.gmra.mxu0 %v1030
      %v2388 = vpop.f32.mrf.mxu0
      %v2389 = vadd.f32 0.0, %v2388
      %v2390 = vpop.f32.mrf.mxu0
      %v2391 = vpop.f32.mrf.mxu0
      %v2392 = vadd.f32 0.0, %v2391
      %v2393 = vpop.f32.mrf.mxu0
      %2394 = vmatprep.mubr.bf16.mxu0 0
      %2395 = vmatmul.mubr.bf16.gmra.mxu0 %v1033
      %v2396 = vpop.f32.mrf.mxu0
      %v2397 = vadd.f32 0.0, %v2396
      %v2398 = vpop.f32.mrf.mxu0
      %v2399 = vpop.f32.mrf.mxu0
      %v2400 = vadd.f32 0.0, %v2399
      %v2401 = vpop.f32.mrf.mxu0
      %2402 = vmatprep.mubr.bf16.mxu0 0
      %2403 = vmatmul.mubr.bf16.gmra.mxu0 %v1036
      %v2404 = vpop.f32.mrf.mxu0
      %v2405 = vadd.f32 0.0, %v2404
      %v2406 = vpop.f32.mrf.mxu0
      %v2407 = vpop.f32.mrf.mxu0
      %v2408 = vadd.f32 0.0, %v2407
      %v2409 = vpop.f32.mrf.mxu0
      %2410 = vmatprep.mubr.bf16.mxu0 0
      %2411 = vmatmul.mubr.bf16.gmra.mxu0 %v1039
      %v2412 = vpop.f32.mrf.mxu0
      %v2413 = vadd.f32 0.0, %v2412
      %v2414 = vpop.f32.mrf.mxu0
      %v2415 = vpop.f32.mrf.mxu0
      %v2416 = vadd.f32 0.0, %v2415
      %v2417 = vpop.f32.mrf.mxu0
      %2418 = vmatprep.mubr.bf16.mxu0 0
      %2419 = vmatmul.mubr.bf16.gmra.mxu0 %v1042
      %v2420 = vpop.f32.mrf.mxu0
      %v2421 = vadd.f32 0.0, %v2420
      %v2422 = vpop.f32.mrf.mxu0
      %v2423 = vpop.f32.mrf.mxu0
      %v2424 = vadd.f32 0.0, %v2423
      %v2425 = vpop.f32.mrf.mxu0
      %2426 = vmatprep.mubr.bf16.mxu0 0
      %2427 = vmatmul.mubr.bf16.gmra.mxu0 %v1045
      %v2428 = vpop.f32.mrf.mxu0
      %v2429 = vadd.f32 0.0, %v2428
      %v2430 = vpop.f32.mrf.mxu0
      %v2431 = vpop.f32.mrf.mxu0
      %v2432 = vadd.f32 0.0, %v2431
      %v2433 = vpop.f32.mrf.mxu0
      %2434 = vmatprep.mubr.bf16.mxu0 0
      %2435 = vmatmul.mubr.bf16.gmra.mxu0 %v1048
      %v2436 = vpop.f32.mrf.mxu0
      %v2437 = vadd.f32 0.0, %v2436
      %v2438 = vpop.f32.mrf.mxu0
      %v2439 = vpop.f32.mrf.mxu0
      %v2440 = vadd.f32 0.0, %v2439
      %v2441 = vpop.f32.mrf.mxu0
      %2442 = vmatprep.mubr.bf16.mxu0 0
      %2443 = vmatmul.mubr.bf16.gmra.mxu0 %v1647
      %v2444 = vpop.f32.mrf.mxu0
      %v2445 = vadd.f32 0.0, %v2444
      %v2446 = vpop.f32.mrf.mxu0
      %v2447 = vpop.f32.mrf.mxu0
      %v2448 = vadd.f32 0.0, %v2447
      %v2449 = vpop.f32.mrf.mxu0
      %2450 = vmatprep.mubr.bf16.mxu0 0
      %2451 = vmatmul.mubr.bf16.gmra.mxu0 %v2293
      %v2452 = vpop.f32.mrf.mxu0
      %v2453 = vadd.f32 0.0, %v2452
      %v2454 = vpop.f32.mrf.mxu0
      %v2455 = vpop.f32.mrf.mxu0
      %v2456 = vadd.f32 0.0, %v2455
      %v2457 = vpop.f32.mrf.mxu0
      %2458 = vdwg.mxu0
      %v2459 = vadd.f32 %v2253, %v2333
      %v2460 = vadd.f32 %v2254, %v2336
      %v2461 = vadd.f32 %v2255, %v2341
      %v2462 = vadd.f32 %v2256, %v2344
      %v2463 = vadd.f32 %v2257, %v2349
      %v2464 = vadd.f32 %v2258, %v2352
      %v2465 = vadd.f32 %v2259, %v2357
      %v2466 = vadd.f32 %v2260, %v2360
      %v2467 = vadd.f32 %v2261, %v2365
      %v2468 = vadd.f32 %v2262, %v2368
      %v2469 = vadd.f32 %v2263, %v2373
      %v2470 = vadd.f32 %v2264, %v2376
      %v2471 = vadd.f32 %v2265, %v2381
      %v2472 = vadd.f32 %v2266, %v2384
      %v2473 = vadd.f32 %v2267, %v2389
      %v2474 = vadd.f32 %v2268, %v2392
      %v2475 = vadd.f32 %v2269, %v2397
      %v2476 = vadd.f32 %v2270, %v2400
      %v2477 = vadd.f32 %v2271, %v2405
      %v2478 = vadd.f32 %v2272, %v2408
      %v2479 = vadd.f32 %v2273, %v2413
      %v2480 = vadd.f32 %v2274, %v2416
      %v2481 = vadd.f32 %v2275, %v2421
      %v2482 = vadd.f32 %v2276, %v2424
      %v2483 = vadd.f32 %v2277, %v2429
      %v2484 = vadd.f32 %v2278, %v2432
      %v2485 = vadd.f32 %v2279, %v2437
      %v2486 = vadd.f32 %v2280, %v2440
      %v2487 = vadd.f32 %v2281, %v2445
      %v2488 = vadd.f32 %v2282, %v2448
      %v2489 = vadd.f32 %v2283, %v2453
      %v2490 = vadd.f32 %v2284, %v2456
      %v2492 = vshrl.u32 %v267, 16
      %v2494 = vrot.slane %v2492, 4
      %v2495 = vshll.u32 %v267, 16
      %v2497 = vrot.slane %v2495, 5
      %v2498 = vor.u32 %v2494, %v2497
      %v2499 = vrot.slane %v2498, 4
      %v2501 = vshll.u32 %v268, 16
      %v2503 = vrot.slane %v2501, 5
      %v2504 = vsel %vm273, %v2499, %v2503
      %v2505 = vshrl.u32 %v268, 16
      %v2507 = vrot.slane %v2505, 4
      %v2508 = vor.u32 %v2507, %v2503
      %v2509 = vrot.slane %v2508, 4
      %v2511 = vshll.u32 %v269, 16
      %v2513 = vrot.slane %v2511, 5
      %v2514 = vsel %vm273, %v2509, %v2513
      %s2515 = scalar_lea.vmem %s1, 14
      %v2516 = vld [vmem:[%s2515] sm:$0x3]
      %v2517 = vunpack.c.l.b16 %v2504
      %v2518 = vunpack.c.l.b16 %v2514
      %v2519 = vpack.c.b16 %v2518, %v2517
      %v2521 = vsel %vm708, %v2519, 0
      %v2524 = vsel %vm757, %v2516, 0
      %2526 = vmatprep.subr.bf16.mxu0 0
      %2527 = vmatpush1.bf16.msra.mxu0 0
      %2528 = vmatprep.subr.bf16.mxu0 0
      %2529 = vmatpush1.bf16.msra.mxu0 0
      %2530 = vmatprep.subr.bf16.mxu0 0
      %2531 = vmatpush1.bf16.msra.mxu0 0
      %2532 = vmatprep.subr.bf16.mxu0 0
      %2533 = vmatpush1.bf16.msra.mxu0 0
      %2534 = vmatprep.subr.bf16.mxu0 0
      %2535 = vmatpush1.bf16.msra.mxu0 0
      %2536 = vmatprep.subr.bf16.mxu0 0
      %2537 = vmatpush1.bf16.msra.mxu0 0
      %2538 = vmatprep.subr.bf16.mxu0 0
      %2539 = vmatpush1.bf16.msra.mxu0 0
      %2540 = vmatprep.subr.bf16.mxu0 0
      %2541 = vmatpush1.bf16.msra.mxu0 %v2524
      %2542 = vmatprep.subr.bf16.mxu0 0
      %2543 = vmatpush2.bf16.msra.mxu0 0
      %2544 = vmatprep.subr.bf16.mxu0 0
      %2545 = vmatpush2.bf16.msra.mxu0 0
      %2546 = vmatprep.subr.bf16.mxu0 0
      %2547 = vmatpush2.bf16.msra.mxu0 0
      %2548 = vmatprep.subr.bf16.mxu0 0
      %2549 = vmatpush2.bf16.msra.mxu0 0
      %2550 = vmatprep.subr.bf16.mxu0 0
      %2551 = vmatpush2.bf16.msra.mxu0 0
      %2552 = vmatprep.subr.bf16.mxu0 0
      %2553 = vmatpush2.bf16.msra.mxu0 0
      %2554 = vmatprep.subr.bf16.mxu0 0
      %2555 = vmatpush2.bf16.msra.mxu0 0
      %2556 = vmatprep.subr.bf16.mxu0 0
      %2557 = vmatpush2.bf16.msra.mxu0 0
      %2558 = vmatprep.mubr.bf16.mxu0 0
      %2559 = vmatmul.mubr.bf16.gmra.mxu0 %v716
      %v2560 = vpop.f32.mrf.mxu0
      %v2561 = vadd.f32 0.0, %v2560
      %v2562 = vpop.f32.mrf.mxu0
      %v2563 = vpop.f32.mrf.mxu0
      %v2564 = vadd.f32 0.0, %v2563
      %v2565 = vpop.f32.mrf.mxu0
      %2566 = vmatprep.mubr.bf16.mxu0 0
      %2567 = vmatmul.mubr.bf16.gmra.mxu0 %v719
      %v2568 = vpop.f32.mrf.mxu0
      %v2569 = vadd.f32 0.0, %v2568
      %v2570 = vpop.f32.mrf.mxu0
      %v2571 = vpop.f32.mrf.mxu0
      %v2572 = vadd.f32 0.0, %v2571
      %v2573 = vpop.f32.mrf.mxu0
      %2574 = vmatprep.mubr.bf16.mxu0 0
      %2575 = vmatmul.mubr.bf16.gmra.mxu0 %v722
      %v2576 = vpop.f32.mrf.mxu0
      %v2577 = vadd.f32 0.0, %v2576
      %v2578 = vpop.f32.mrf.mxu0
      %v2579 = vpop.f32.mrf.mxu0
      %v2580 = vadd.f32 0.0, %v2579
      %v2581 = vpop.f32.mrf.mxu0
      %2582 = vmatprep.mubr.bf16.mxu0 0
      %2583 = vmatmul.mubr.bf16.gmra.mxu0 %v725
      %v2584 = vpop.f32.mrf.mxu0
      %v2585 = vadd.f32 0.0, %v2584
      %v2586 = vpop.f32.mrf.mxu0
      %v2587 = vpop.f32.mrf.mxu0
      %v2588 = vadd.f32 0.0, %v2587
      %v2589 = vpop.f32.mrf.mxu0
      %2590 = vmatprep.mubr.bf16.mxu0 0
      %2591 = vmatmul.mubr.bf16.gmra.mxu0 %v728
      %v2592 = vpop.f32.mrf.mxu0
      %v2593 = vadd.f32 0.0, %v2592
      %v2594 = vpop.f32.mrf.mxu0
      %v2595 = vpop.f32.mrf.mxu0
      %v2596 = vadd.f32 0.0, %v2595
      %v2597 = vpop.f32.mrf.mxu0
      %2598 = vmatprep.mubr.bf16.mxu0 0
      %2599 = vmatmul.mubr.bf16.gmra.mxu0 %v731
      %v2600 = vpop.f32.mrf.mxu0
      %v2601 = vadd.f32 0.0, %v2600
      %v2602 = vpop.f32.mrf.mxu0
      %v2603 = vpop.f32.mrf.mxu0
      %v2604 = vadd.f32 0.0, %v2603
      %v2605 = vpop.f32.mrf.mxu0
      %2606 = vmatprep.mubr.bf16.mxu0 0
      %2607 = vmatmul.mubr.bf16.gmra.mxu0 %v734
      %v2608 = vpop.f32.mrf.mxu0
      %v2609 = vadd.f32 0.0, %v2608
      %v2610 = vpop.f32.mrf.mxu0
      %v2611 = vpop.f32.mrf.mxu0
      %v2612 = vadd.f32 0.0, %v2611
      %v2613 = vpop.f32.mrf.mxu0
      %2614 = vmatprep.mubr.bf16.mxu0 0
      %2615 = vmatmul.mubr.bf16.gmra.mxu0 %v737
      %v2616 = vpop.f32.mrf.mxu0
      %v2617 = vadd.f32 0.0, %v2616
      %v2618 = vpop.f32.mrf.mxu0
      %v2619 = vpop.f32.mrf.mxu0
      %v2620 = vadd.f32 0.0, %v2619
      %v2621 = vpop.f32.mrf.mxu0
      %2622 = vmatprep.mubr.bf16.mxu0 0
      %2623 = vmatmul.mubr.bf16.gmra.mxu0 %v740
      %v2624 = vpop.f32.mrf.mxu0
      %v2625 = vadd.f32 0.0, %v2624
      %v2626 = vpop.f32.mrf.mxu0
      %v2627 = vpop.f32.mrf.mxu0
      %v2628 = vadd.f32 0.0, %v2627
      %v2629 = vpop.f32.mrf.mxu0
      %2630 = vmatprep.mubr.bf16.mxu0 0
      %2631 = vmatmul.mubr.bf16.gmra.mxu0 %v743
      %v2632 = vpop.f32.mrf.mxu0
      %v2633 = vadd.f32 0.0, %v2632
      %v2634 = vpop.f32.mrf.mxu0
      %v2635 = vpop.f32.mrf.mxu0
      %v2636 = vadd.f32 0.0, %v2635
      %v2637 = vpop.f32.mrf.mxu0
      %2638 = vmatprep.mubr.bf16.mxu0 0
      %2639 = vmatmul.mubr.bf16.gmra.mxu0 %v746
      %v2640 = vpop.f32.mrf.mxu0
      %v2641 = vadd.f32 0.0, %v2640
      %v2642 = vpop.f32.mrf.mxu0
      %v2643 = vpop.f32.mrf.mxu0
      %v2644 = vadd.f32 0.0, %v2643
      %v2645 = vpop.f32.mrf.mxu0
      %2646 = vmatprep.mubr.bf16.mxu0 0
      %2647 = vmatmul.mubr.bf16.gmra.mxu0 %v749
      %v2648 = vpop.f32.mrf.mxu0
      %v2649 = vadd.f32 0.0, %v2648
      %v2650 = vpop.f32.mrf.mxu0
      %v2651 = vpop.f32.mrf.mxu0
      %v2652 = vadd.f32 0.0, %v2651
      %v2653 = vpop.f32.mrf.mxu0
      %2654 = vmatprep.mubr.bf16.mxu0 0
      %2655 = vmatmul.mubr.bf16.gmra.mxu0 %v752
      %v2656 = vpop.f32.mrf.mxu0
      %v2657 = vadd.f32 0.0, %v2656
      %v2658 = vpop.f32.mrf.mxu0
      %v2659 = vpop.f32.mrf.mxu0
      %v2660 = vadd.f32 0.0, %v2659
      %v2661 = vpop.f32.mrf.mxu0
      %2662 = vmatprep.mubr.bf16.mxu0 0
      %2663 = vmatmul.mubr.bf16.gmra.mxu0 %v755
      %v2664 = vpop.f32.mrf.mxu0
      %v2665 = vadd.f32 0.0, %v2664
      %v2666 = vpop.f32.mrf.mxu0
      %v2667 = vpop.f32.mrf.mxu0
      %v2668 = vadd.f32 0.0, %v2667
      %v2669 = vpop.f32.mrf.mxu0
      %2670 = vmatprep.mubr.bf16.mxu0 0
      %2671 = vmatmul.mubr.bf16.gmra.mxu0 %v1875
      %v2672 = vpop.f32.mrf.mxu0
      %v2673 = vadd.f32 0.0, %v2672
      %v2674 = vpop.f32.mrf.mxu0
      %v2675 = vpop.f32.mrf.mxu0
      %v2676 = vadd.f32 0.0, %v2675
      %v2677 = vpop.f32.mrf.mxu0
      %2678 = vmatprep.mubr.bf16.mxu0 0
      %2679 = vmatmul.mubr.bf16.gmra.mxu0 %v2521
      %v2680 = vpop.f32.mrf.mxu0
      %v2681 = vadd.f32 0.0, %v2680
      %v2682 = vpop.f32.mrf.mxu0
      %v2683 = vpop.f32.mrf.mxu0
      %v2684 = vadd.f32 0.0, %v2683
      %v2685 = vpop.f32.mrf.mxu0
      %2686 = vdwg.mxu0
      %v2687 = vadd.f32 %v2459, %v2561
      %v2688 = vadd.f32 %v2460, %v2564
      %v2689 = vadd.f32 %v2461, %v2569
      %v2690 = vadd.f32 %v2462, %v2572
      %v2691 = vadd.f32 %v2463, %v2577
      %v2692 = vadd.f32 %v2464, %v2580
      %v2693 = vadd.f32 %v2465, %v2585
      %v2694 = vadd.f32 %v2466, %v2588
      %v2695 = vadd.f32 %v2467, %v2593
      %v2696 = vadd.f32 %v2468, %v2596
      %v2697 = vadd.f32 %v2469, %v2601
      %v2698 = vadd.f32 %v2470, %v2604
      %v2699 = vadd.f32 %v2471, %v2609
      %v2700 = vadd.f32 %v2472, %v2612
      %v2701 = vadd.f32 %v2473, %v2617
      %v2702 = vadd.f32 %v2474, %v2620
      %v2703 = vadd.f32 %v2475, %v2625
      %v2704 = vadd.f32 %v2476, %v2628
      %v2705 = vadd.f32 %v2477, %v2633
      %v2706 = vadd.f32 %v2478, %v2636
      %v2707 = vadd.f32 %v2479, %v2641
      %v2708 = vadd.f32 %v2480, %v2644
      %v2709 = vadd.f32 %v2481, %v2649
      %v2710 = vadd.f32 %v2482, %v2652
      %v2711 = vadd.f32 %v2483, %v2657
      %v2712 = vadd.f32 %v2484, %v2660
      %v2713 = vadd.f32 %v2485, %v2665
      %v2714 = vadd.f32 %v2486, %v2668
      %v2715 = vadd.f32 %v2487, %v2673
      %v2716 = vadd.f32 %v2488, %v2676
      %v2717 = vadd.f32 %v2489, %v2681
      %v2718 = vadd.f32 %v2490, %v2684
      %v2720 = vrot.slane %v267, 5
      %v2721 = vrot.slane %v2720, 4
      %v2722 = vrot.slane %v268, 5
      %v2723 = vsel %vm1232, %v2721, %v2722
      %v2724 = vrot.slane %v2722, 4
      %v2725 = vrot.slane %v269, 5
      %v2726 = vsel %vm1232, %v2724, %v2725
      %s2727 = scalar_lea.vmem %s1, 16
      %v2728 = vld [vmem:[%s2727] sm:$0x3]
      %v2729 = vunpack.c.l.b16 %v2723
      %v2730 = vunpack.c.l.b16 %v2726
      %v2731 = vpack.c.b16 %v2730, %v2729
      %v2733 = vsel %vm708, %v2731, 0
      %v2736 = vsel %vm757, %v2728, 0
      %2738 = vmatprep.subr.bf16.mxu0 0
      %2739 = vmatpush1.bf16.msra.mxu0 0
      %2740 = vmatprep.subr.bf16.mxu0 0
      %2741 = vmatpush1.bf16.msra.mxu0 0
      %2742 = vmatprep.subr.bf16.mxu0 0
      %2743 = vmatpush1.bf16.msra.mxu0 0
      %2744 = vmatprep.subr.bf16.mxu0 0
      %2745 = vmatpush1.bf16.msra.mxu0 0
      %2746 = vmatprep.subr.bf16.mxu0 0
      %2747 = vmatpush1.bf16.msra.mxu0 0
      %2748 = vmatprep.subr.bf16.mxu0 0
      %2749 = vmatpush1.bf16.msra.mxu0 0
      %2750 = vmatprep.subr.bf16.mxu0 0
      %2751 = vmatpush1.bf16.msra.mxu0 0
      %2752 = vmatprep.subr.bf16.mxu0 0
      %2753 = vmatpush1.bf16.msra.mxu0 %v2736
      %2754 = vmatprep.subr.bf16.mxu0 0
      %2755 = vmatpush2.bf16.msra.mxu0 0
      %2756 = vmatprep.subr.bf16.mxu0 0
      %2757 = vmatpush2.bf16.msra.mxu0 0
      %2758 = vmatprep.subr.bf16.mxu0 0
      %2759 = vmatpush2.bf16.msra.mxu0 0
      %2760 = vmatprep.subr.bf16.mxu0 0
      %2761 = vmatpush2.bf16.msra.mxu0 0
      %2762 = vmatprep.subr.bf16.mxu0 0
      %2763 = vmatpush2.bf16.msra.mxu0 0
      %2764 = vmatprep.subr.bf16.mxu0 0
      %2765 = vmatpush2.bf16.msra.mxu0 0
      %2766 = vmatprep.subr.bf16.mxu0 0
      %2767 = vmatpush2.bf16.msra.mxu0 0
      %2768 = vmatprep.subr.bf16.mxu0 0
      %2769 = vmatpush2.bf16.msra.mxu0 0
      %2770 = vmatprep.mubr.bf16.mxu0 0
      %2771 = vmatmul.mubr.bf16.gmra.mxu0 %v1402
      %v2772 = vpop.f32.mrf.mxu0
      %v2773 = vadd.f32 0.0, %v2772
      %v2774 = vpop.f32.mrf.mxu0
      %v2775 = vpop.f32.mrf.mxu0
      %v2776 = vadd.f32 0.0, %v2775
      %v2777 = vpop.f32.mrf.mxu0
      %2778 = vmatprep.mubr.bf16.mxu0 0
      %2779 = vmatmul.mubr.bf16.gmra.mxu0 %v1405
      %v2780 = vpop.f32.mrf.mxu0
      %v2781 = vadd.f32 0.0, %v2780
      %v2782 = vpop.f32.mrf.mxu0
      %v2783 = vpop.f32.mrf.mxu0
      %v2784 = vadd.f32 0.0, %v2783
      %v2785 = vpop.f32.mrf.mxu0
      %2786 = vmatprep.mubr.bf16.mxu0 0
      %2787 = vmatmul.mubr.bf16.gmra.mxu0 %v1408
      %v2788 = vpop.f32.mrf.mxu0
      %v2789 = vadd.f32 0.0, %v2788
      %v2790 = vpop.f32.mrf.mxu0
      %v2791 = vpop.f32.mrf.mxu0
      %v2792 = vadd.f32 0.0, %v2791
      %v2793 = vpop.f32.mrf.mxu0
      %2794 = vmatprep.mubr.bf16.mxu0 0
      %2795 = vmatmul.mubr.bf16.gmra.mxu0 %v1411
      %v2796 = vpop.f32.mrf.mxu0
      %v2797 = vadd.f32 0.0, %v2796
      %v2798 = vpop.f32.mrf.mxu0
      %v2799 = vpop.f32.mrf.mxu0
      %v2800 = vadd.f32 0.0, %v2799
      %v2801 = vpop.f32.mrf.mxu0
      %2802 = vmatprep.mubr.bf16.mxu0 0
      %2803 = vmatmul.mubr.bf16.gmra.mxu0 %v1414
      %v2804 = vpop.f32.mrf.mxu0
      %v2805 = vadd.f32 0.0, %v2804
      %v2806 = vpop.f32.mrf.mxu0
      %v2807 = vpop.f32.mrf.mxu0
      %v2808 = vadd.f32 0.0, %v2807
      %v2809 = vpop.f32.mrf.mxu0
      %2810 = vmatprep.mubr.bf16.mxu0 0
      %2811 = vmatmul.mubr.bf16.gmra.mxu0 %v1417
      %v2812 = vpop.f32.mrf.mxu0
      %v2813 = vadd.f32 0.0, %v2812
      %v2814 = vpop.f32.mrf.mxu0
      %v2815 = vpop.f32.mrf.mxu0
      %v2816 = vadd.f32 0.0, %v2815
      %v2817 = vpop.f32.mrf.mxu0
      %2818 = vmatprep.mubr.bf16.mxu0 0
      %2819 = vmatmul.mubr.bf16.gmra.mxu0 %v1420
      %v2820 = vpop.f32.mrf.mxu0
      %v2821 = vadd.f32 0.0, %v2820
      %v2822 = vpop.f32.mrf.mxu0
      %v2823 = vpop.f32.mrf.mxu0
      %v2824 = vadd.f32 0.0, %v2823
      %v2825 = vpop.f32.mrf.mxu0
      %2826 = vmatprep.mubr.bf16.mxu0 0
      %2827 = vmatmul.mubr.bf16.gmra.mxu0 %v1423
      %v2828 = vpop.f32.mrf.mxu0
      %v2829 = vadd.f32 0.0, %v2828
      %v2830 = vpop.f32.mrf.mxu0
      %v2831 = vpop.f32.mrf.mxu0
      %v2832 = vadd.f32 0.0, %v2831
      %v2833 = vpop.f32.mrf.mxu0
      %2834 = vmatprep.mubr.bf16.mxu0 0
      %2835 = vmatmul.mubr.bf16.gmra.mxu0 %v1426
      %v2836 = vpop.f32.mrf.mxu0
      %v2837 = vadd.f32 0.0, %v2836
      %v2838 = vpop.f32.mrf.mxu0
      %v2839 = vpop.f32.mrf.mxu0
      %v2840 = vadd.f32 0.0, %v2839
      %v2841 = vpop.f32.mrf.mxu0
      %2842 = vmatprep.mubr.bf16.mxu0 0
      %2843 = vmatmul.mubr.bf16.gmra.mxu0 %v1429
      %v2844 = vpop.f32.mrf.mxu0
      %v2845 = vadd.f32 0.0, %v2844
      %v2846 = vpop.f32.mrf.mxu0
      %v2847 = vpop.f32.mrf.mxu0
      %v2848 = vadd.f32 0.0, %v2847
      %v2849 = vpop.f32.mrf.mxu0
      %2850 = vmatprep.mubr.bf16.mxu0 0
      %2851 = vmatmul.mubr.bf16.gmra.mxu0 %v1432
      %v2852 = vpop.f32.mrf.mxu0
      %v2853 = vadd.f32 0.0, %v2852
      %v2854 = vpop.f32.mrf.mxu0
      %v2855 = vpop.f32.mrf.mxu0
      %v2856 = vadd.f32 0.0, %v2855
      %v2857 = vpop.f32.mrf.mxu0
      %2858 = vmatprep.mubr.bf16.mxu0 0
      %2859 = vmatmul.mubr.bf16.gmra.mxu0 %v1435
      %v2860 = vpop.f32.mrf.mxu0
      %v2861 = vadd.f32 0.0, %v2860
      %v2862 = vpop.f32.mrf.mxu0
      %v2863 = vpop.f32.mrf.mxu0
      %v2864 = vadd.f32 0.0, %v2863
      %v2865 = vpop.f32.mrf.mxu0
      %2866 = vmatprep.mubr.bf16.mxu0 0
      %2867 = vmatmul.mubr.bf16.gmra.mxu0 %v1438
      %v2868 = vpop.f32.mrf.mxu0
      %v2869 = vadd.f32 0.0, %v2868
      %v2870 = vpop.f32.mrf.mxu0
      %v2871 = vpop.f32.mrf.mxu0
      %v2872 = vadd.f32 0.0, %v2871
      %v2873 = vpop.f32.mrf.mxu0
      %2874 = vmatprep.mubr.bf16.mxu0 0
      %2875 = vmatmul.mubr.bf16.gmra.mxu0 %v1441
      %v2876 = vpop.f32.mrf.mxu0
      %v2877 = vadd.f32 0.0, %v2876
      %v2878 = vpop.f32.mrf.mxu0
      %v2879 = vpop.f32.mrf.mxu0
      %v2880 = vadd.f32 0.0, %v2879
      %v2881 = vpop.f32.mrf.mxu0
      %2882 = vmatprep.mubr.bf16.mxu0 0
      %2883 = vmatmul.mubr.bf16.gmra.mxu0 %v2087
      %v2884 = vpop.f32.mrf.mxu0
      %v2885 = vadd.f32 0.0, %v2884
      %v2886 = vpop.f32.mrf.mxu0
      %v2887 = vpop.f32.mrf.mxu0
      %v2888 = vadd.f32 0.0, %v2887
      %v2889 = vpop.f32.mrf.mxu0
      %2890 = vmatprep.mubr.bf16.mxu0 0
      %2891 = vmatmul.mubr.bf16.gmra.mxu0 %v2733
      %v2892 = vpop.f32.mrf.mxu0
      %v2893 = vadd.f32 0.0, %v2892
      %v2894 = vpop.f32.mrf.mxu0
      %v2895 = vpop.f32.mrf.mxu0
      %v2896 = vadd.f32 0.0, %v2895
      %v2897 = vpop.f32.mrf.mxu0
      %2898 = vdwg.mxu0
      %v2899 = vadd.f32 %v2687, %v2773
      %v2900 = vadd.f32 %v2688, %v2776
      %v2901 = vadd.f32 %v2689, %v2781
      %v2902 = vadd.f32 %v2690, %v2784
      %v2903 = vadd.f32 %v2691, %v2789
      %v2904 = vadd.f32 %v2692, %v2792
      %v2905 = vadd.f32 %v2693, %v2797
      %v2906 = vadd.f32 %v2694, %v2800
      %v2907 = vadd.f32 %v2695, %v2805
      %v2908 = vadd.f32 %v2696, %v2808
      %v2909 = vadd.f32 %v2697, %v2813
      %v2910 = vadd.f32 %v2698, %v2816
      %v2911 = vadd.f32 %v2699, %v2821
      %v2912 = vadd.f32 %v2700, %v2824
      %v2913 = vadd.f32 %v2701, %v2829
      %v2914 = vadd.f32 %v2702, %v2832
      %v2915 = vadd.f32 %v2703, %v2837
      %v2916 = vadd.f32 %v2704, %v2840
      %v2917 = vadd.f32 %v2705, %v2845
      %v2918 = vadd.f32 %v2706, %v2848
      %v2919 = vadd.f32 %v2707, %v2853
      %v2920 = vadd.f32 %v2708, %v2856
      %v2921 = vadd.f32 %v2709, %v2861
      %v2922 = vadd.f32 %v2710, %v2864
      %v2923 = vadd.f32 %v2711, %v2869
      %v2924 = vadd.f32 %v2712, %v2872
      %v2925 = vadd.f32 %v2713, %v2877
      %v2926 = vadd.f32 %v2714, %v2880
      %v2927 = vadd.f32 %v2715, %v2885
      %v2928 = vadd.f32 %v2716, %v2888
      %v2929 = vadd.f32 %v2717, %v2893
      %v2930 = vadd.f32 %v2718, %v2896
      %v2931 = vpack.c.bf16 %v2900, %v2899
      %v2932 = vpack.c.bf16 %v2902, %v2901
      %v2933 = vpack.c.bf16 %v2904, %v2903
      %v2934 = vpack.c.bf16 %v2906, %v2905
      %v2935 = vpack.c.bf16 %v2908, %v2907
      %v2936 = vpack.c.bf16 %v2910, %v2909
      %v2937 = vpack.c.bf16 %v2912, %v2911
      %v2938 = vpack.c.bf16 %v2914, %v2913
      %v2939 = vpack.c.bf16 %v2916, %v2915
      %v2940 = vpack.c.bf16 %v2918, %v2917
      %v2941 = vpack.c.bf16 %v2920, %v2919
      %v2942 = vpack.c.bf16 %v2922, %v2921
      %v2943 = vpack.c.bf16 %v2924, %v2923
      %v2944 = vpack.c.bf16 %v2926, %v2925
      %v2945 = vpack.c.bf16 %v2928, %v2927
      %v2946 = vpack.c.bf16 %v2930, %v2929
      %v2963 = vunpack.c.l.b16 %v2931
      %v2964 = vunpack.c.h.b16 %v2931
      %v2965 = vunpack.c.l.b16 %v2932
      %v2966 = vunpack.c.h.b16 %v2932
      %v2967 = vunpack.c.l.b16 %v2933
      %v2968 = vunpack.c.h.b16 %v2933
      %v2969 = vunpack.c.l.b16 %v2934
      %v2970 = vunpack.c.h.b16 %v2934
      %v2971 = vunpack.c.l.b16 %v2935
      %v2972 = vunpack.c.h.b16 %v2935
      %v2973 = vunpack.c.l.b16 %v2936
      %v2974 = vunpack.c.h.b16 %v2936
      %v2975 = vunpack.c.l.b16 %v2937
      %v2976 = vunpack.c.h.b16 %v2937
      %v2977 = vunpack.c.l.b16 %v2938
      %v2978 = vunpack.c.h.b16 %v2938
      %v2979 = vunpack.c.l.b16 %v2939
      %v2980 = vunpack.c.h.b16 %v2939
      %v2981 = vunpack.c.l.b16 %v2940
      %v2982 = vunpack.c.h.b16 %v2940
      %v2983 = vunpack.c.l.b16 %v2941
      %v2984 = vunpack.c.h.b16 %v2941
      %v2985 = vunpack.c.l.b16 %v2942
      %v2986 = vunpack.c.h.b16 %v2942
      %v2987 = vunpack.c.l.b16 %v2943
      %v2988 = vunpack.c.h.b16 %v2943
      %v2989 = vunpack.c.l.b16 %v2944
      %v2990 = vunpack.c.h.b16 %v2944
      %v2991 = vunpack.c.l.b16 %v2945
      %v2992 = vunpack.c.h.b16 %v2945
      %v2993 = vunpack.c.l.b16 %v2946
      %v2994 = vunpack.c.h.b16 %v2946
      %v2995 = vpack.c.b16 %v2963, %v2963
      %v2996 = vpack.c.b16 %v2964, %v2964
      %v2997 = vpack.c.b16 %v2965, %v2965
      %v2998 = vpack.c.b16 %v2966, %v2966
      %v2999 = vpack.c.b16 %v2967, %v2967
      %v3000 = vpack.c.b16 %v2968, %v2968
      %v3001 = vpack.c.b16 %v2969, %v2969
      %v3002 = vpack.c.b16 %v2970, %v2970
      %v3003 = vpack.c.b16 %v2971, %v2971
      %v3004 = vpack.c.b16 %v2972, %v2972
      %v3005 = vpack.c.b16 %v2973, %v2973
      %v3006 = vpack.c.b16 %v2974, %v2974
      %v3007 = vpack.c.b16 %v2975, %v2975
      %v3008 = vpack.c.b16 %v2976, %v2976
      %v3009 = vpack.c.b16 %v2977, %v2977
      %v3010 = vpack.c.b16 %v2978, %v2978
      %v3011 = vpack.c.b16 %v2979, %v2979
      %v3012 = vpack.c.b16 %v2980, %v2980
      %v3013 = vpack.c.b16 %v2981, %v2981
      %v3014 = vpack.c.b16 %v2982, %v2982
      %v3015 = vpack.c.b16 %v2983, %v2983
      %v3016 = vpack.c.b16 %v2984, %v2984
      %v3017 = vpack.c.b16 %v2985, %v2985
      %v3018 = vpack.c.b16 %v2986, %v2986
      %v3019 = vpack.c.b16 %v2987, %v2987
      %v3020 = vpack.c.b16 %v2988, %v2988
      %v3021 = vpack.c.b16 %v2989, %v2989
      %v3022 = vpack.c.b16 %v2990, %v2990
      %v3023 = vpack.c.b16 %v2991, %v2991
      %v3024 = vpack.c.b16 %v2992, %v2992
      %v3025 = vpack.c.b16 %v2993, %v2993
      %v3026 = vpack.c.b16 %v2994, %v2994
      %vm3059 = vcmask 60416
      %3060 = vst.msk [vmem:[%s208] sm:$0xf] %vm3059, %v2995
      %3061 = vst.msk [vmem:[%s208 + $0x4] sm:$0xf] %vm3059, %v2996
      %3062 = vst.msk [vmem:[%s208 + $0x8] sm:$0xf] %vm3059, %v2997
      %3063 = vst.msk [vmem:[%s208 + $0xc] sm:$0xf] %vm3059, %v2998
      %3064 = vst.msk [vmem:[%s208 + $0x10] sm:$0xf] %vm3059, %v2999
      %3065 = vst.msk [vmem:[%s208 + $0x14] sm:$0xf] %vm3059, %v3000
      %3066 = vst.msk [vmem:[%s208 + $0x18] sm:$0xf] %vm3059, %v3001
      %3067 = vst.msk [vmem:[%s208 + $0x1c] sm:$0xf] %vm3059, %v3002
      %3068 = vst.msk [vmem:[%s208 + $0x20] sm:$0xf] %vm3059, %v3003
      %3069 = vst.msk [vmem:[%s208 + $0x24] sm:$0xf] %vm3059, %v3004
      %3070 = vst.msk [vmem:[%s208 + $0x28] sm:$0xf] %vm3059, %v3005
      %3071 = vst.msk [vmem:[%s208 + $0x2c] sm:$0xf] %vm3059, %v3006
      %3072 = vst.msk [vmem:[%s208 + $0x30] sm:$0xf] %vm3059, %v3007
      %3073 = vst.msk [vmem:[%s208 + $0x34] sm:$0xf] %vm3059, %v3008
      %3074 = vst.msk [vmem:[%s208 + $0x38] sm:$0xf] %vm3059, %v3009
      %3075 = vst.msk [vmem:[%s208 + $0x3c] sm:$0xf] %vm3059, %v3010
      %3076 = vst.msk [vmem:[%s208 + $0x40] sm:$0xf] %vm3059, %v3011
      %3077 = vst.msk [vmem:[%s208 + $0x44] sm:$0xf] %vm3059, %v3012
      %3078 = vst.msk [vmem:[%s208 + $0x48] sm:$0xf] %vm3059, %v3013
      %3079 = vst.msk [vmem:[%s208 + $0x4c] sm:$0xf] %vm3059, %v3014
      %3080 = vst.msk [vmem:[%s208 + $0x50] sm:$0xf] %vm3059, %v3015
      %3081 = vst.msk [vmem:[%s208 + $0x54] sm:$0xf] %vm3059, %v3016
      %3082 = vst.msk [vmem:[%s208 + $0x58] sm:$0xf] %vm3059, %v3017
      %3083 = vst.msk [vmem:[%s208 + $0x5c] sm:$0xf] %vm3059, %v3018
      %3084 = vst.msk [vmem:[%s208 + $0x60] sm:$0xf] %vm3059, %v3019
      %3085 = vst.msk [vmem:[%s208 + $0x64] sm:$0xf] %vm3059, %v3020
      %3086 = vst.msk [vmem:[%s208 + $0x68] sm:$0xf] %vm3059, %v3021
      %3087 = vst.msk [vmem:[%s208 + $0x6c] sm:$0xf] %vm3059, %v3022
      %3088 = vst.msk [vmem:[%s208 + $0x70] sm:$0xf] %vm3059, %v3023
      %3089 = vst.msk [vmem:[%s208 + $0x74] sm:$0xf] %vm3059, %v3024
      %3090 = vst.msk [vmem:[%s208 + $0x78] sm:$0xf] %vm3059, %v3025
      %3091 = vst.msk [vmem:[%s208 + $0x7c] sm:$0xf] %vm3059, %v3026
      %v3092 = vadd.f32 %v2899, %v2900
      %v3093 = vadd.f32 %v3092, %v2901
      %v3094 = vadd.f32 %v3093, %v2902
      %v3095 = vadd.f32 %v3094, %v2903
      %v3096 = vadd.f32 %v3095, %v2904
      %v3097 = vadd.f32 %v3096, %v2905
      %v3098 = vadd.f32 %v3097, %v2906
      %v3099 = vadd.f32 %v3098, %v2907
      %v3100 = vadd.f32 %v3099, %v2908
      %v3101 = vadd.f32 %v3100, %v2909
      %v3102 = vadd.f32 %v3101, %v2910
      %v3103 = vadd.f32 %v3102, %v2911
      %v3104 = vadd.f32 %v3103, %v2912
      %v3105 = vadd.f32 %v3104, %v2913
      %v3106 = vadd.f32 %v3105, %v2914
      %v3107 = vadd.f32 %v3106, %v2915
      %v3108 = vadd.f32 %v3107, %v2916
      %v3109 = vadd.f32 %v3108, %v2917
      %v3110 = vadd.f32 %v3109, %v2918
      %v3111 = vadd.f32 %v3110, %v2919
      %v3112 = vadd.f32 %v3111, %v2920
      %v3113 = vadd.f32 %v3112, %v2921
      %v3114 = vadd.f32 %v3113, %v2922
      %v3115 = vadd.f32 %v3114, %v2923
      %v3116 = vadd.f32 %v3115, %v2924
      %v3117 = vadd.f32 %v3116, %v2925
      %v3118 = vadd.f32 %v3117, %v2926
      %v3119 = vadd.f32 %v3118, %v2927
      %v3120 = vadd.f32 %v3119, %v2928
      %v3121 = vadd.f32 %v3120, %v2929
      %v3122 = vadd.f32 %v3121, %v2930
      %v3123 = vrot.slane %v3122, 4
      %v3124 = vadd.f32 %v3122, %v3123
      %v3125 = vrot.slane %v3124, 2
      %v3126 = vadd.f32 %v3124, %v3125
      %v3127 = vrot.slane %v3126, 1
      %v3128 = vadd.f32 %v3126, %v3127
      %3129 = vst [vmem:[%s211] sm:$0x1] %v3128
      %v3130 = vmul.f32 %v2899, %v2899
      %v3131 = vmul.f32 %v2900, %v2900
      %v3132 = vmul.f32 %v2901, %v2901
      %v3133 = vmul.f32 %v2902, %v2902
      %v3134 = vmul.f32 %v2903, %v2903
      %v3135 = vmul.f32 %v2904, %v2904
      %v3136 = vmul.f32 %v2905, %v2905
      %v3137 = vmul.f32 %v2906, %v2906
      %v3138 = vmul.f32 %v2907, %v2907
      %v3139 = vmul.f32 %v2908, %v2908
      %v3140 = vmul.f32 %v2909, %v2909
      %v3141 = vmul.f32 %v2910, %v2910
      %v3142 = vmul.f32 %v2911, %v2911
      %v3143 = vmul.f32 %v2912, %v2912
      %v3144 = vmul.f32 %v2913, %v2913
      %v3145 = vmul.f32 %v2914, %v2914
      %v3146 = vmul.f32 %v2915, %v2915
      %v3147 = vmul.f32 %v2916, %v2916
      %v3148 = vmul.f32 %v2917, %v2917
      %v3149 = vmul.f32 %v2918, %v2918
      %v3150 = vmul.f32 %v2919, %v2919
      %v3151 = vmul.f32 %v2920, %v2920
      %v3152 = vmul.f32 %v2921, %v2921
      %v3153 = vmul.f32 %v2922, %v2922
      %v3154 = vmul.f32 %v2923, %v2923
      %v3155 = vmul.f32 %v2924, %v2924
      %v3156 = vmul.f32 %v2925, %v2925
      %v3157 = vmul.f32 %v2926, %v2926
      %v3158 = vmul.f32 %v2927, %v2927
      %v3159 = vmul.f32 %v2928, %v2928
      %v3160 = vmul.f32 %v2929, %v2929
      %v3161 = vmul.f32 %v2930, %v2930
      %v3162 = vadd.f32 %v3130, %v3131
      %v3163 = vadd.f32 %v3162, %v3132
      %v3164 = vadd.f32 %v3163, %v3133
      %v3165 = vadd.f32 %v3164, %v3134
      %v3166 = vadd.f32 %v3165, %v3135
      %v3167 = vadd.f32 %v3166, %v3136
      %v3168 = vadd.f32 %v3167, %v3137
      %v3169 = vadd.f32 %v3168, %v3138
      %v3170 = vadd.f32 %v3169, %v3139
      %v3171 = vadd.f32 %v3170, %v3140
      %v3172 = vadd.f32 %v3171, %v3141
      %v3173 = vadd.f32 %v3172, %v3142
      %v3174 = vadd.f32 %v3173, %v3143
      %v3175 = vadd.f32 %v3174, %v3144
      %v3176 = vadd.f32 %v3175, %v3145
      %v3177 = vadd.f32 %v3176, %v3146
      %v3178 = vadd.f32 %v3177, %v3147
      %v3179 = vadd.f32 %v3178, %v3148
      %v3180 = vadd.f32 %v3179, %v3149
      %v3181 = vadd.f32 %v3180, %v3150
      %v3182 = vadd.f32 %v3181, %v3151
      %v3183 = vadd.f32 %v3182, %v3152
      %v3184 = vadd.f32 %v3183, %v3153
      %v3185 = vadd.f32 %v3184, %v3154
      %v3186 = vadd.f32 %v3185, %v3155
      %v3187 = vadd.f32 %v3186, %v3156
      %v3188 = vadd.f32 %v3187, %v3157
      %v3189 = vadd.f32 %v3188, %v3158
      %v3190 = vadd.f32 %v3189, %v3159
      %v3191 = vadd.f32 %v3190, %v3160
      %v3192 = vadd.f32 %v3191, %v3161
      %v3193 = vrot.slane %v3192, 4
      %v3194 = vadd.f32 %v3192, %v3193
      %v3195 = vrot.slane %v3194, 2
      %v3196 = vadd.f32 %v3194, %v3195
      %v3197 = vrot.slane %v3196, 1
      %v3198 = vadd.f32 %v3196, %v3197
      %3199 = vst [vmem:[%s214] sm:$0x1] %v3198
      %p3200 = scmp.lt.s32.totalorder %s16, 1
      %s3201 = scalar_select %p3200, %s16, 1
      %s3202 = smul.addr %s3201, 32
      %s3203 = smul.addr %s3202, 4
      %s3204 = scalar_lea.vmem %s2, %s3203
      %p3205 = scmp.lt.s32.totalorder %s16, 1
      %s3206 = scalar_select %p3205, %s16, 1
      %s3207 = scalar_lea.vmem %s3, %s3206
      %p3208 = scmp.lt.s32.totalorder %s16, 1
      %s3209 = scalar_select %p3208, %s16, 1
      %s3210 = scalar_lea.vmem %s4, %s3209
      // Predicated region
      $region29: #{conv_block_forward.2} parent=27 // pred_check
        %p3211 = pneg %p81
      $region30: #{conv_block_forward.2} parent=27 // pred_check_branch
        %3213 = sbr.rel (%p3211) target = $region32
      $region31: #{conv_block_forward.2} parent=27 // pred_region
        _
      $region32: #{conv_block_forward.2} parent=27 // pred_fallthru
        _
      // Predicated region
      $region33: #{conv_block_forward.2} parent=27 // pred_check
        %p3214 = pneg %p107
      $region34: #{conv_block_forward.2} parent=27 // pred_check_branch
        %3216 = sbr.rel (%p3214) target = $region36
      $region35: #{conv_block_forward.2} parent=27 // pred_region
        _
      $region36: #{conv_block_forward.2} parent=27 // pred_fallthru
        _
      // Predicated region
      $region37: #{conv_block_forward.2} parent=27 // pred_check
        %p3217 = pneg %p133
      $region38: #{conv_block_forward.2} parent=27 // pred_check_branch
        %3219 = sbr.rel (%p3217) target = $region40
      $region39: #{conv_block_forward.2} parent=27 // pred_region
        _
      $region40: #{conv_block_forward.2} parent=27 // pred_fallthru
        _
    $region28: #{conv_block_forward.2} parent=5 // pred_fallthru
      _
    %p3220 = scmp.le.s32.totalorder 2, %s11
    // Predicated region
    $region41: #{conv_block_forward.2} parent=5 // pred_check
      %p3221 = pneg %p3220
    $region42: #{conv_block_forward.2} parent=5 // pred_check_branch
      %3223 = sbr.rel (%p3221) target = $region44
    $region43: #{conv_block_forward.2} parent=5 // pred_region
      %s3224 = ssub.s32 %s11, 2
      // Predicated region
      $region45: #{conv_block_forward.2} parent=43 // pred_check
        %p3225 = pneg %p87
      $region46: #{conv_block_forward.2} parent=43 // pred_check_branch
        %3227 = sbr.rel (%p3225) target = $region48
      $region47: #{conv_block_forward.2} parent=43 // pred_region
        %p3228 = scmp.lt.s32.totalorder %s17, 1
        %s3229 = scalar_select %p3228, %s17, 1
        %s3230 = smul.addr %s3229, 32
        %s3231 = smul.addr %s3230, 4
        %s3232 = scalar_lea.vmem %s2, %s3231
      $region48: #{conv_block_forward.2} parent=43 // pred_fallthru
        _
      // Predicated region
      $region49: #{conv_block_forward.2} parent=43 // pred_check
        %p3233 = pneg %p113
      $region50: #{conv_block_forward.2} parent=43 // pred_check_branch
        %3235 = sbr.rel (%p3233) target = $region52
      $region51: #{conv_block_forward.2} parent=43 // pred_region
        %p3236 = scmp.lt.s32.totalorder %s17, 1
        %s3237 = scalar_select %p3236, %s17, 1
        %s3238 = scalar_lea.vmem %s3, %s3237
      $region52: #{conv_block_forward.2} parent=43 // pred_fallthru
        _
      // Predicated region
      $region53: #{conv_block_forward.2} parent=43 // pred_check
        %p3239 = pneg %p139
      $region54: #{conv_block_forward.2} parent=43 // pred_check_branch
        %3241 = sbr.rel (%p3239) target = $region56
      $region55: #{conv_block_forward.2} parent=43 // pred_region
        %p3242 = scmp.lt.s32.totalorder %s17, 1
        %s3243 = scalar_select %p3242, %s17, 1
        %s3244 = scalar_lea.vmem %s4, %s3243
      $region56: #{conv_block_forward.2} parent=43 // pred_fallthru
        _
    $region44: #{conv_block_forward.2} parent=5 // pred_fallthru
      _
  $region6: #{conv_block_forward.2} parent=0 // loop_footer
    %s15 = sadd.s32 1, %s11
  $region7: #{conv_block_forward.2} parent=0 // loop_footer_branch
    %10 = sbr.rel target = $region3
  $region8: #{conv_block_forward.2} parent=0 // loop_exit
    _

</llo_original>
